<compile_context>
chip_gen: v7x
topology: tpu7x:2x2x1
jax: 0.10.0
libtpu: 0.0.40
codegen_flags: <defaults>
</compile_context>

<pallas_src>
import jax
import jax.numpy as jnp
import numpy as np
from jax import lax
from jax.experimental import pallas as pl
from jax.experimental.pallas import tpu as pltpu

EPS = 1e-5          # nn.GroupNorm default eps
MID_D = 512         # BackBone_type['unet']['mid_output_dimension']
FIN_D = 64          # BackBone_type['unet']['fin_output_dimension']
GN_GROUPS = 16
HEAD_CH = 8
NUM_PARAMS = 8 * 8 + 8 * 8 + 8 * 1 + 8 + 8 + 1   # 153 (weight_nums + bias_nums)
PARAMS_PAD = 256                                  # lane-aligned controller output width


# ----------------------------------------------------------------------------- kernels

def _groupnorm_relu(x, gamma, beta, gmt, gmap, group_elems):
    """GroupNorm(16, C) + ReLU on a (C, S) tile.

    gmt  : (G, C) 0/1 group membership (group <- channel)
    gmap : (C, G) 0/1 group membership (channel <- group)
    """
    gs1 = jnp.sum(jnp.dot(gmt, x, preferred_element_type=jnp.float32),
                  axis=1, keepdims=True)                         # (G, 1) sum per group
    gs2 = jnp.sum(jnp.dot(gmt, x * x, preferred_element_type=jnp.float32),
                  axis=1, keepdims=True)                         # (G, 1) sum of squares
    gm = gs1 / group_elems
    gv = gs2 / group_elems - gm * gm                             # biased variance
    inv = lax.rsqrt(gv + EPS)
    mean_c = jnp.dot(gmap, gm, preferred_element_type=jnp.float32)   # (C, 1)
    inv_c = jnp.dot(gmap, inv, preferred_element_type=jnp.float32)   # (C, 1)
    xn = (x - mean_c) * inv_c * gamma + beta
    return jnp.maximum(xn, 0.0)


def _features_kernel(dec4_ref, fin_ref,
                     gamma_g_ref, beta_g_ref, gmt_g_ref, gmap_g_ref,
                     w_gap_ref, b_gap_ref,
                     gamma_p_ref, beta_p_ref, gmt_p_ref, gmap_p_ref,
                     w_pre_ref, b_pre_ref,
                     task_ref, wcf_ref, wct_ref, bc_ref,
                     head_ref, params_ref):
    # ---- GAP: GroupNorm(16,512) -> ReLU -> AdaptiveAvgPool2d(1) -> Conv2d(512,256,1)
    xg = dec4_ref[0]                                             # (512, Sd)
    c_g, s_g = xg.shape
    xgr = _groupnorm_relu(xg, gamma_g_ref[...], beta_g_ref[...],
                          gmt_g_ref[...], gmap_g_ref[...],
                          float((c_g // GN_GROUPS) * s_g))
    # lane-dense pooled row: (1, Sd) . (512, Sd)^T -> (1, 512); mean folded into the ones row
    ones_row = jnp.full((1, s_g), 1.0 / s_g, dtype=jnp.float32)
    pooled_row = jnp.einsum('os,cs->oc', ones_row, xgr,
                            preferred_element_type=jnp.float32)  # (1, 512)
    x_feat = jnp.dot(pooled_row, w_gap_ref[...],
                     preferred_element_type=jnp.float32) + b_gap_ref[...]   # (1, 256)

    # ---- controller: Conv2d(512,153,1) on cat([x_feat repeated, task_encoding]) (lane-padded)
    pf = jnp.dot(x_feat, wcf_ref[...], preferred_element_type=jnp.float32)        # (1, 256)
    pt = jnp.dot(task_ref[...], wct_ref[...], preferred_element_type=jnp.float32)  # (N, 256)
    params_ref[0] = pt + pf + bc_ref[...]

    # ---- precls_conv: GroupNorm(16,64) -> ReLU -> Conv2d(64,8,1)
    xp = fin_ref[0]                                              # (64, HW)
    c_p, s_p = xp.shape
    xpr = _groupnorm_relu(xp, gamma_p_ref[...], beta_p_ref[...],
                          gmt_p_ref[...], gmap_p_ref[...],
                          float((c_p // GN_GROUPS) * s_p))
    head_ref[0] = jnp.dot(w_pre_ref[...], xpr,
                          preferred_element_type=jnp.float32) + b_pre_ref[...]   # (8, HW)


def _make_heads_kernel(num_classes):
    def _heads_kernel(head_ref, w0_ref, b0_ref, w1_ref, b1_ref, w2_ref, b2_ref, out_ref):
        # heads_forward: three grouped 1x1 convs for ALL classes of one batch element.
        head = head_ref[0]                                       # (8, HW)
        # layer 0: stacked across classes (head is shared) -> one (N*8, 8) @ (8, HW) matmul
        z0 = jnp.dot(w0_ref[0], head, preferred_element_type=jnp.float32) + b0_ref[0]
        z0 = jnp.maximum(z0, 0.0)                                # (N*8, HW)
        # layers 1/2: statically unrolled per class (tiny 8x8 / 1x8 contractions)
        for n in range(num_classes):
            zn = z0[n * HEAD_CH:(n + 1) * HEAD_CH, :]            # (8, HW) static slice
            z1 = jnp.dot(w1_ref[0, n], zn,
                         preferred_element_type=jnp.float32) + b1_ref[0, n]
            z1 = jnp.maximum(z1, 0.0)
            out_ref[0, n] = jnp.dot(w2_ref[0, n], z1,
                                    preferred_element_type=jnp.float32) + b2_ref[0, n]  # (1, HW)
    return _heads_kernel


# ----------------------------------------------------------------------------- pallas_call wrappers

def _fused_features(dec4_r, out_r, p, gmt_g, gmap_g, gmt_p, gmap_p,
                    w_gap, b_gap_row, wcf_pad, wct_pad, bc_pad):
    B, Cm, Sd = dec4_r.shape
    _, Cf, HW = out_r.shape
    N = p["task_emb"].shape[0]
    c2 = lambda b: (0, 0)          # constant-index 2D weight blocks: fetched once
    return pl.pallas_call(
        _features_kernel,
        out_shape=(jax.ShapeDtypeStruct((B, HEAD_CH, HW), jnp.float32),
                   jax.ShapeDtypeStruct((B, N, PARAMS_PAD), jnp.float32)),
        grid=(B,),
        in_specs=[
            pl.BlockSpec((1, Cm, Sd), lambda b: (b, 0, 0)),
            pl.BlockSpec((1, Cf, HW), lambda b: (b, 0, 0)),
            pl.BlockSpec((Cm, 1), c2),
            pl.BlockSpec((Cm, 1), c2),
            pl.BlockSpec((GN_GROUPS, Cm), c2),
            pl.BlockSpec((Cm, GN_GROUPS), c2),
            pl.BlockSpec((Cm, 256), c2),
            pl.BlockSpec((1, 256), c2),
            pl.BlockSpec((Cf, 1), c2),
            pl.BlockSpec((Cf, 1), c2),
            pl.BlockSpec((GN_GROUPS, Cf), c2),
            pl.BlockSpec((Cf, GN_GROUPS), c2),
            pl.BlockSpec((HEAD_CH, Cf), c2),
            pl.BlockSpec((HEAD_CH, 1), c2),
            pl.BlockSpec((N, 256), c2),
            pl.BlockSpec((256, PARAMS_PAD), c2),
            pl.BlockSpec((256, PARAMS_PAD), c2),
            pl.BlockSpec((1, PARAMS_PAD), c2),
        ],
        out_specs=(
            pl.BlockSpec((1, HEAD_CH, HW), lambda b: (b, 0, 0)),
            pl.BlockSpec((1, N, PARAMS_PAD), lambda b: (b, 0, 0)),
        ),
        compiler_params=pltpu.CompilerParams(dimension_semantics=("parallel",)),
    )(dec4_r, out_r,
      p["gamma_gap"], p["beta_gap"], gmt_g, gmap_g, w_gap, b_gap_row,
      p["gamma_pre"], p["beta_pre"], gmt_p, gmap_p, p["w_pre"], p["b_pre"],
      p["task_emb"], wcf_pad, wct_pad, bc_pad)


def _dynamic_heads(head, w0s, b0s, w1, b1, w2, b2):
    B, _, HW = head.shape
    N = w1.shape[1]
    return pl.pallas_call(
        _make_heads_kernel(N),
        out_shape=jax.ShapeDtypeStruct((B, N, 1, HW), jnp.float32),
        grid=(B,),
        in_specs=[
            pl.BlockSpec((1, HEAD_CH, HW), lambda b: (b, 0, 0)),
            pl.BlockSpec((1, N * HEAD_CH, HEAD_CH), lambda b: (b, 0, 0)),
            pl.BlockSpec((1, N * HEAD_CH, 1), lambda b: (b, 0, 0)),
            pl.BlockSpec((1, N, HEAD_CH, HEAD_CH), lambda b: (b, 0, 0, 0)),
            pl.BlockSpec((1, N, HEAD_CH, 1), lambda b: (b, 0, 0, 0)),
            pl.BlockSpec((1, N, 1, HEAD_CH), lambda b: (b, 0, 0, 0)),
            pl.BlockSpec((1, N, 1, 1), lambda b: (b, 0, 0, 0)),
        ],
        out_specs=pl.BlockSpec((1, N, 1, HW), lambda b: (b, 0, 0, 0)),
        compiler_params=pltpu.CompilerParams(dimension_semantics=("parallel",)),
    )(head, w0s, b0s, w1, b1, w2, b2)


# ----------------------------------------------------------------------------- glue / forward

def group_matrices(C, groups):
    cpg = C // groups
    gmap = np.zeros((C, groups), np.float32)
    for c in range(C):
        gmap[c, c // cpg] = 1.0
    return jnp.asarray(gmap.T), jnp.asarray(gmap)       # (G,C), (C,G)


def universal_model_forward(dec4, out_feat, p):
    """dec4: (B, 512, Hd, Wd); out_feat: (B, 64, H, W)  -> logits (B, out_channels, H, W)"""
    B, Cm, Hd, Wd = dec4.shape
    _, Cf, H, W = out_feat.shape
    N = p["task_emb"].shape[0]

    dec4_r = dec4.reshape(B, Cm, Hd * Wd)
    out_r = out_feat.reshape(B, Cf, H * W)
    gmt_g, gmap_g = group_matrices(Cm, GN_GROUPS)
    gmt_p, gmap_p = group_matrices(Cf, GN_GROUPS)

    # trace-time layout plumbing: lane-dense (in, out) weights + 256-lane-padded controller
    w_gap = p["w_gap_t"].T                             # (512, 256)
    b_gap_row = p["b_gap"].reshape(1, 256)
    pad = PARAMS_PAD - NUM_PARAMS
    wcf_pad = jnp.pad(p["wc_feat"], ((0, 0), (0, pad)))
    wct_pad = jnp.pad(p["wc_task"], ((0, 0), (0, pad)))
    bc_pad = jnp.pad(p["bc"], ((0, 0), (0, pad)))

    head, params = _fused_features(dec4_r, out_r, p, gmt_g, gmap_g, gmt_p, gmap_p,
                                   w_gap, b_gap_row, wcf_pad, wct_pad, bc_pad)
    # head:   (B, 8, HW)
    # params: (B, N, 256) — columns 0:153 valid (weight_nums=[64,64,8], bias_nums=[8,8,1])

    # parse_dynamic_params: trace-time reshapes into stacked, DMA-friendly layouts
    w0s = params[:, :, 0:64].reshape(B, N * 8, 8)       # layer-0 weights stacked across classes
    w1 = params[:, :, 64:128].reshape(B, N, 8, 8)
    w2 = params[:, :, 128:136].reshape(B, N, 1, 8)
    b0s = params[:, :, 136:144].reshape(B, N * 8, 1)
    b1 = params[:, :, 144:152].reshape(B, N, 8, 1)
    b2 = params[:, :, 152:153].reshape(B, N, 1, 1)

    logits = _dynamic_heads(head, w0s, b0s, w1, b1, w2, b2)      # (B, N, 1, HW)
    return logits.reshape(B, N, H, W)


def init_params(key, out_channels):
    ks = jax.random.split(key, 12)
    p = {}
    p["gamma_gap"] = 1.0 + 0.1 * jax.random.normal(ks[0], (MID_D, 1), jnp.float32)
    p["beta_gap"] = 0.1 * jax.random.normal(ks[1], (MID_D, 1), jnp.float32)
    p["w_gap_t"] = 0.05 * jax.random.normal(ks[2], (256, MID_D), jnp.float32)   # Conv2d(512,256,1) weight (out,in)
    p["b_gap"] = 0.05 * jax.random.normal(ks[3], (256, 1), jnp.float32)
    p["gamma_pre"] = 1.0 + 0.1 * jax.random.normal(ks[4], (FIN_D, 1), jnp.float32)
    p["beta_pre"] = 0.1 * jax.random.normal(ks[5], (FIN_D, 1), jnp.float32)
    p["w_pre"] = 0.1 * jax.random.normal(ks[6], (HEAD_CH, FIN_D), jnp.float32)  # Conv2d(64,8,1)
    p["b_pre"] = 0.1 * jax.random.normal(ks[7], (HEAD_CH, 1), jnp.float32)
    p["task_emb"] = jax.random.normal(ks[8], (out_channels, 256), jnp.float32)  # nn.Embedding(N,256)
    p["wc_feat"] = 0.05 * jax.random.normal(ks[9], (256, NUM_PARAMS), jnp.float32)   # controller rows 0:256
    p["wc_task"] = 0.05 * jax.random.normal(ks[10], (256, NUM_PARAMS), jnp.float32)  # controller rows 256:512
    p["bc"] = 0.05 * jax.random.normal(ks[11], (1, NUM_PARAMS), jnp.float32)
    return p


# ----------------------------------------------------------------------------- pure-JAX reference

def reference_forward(dec4, out_feat, p):
    B, Cm, Hd, Wd = dec4.shape
    _, Cf, H, W = out_feat.shape
    N = p["task_emb"].shape[0]

    def gn_relu(x, groups, gamma, beta):
        Bx, C, Hx, Wx = x.shape
        xg = x.reshape(Bx, groups, -1)
        m = xg.mean(axis=2, keepdims=True)
        v = ((xg - m) ** 2).mean(axis=2, keepdims=True)
        xn = ((xg - m) / jnp.sqrt(v + EPS)).reshape(Bx, C, Hx, Wx)
        xn = xn * gamma.reshape(1, C, 1, 1) + beta.reshape(1, C, 1, 1)
        return jnp.maximum(xn, 0.0)

    g = gn_relu(dec4, GN_GROUPS, p["gamma_gap"], p["beta_gap"])
    pooled = g.mean(axis=(2, 3))                                             # (B, 512)
    x_feat = pooled @ p["w_gap_t"].T + p["b_gap"].reshape(1, -1)             # (B, 256)

    h = gn_relu(out_feat, GN_GROUPS, p["gamma_pre"], p["beta_pre"])
    head = jnp.einsum("oc,bchw->bohw", p["w_pre"], h) + p["b_pre"].reshape(1, HEAD_CH, 1, 1)

    wc = jnp.concatenate([p["wc_feat"], p["wc_task"]], axis=0)               # (512, 153)
    logits_all = []
    for b in range(B):
        x_cond = jnp.concatenate(
            [jnp.broadcast_to(x_feat[b][None, :], (N, 256)), p["task_emb"]], axis=1)
        params = x_cond @ wc + p["bc"].reshape(1, -1)                        # (N, 153)
        hi = head[b]                                                         # (8, H, W)
        per_class = []
        for n in range(N):
            w0 = params[n, 0:64].reshape(8, 8)
            w1 = params[n, 64:128].reshape(8, 8)
            w2 = params[n, 128:136].reshape(1, 8)
            b0 = params[n, 136:144].reshape(8, 1, 1)
            b1 = params[n, 144:152].reshape(8, 1, 1)
            b2 = params[n, 152:153].reshape(1, 1, 1)
            z = jnp.maximum(jnp.einsum("oc,chw->ohw", w0, hi) + b0, 0.0)
            z = jnp.maximum(jnp.einsum("oc,chw->ohw", w1, z) + b1, 0.0)
            per_class.append((jnp.einsum("oc,chw->ohw", w2, z) + b2)[0])
        logits_all.append(jnp.stack(per_class, axis=0))
    return jnp.stack(logits_all, axis=0)


# ----------------------------------------------------------------------------- main

if __name__ == "__main__":
    key = jax.random.PRNGKey(0)
    kp, kd, ko = jax.random.split(key, 3)

    out_channels = 7          # class_num
    B, H, W = 2, 16, 16       # spatial size of the 'out' (fin) features
    Hd, Wd = 4, 4             # spatial size of the 'dec4' (mid) features

    p = init_params(kp, out_channels)
    # Backbone outputs (UNet2D not defined in the reference source -> synthesized here).
    dec4 = jax.random.normal(kd, (B, MID_D, Hd, Wd), jnp.float32)
    out_feat = jax.random.normal(ko, (B, FIN_D, H, W), jnp.float32)

    logits = universal_model_forward(dec4, out_feat, p)
    logits = jax.block_until_ready(logits)

    ref = reference_forward(dec4, out_feat, p)
    ref = jax.block_until_ready(ref)

    assert logits.shape == (B, out_channels, H, W)
    np.testing.assert_allclose(np.asarray(logits), np.asarray(ref), rtol=5e-2, atol=5e-2)
    print("KERNEL_OK")
</pallas_src>

<mosaic_0001>
module attributes {stable_mosaic.version = 11 : i64} {
  func.func @_features_kernel(%arg0: i32, %arg1: memref<1x512x16xf32, #tpu.memory_space<vmem>>, %arg2: memref<1x64x256xf32, #tpu.memory_space<vmem>>, %arg3: memref<512x1xf32, #tpu.memory_space<vmem>>, %arg4: memref<512x1xf32, #tpu.memory_space<vmem>>, %arg5: memref<16x512xf32, #tpu.memory_space<vmem>>, %arg6: memref<512x16xf32, #tpu.memory_space<vmem>>, %arg7: memref<512x256xf32, #tpu.memory_space<vmem>>, %arg8: memref<1x256xf32, #tpu.memory_space<vmem>>, %arg9: memref<64x1xf32, #tpu.memory_space<vmem>>, %arg10: memref<64x1xf32, #tpu.memory_space<vmem>>, %arg11: memref<16x64xf32, #tpu.memory_space<vmem>>, %arg12: memref<64x16xf32, #tpu.memory_space<vmem>>, %arg13: memref<8x64xf32, #tpu.memory_space<vmem>>, %arg14: memref<8x1xf32, #tpu.memory_space<vmem>>, %arg15: memref<7x256xf32, #tpu.memory_space<vmem>>, %arg16: memref<256x256xf32, #tpu.memory_space<vmem>>, %arg17: memref<256x256xf32, #tpu.memory_space<vmem>>, %arg18: memref<1x256xf32, #tpu.memory_space<vmem>>, %arg19: memref<1x8x256xf32, #tpu.memory_space<vmem>>, %arg20: memref<1x7x256xf32, #tpu.memory_space<vmem>>) attributes {dimension_semantics = [#tpu.dimension_semantics<parallel>], iteration_bounds = array<i64: 2>, scalar_prefetch = 0 : i64, scratch_operands = 0 : i64, tpu.core_type = #tpu.core_type<tc>, window_params = [{transform_indices = @transform_0, window_bounds = array<i64: 1, 512, 16>}, {transform_indices = @transform_1, window_bounds = array<i64: 1, 64, 256>}, {pipeline_mode = #tpu.pipeline_mode<synchronous>, transform_indices = @transform_2, window_bounds = array<i64: 512, 1>}, {pipeline_mode = #tpu.pipeline_mode<synchronous>, transform_indices = @transform_3, window_bounds = array<i64: 512, 1>}, {pipeline_mode = #tpu.pipeline_mode<synchronous>, transform_indices = @transform_4, window_bounds = array<i64: 16, 512>}, {pipeline_mode = #tpu.pipeline_mode<synchronous>, transform_indices = @transform_5, window_bounds = array<i64: 512, 16>}, {pipeline_mode = #tpu.pipeline_mode<synchronous>, transform_indices = @transform_6, window_bounds = array<i64: 512, 256>}, {pipeline_mode = #tpu.pipeline_mode<synchronous>, transform_indices = @transform_7, window_bounds = array<i64: 1, 256>}, {pipeline_mode = #tpu.pipeline_mode<synchronous>, transform_indices = @transform_8, window_bounds = array<i64: 64, 1>}, {pipeline_mode = #tpu.pipeline_mode<synchronous>, transform_indices = @transform_9, window_bounds = array<i64: 64, 1>}, {pipeline_mode = #tpu.pipeline_mode<synchronous>, transform_indices = @transform_10, window_bounds = array<i64: 16, 64>}, {pipeline_mode = #tpu.pipeline_mode<synchronous>, transform_indices = @transform_11, window_bounds = array<i64: 64, 16>}, {pipeline_mode = #tpu.pipeline_mode<synchronous>, transform_indices = @transform_12, window_bounds = array<i64: 8, 64>}, {pipeline_mode = #tpu.pipeline_mode<synchronous>, transform_indices = @transform_13, window_bounds = array<i64: 8, 1>}, {pipeline_mode = #tpu.pipeline_mode<synchronous>, transform_indices = @transform_14, window_bounds = array<i64: 7, 256>}, {pipeline_mode = #tpu.pipeline_mode<synchronous>, transform_indices = @transform_15, window_bounds = array<i64: 256, 256>}, {pipeline_mode = #tpu.pipeline_mode<synchronous>, transform_indices = @transform_16, window_bounds = array<i64: 256, 256>}, {pipeline_mode = #tpu.pipeline_mode<synchronous>, transform_indices = @transform_17, window_bounds = array<i64: 1, 256>}, {transform_indices = @transform_18, window_bounds = array<i64: 1, 8, 256>}, {transform_indices = @transform_19, window_bounds = array<i64: 1, 7, 256>}]} {
    %c0 = arith.constant 0 : index
    %c0_0 = arith.constant 0 : index
    %c0_1 = arith.constant 0 : index
    %0 = vector.load %arg1[%c0, %c0_0, %c0_1] : memref<1x512x16xf32, #tpu.memory_space<vmem>>, vector<1x512x16xf32>
    %1 = vector.shape_cast %0 : vector<1x512x16xf32> to vector<512x16xf32>
    %c0_2 = arith.constant 0 : index
    %c0_3 = arith.constant 0 : index
    %2 = vector.load %arg3[%c0_2, %c0_3] : memref<512x1xf32, #tpu.memory_space<vmem>>, vector<512x1xf32>
    %c0_4 = arith.constant 0 : index
    %c0_5 = arith.constant 0 : index
    %3 = vector.load %arg4[%c0_4, %c0_5] : memref<512x1xf32, #tpu.memory_space<vmem>>, vector<512x1xf32>
    %c0_6 = arith.constant 0 : index
    %c0_7 = arith.constant 0 : index
    %4 = vector.load %arg5[%c0_6, %c0_7] : memref<16x512xf32, #tpu.memory_space<vmem>>, vector<16x512xf32>
    %c0_8 = arith.constant 0 : index
    %c0_9 = arith.constant 0 : index
    %5 = vector.load %arg6[%c0_8, %c0_9] : memref<512x16xf32, #tpu.memory_space<vmem>>, vector<512x16xf32>
    %cst = arith.constant dense<0.000000e+00> : vector<16x16xf32>
    %6 = tpu.matmul %4, %1, %cst {dimension_numbers = #tpu.dot_dimension_numbers<[1], [0], [0], [1], [0, 0, 1, 1], [], []>} : vector<16x512xf32>, vector<512x16xf32>, vector<16x16xf32> -> vector<16x16xf32>
    %cst_10 = arith.constant dense<0.000000e+00> : vector<16xf32>
    %7 = vector.multi_reduction <add>, %6, %cst_10 [1] : vector<16x16xf32> to vector<16xf32>
    %8 = vector.shape_cast %7 : vector<16xf32> to vector<16x1xf32>
    %9 = arith.mulf %1, %1 : vector<512x16xf32>
    %cst_11 = arith.constant dense<0.000000e+00> : vector<16x16xf32>
    %10 = tpu.matmul %4, %9, %cst_11 {dimension_numbers = #tpu.dot_dimension_numbers<[1], [0], [0], [1], [0, 0, 1, 1], [], []>} : vector<16x512xf32>, vector<512x16xf32>, vector<16x16xf32> -> vector<16x16xf32>
    %cst_12 = arith.constant dense<0.000000e+00> : vector<16xf32>
    %11 = vector.multi_reduction <add>, %10, %cst_12 [1] : vector<16x16xf32> to vector<16xf32>
    %12 = vector.shape_cast %11 : vector<16xf32> to vector<16x1xf32>
    %cst_13 = arith.constant 5.120000e+02 : f32
    %13 = vector.broadcast %cst_13 : f32 to vector<16x1xf32>
    %14 = arith.divf %8, %13 : vector<16x1xf32>
    %cst_14 = arith.constant 5.120000e+02 : f32
    %15 = vector.broadcast %cst_14 : f32 to vector<16x1xf32>
    %16 = arith.divf %12, %15 : vector<16x1xf32>
    %17 = arith.mulf %14, %14 : vector<16x1xf32>
    %18 = arith.subf %16, %17 : vector<16x1xf32>
    %cst_15 = arith.constant 9.99999974E-6 : f32
    %19 = vector.broadcast %cst_15 : f32 to vector<16x1xf32>
    %20 = arith.addf %18, %19 : vector<16x1xf32>
    %21 = math.rsqrt %20 : vector<16x1xf32>
    %cst_16 = arith.constant dense<0.000000e+00> : vector<512x1xf32>
    %22 = tpu.matmul %5, %14, %cst_16 {dimension_numbers = #tpu.dot_dimension_numbers<[1], [0], [0], [1], [0, 0, 1, 1], [], []>} : vector<512x16xf32>, vector<16x1xf32>, vector<512x1xf32> -> vector<512x1xf32>
    %cst_17 = arith.constant dense<0.000000e+00> : vector<512x1xf32>
    %23 = tpu.matmul %5, %21, %cst_17 {dimension_numbers = #tpu.dot_dimension_numbers<[1], [0], [0], [1], [0, 0, 1, 1], [], []>} : vector<512x16xf32>, vector<16x1xf32>, vector<512x1xf32> -> vector<512x1xf32>
    %24 = vector.broadcast %22 : vector<512x1xf32> to vector<512x16xf32>
    %25 = arith.subf %1, %24 : vector<512x16xf32>
    %26 = vector.broadcast %23 : vector<512x1xf32> to vector<512x16xf32>
    %27 = arith.mulf %25, %26 : vector<512x16xf32>
    %28 = vector.broadcast %2 : vector<512x1xf32> to vector<512x16xf32>
    %29 = arith.mulf %27, %28 : vector<512x16xf32>
    %30 = vector.broadcast %3 : vector<512x1xf32> to vector<512x16xf32>
    %31 = arith.addf %29, %30 : vector<512x16xf32>
    %cst_18 = arith.constant 0.000000e+00 : f32
    %32 = vector.broadcast %cst_18 : f32 to vector<512x16xf32>
    %33 = arith.maximumf %31, %32 : vector<512x16xf32>
    %cst_19 = arith.constant 6.250000e-02 : f32
    %34 = vector.broadcast %cst_19 : f32 to vector<1x16xf32>
    "tpu.trace_start"() <{level = 10 : i32, message = "os,cs->oc"}> : () -> ()
    %cst_20 = arith.constant dense<0.000000e+00> : vector<1x512xf32>
    %35 = tpu.matmul %34, %33, %cst_20 {dimension_numbers = #tpu.dot_dimension_numbers<[1], [1], [0], [0], [0, 0, 1, 0], [], []>} : vector<1x16xf32>, vector<512x16xf32>, vector<1x512xf32> -> vector<1x512xf32>
    "tpu.trace_stop"() : () -> ()
    %c0_21 = arith.constant 0 : index
    %c0_22 = arith.constant 0 : index
    %36 = vector.load %arg7[%c0_21, %c0_22] : memref<512x256xf32, #tpu.memory_space<vmem>>, vector<512x256xf32>
    %cst_23 = arith.constant dense<0.000000e+00> : vector<1x256xf32>
    %37 = tpu.matmul %35, %36, %cst_23 {dimension_numbers = #tpu.dot_dimension_numbers<[1], [0], [0], [1], [0, 0, 1, 1], [], []>} : vector<1x512xf32>, vector<512x256xf32>, vector<1x256xf32> -> vector<1x256xf32>
    %c0_24 = arith.constant 0 : index
    %c0_25 = arith.constant 0 : index
    %38 = vector.load %arg8[%c0_24, %c0_25] : memref<1x256xf32, #tpu.memory_space<vmem>>, vector<1x256xf32>
    %39 = arith.addf %37, %38 : vector<1x256xf32>
    %c0_26 = arith.constant 0 : index
    %c0_27 = arith.constant 0 : index
    %40 = vector.load %arg16[%c0_26, %c0_27] : memref<256x256xf32, #tpu.memory_space<vmem>>, vector<256x256xf32>
    %cst_28 = arith.constant dense<0.000000e+00> : vector<1x256xf32>
    %41 = tpu.matmul %39, %40, %cst_28 {dimension_numbers = #tpu.dot_dimension_numbers<[1], [0], [0], [1], [0, 0, 1, 1], [], []>} : vector<1x256xf32>, vector<256x256xf32>, vector<1x256xf32> -> vector<1x256xf32>
    %c0_29 = arith.constant 0 : index
    %c0_30 = arith.constant 0 : index
    %42 = vector.load %arg15[%c0_29, %c0_30] : memref<7x256xf32, #tpu.memory_space<vmem>>, vector<7x256xf32>
    %c0_31 = arith.constant 0 : index
    %c0_32 = arith.constant 0 : index
    %43 = vector.load %arg17[%c0_31, %c0_32] : memref<256x256xf32, #tpu.memory_space<vmem>>, vector<256x256xf32>
    %cst_33 = arith.constant dense<0.000000e+00> : vector<7x256xf32>
    %44 = tpu.matmul %42, %43, %cst_33 {dimension_numbers = #tpu.dot_dimension_numbers<[1], [0], [0], [1], [0, 0, 1, 1], [], []>} : vector<7x256xf32>, vector<256x256xf32>, vector<7x256xf32> -> vector<7x256xf32>
    %45 = vector.broadcast %41 : vector<1x256xf32> to vector<7x256xf32>
    %46 = arith.addf %44, %45 : vector<7x256xf32>
    %c0_34 = arith.constant 0 : index
    %c0_35 = arith.constant 0 : index
    %47 = vector.load %arg18[%c0_34, %c0_35] : memref<1x256xf32, #tpu.memory_space<vmem>>, vector<1x256xf32>
    %48 = vector.broadcast %47 : vector<1x256xf32> to vector<7x256xf32>
    %49 = arith.addf %46, %48 : vector<7x256xf32>
    %c0_36 = arith.constant 0 : index
    %c0_37 = arith.constant 0 : index
    %c0_38 = arith.constant 0 : index
    %50 = vector.load %arg20[%c0_36, %c0_37, %c0_38] : memref<1x7x256xf32, #tpu.memory_space<vmem>>, vector<1x7x256xf32>
    %51 = vector.shape_cast %50 : vector<1x7x256xf32> to vector<7x256xf32>
    %52 = vector.shape_cast %49 : vector<7x256xf32> to vector<1x7x256xf32>
    tpu.vector_store %arg20[%c0_36, %c0_37, %c0_38], %52 {strides = array<i32>} : memref<1x7x256xf32, #tpu.memory_space<vmem>>, vector<1x7x256xf32>,
    %c0_39 = arith.constant 0 : index
    %c0_40 = arith.constant 0 : index
    %c0_41 = arith.constant 0 : index
    %53 = vector.load %arg2[%c0_39, %c0_40, %c0_41] : memref<1x64x256xf32, #tpu.memory_space<vmem>>, vector<1x64x256xf32>
    %54 = vector.shape_cast %53 : vector<1x64x256xf32> to vector<64x256xf32>
    %c0_42 = arith.constant 0 : index
    %c0_43 = arith.constant 0 : index
    %55 = vector.load %arg9[%c0_42, %c0_43] : memref<64x1xf32, #tpu.memory_space<vmem>>, vector<64x1xf32>
    %c0_44 = arith.constant 0 : index
    %c0_45 = arith.constant 0 : index
    %56 = vector.load %arg10[%c0_44, %c0_45] : memref<64x1xf32, #tpu.memory_space<vmem>>, vector<64x1xf32>
    %c0_46 = arith.constant 0 : index
    %c0_47 = arith.constant 0 : index
    %57 = vector.load %arg11[%c0_46, %c0_47] : memref<16x64xf32, #tpu.memory_space<vmem>>, vector<16x64xf32>
    %c0_48 = arith.constant 0 : index
    %c0_49 = arith.constant 0 : index
    %58 = vector.load %arg12[%c0_48, %c0_49] : memref<64x16xf32, #tpu.memory_space<vmem>>, vector<64x16xf32>
    %cst_50 = arith.constant dense<0.000000e+00> : vector<16x256xf32>
    %59 = tpu.matmul %57, %54, %cst_50 {dimension_numbers = #tpu.dot_dimension_numbers<[1], [0], [0], [1], [0, 0, 1, 1], [], []>} : vector<16x64xf32>, vector<64x256xf32>, vector<16x256xf32> -> vector<16x256xf32>
    %cst_51 = arith.constant dense<0.000000e+00> : vector<16xf32>
    %60 = vector.multi_reduction <add>, %59, %cst_51 [1] : vector<16x256xf32> to vector<16xf32>
    %61 = vector.shape_cast %60 : vector<16xf32> to vector<16x1xf32>
    %62 = arith.mulf %54, %54 : vector<64x256xf32>
    %cst_52 = arith.constant dense<0.000000e+00> : vector<16x256xf32>
    %63 = tpu.matmul %57, %62, %cst_52 {dimension_numbers = #tpu.dot_dimension_numbers<[1], [0], [0], [1], [0, 0, 1, 1], [], []>} : vector<16x64xf32>, vector<64x256xf32>, vector<16x256xf32> -> vector<16x256xf32>
    %cst_53 = arith.constant dense<0.000000e+00> : vector<16xf32>
    %64 = vector.multi_reduction <add>, %63, %cst_53 [1] : vector<16x256xf32> to vector<16xf32>
    %65 = vector.shape_cast %64 : vector<16xf32> to vector<16x1xf32>
    %cst_54 = arith.constant 1.024000e+03 : f32
    %66 = vector.broadcast %cst_54 : f32 to vector<16x1xf32>
    %67 = arith.divf %61, %66 : vector<16x1xf32>
    %cst_55 = arith.constant 1.024000e+03 : f32
    %68 = vector.broadcast %cst_55 : f32 to vector<16x1xf32>
    %69 = arith.divf %65, %68 : vector<16x1xf32>
    %70 = arith.mulf %67, %67 : vector<16x1xf32>
    %71 = arith.subf %69, %70 : vector<16x1xf32>
    %cst_56 = arith.constant 9.99999974E-6 : f32
    %72 = vector.broadcast %cst_56 : f32 to vector<16x1xf32>
    %73 = arith.addf %71, %72 : vector<16x1xf32>
    %74 = math.rsqrt %73 : vector<16x1xf32>
    %cst_57 = arith.constant dense<0.000000e+00> : vector<64x1xf32>
    %75 = tpu.matmul %58, %67, %cst_57 {dimension_numbers = #tpu.dot_dimension_numbers<[1], [0], [0], [1], [0, 0, 1, 1], [], []>} : vector<64x16xf32>, vector<16x1xf32>, vector<64x1xf32> -> vector<64x1xf32>
    %cst_58 = arith.constant dense<0.000000e+00> : vector<64x1xf32>
    %76 = tpu.matmul %58, %74, %cst_58 {dimension_numbers = #tpu.dot_dimension_numbers<[1], [0], [0], [1], [0, 0, 1, 1], [], []>} : vector<64x16xf32>, vector<16x1xf32>, vector<64x1xf32> -> vector<64x1xf32>
    %77 = vector.broadcast %75 : vector<64x1xf32> to vector<64x256xf32>
    %78 = arith.subf %54, %77 : vector<64x256xf32>
    %79 = vector.broadcast %76 : vector<64x1xf32> to vector<64x256xf32>
    %80 = arith.mulf %78, %79 : vector<64x256xf32>
    %81 = vector.broadcast %55 : vector<64x1xf32> to vector<64x256xf32>
    %82 = arith.mulf %80, %81 : vector<64x256xf32>
    %83 = vector.broadcast %56 : vector<64x1xf32> to vector<64x256xf32>
    %84 = arith.addf %82, %83 : vector<64x256xf32>
    %cst_59 = arith.constant 0.000000e+00 : f32
    %85 = vector.broadcast %cst_59 : f32 to vector<64x256xf32>
    %86 = arith.maximumf %84, %85 : vector<64x256xf32>
    %c0_60 = arith.constant 0 : index
    %c0_61 = arith.constant 0 : index
    %87 = vector.load %arg13[%c0_60, %c0_61] : memref<8x64xf32, #tpu.memory_space<vmem>>, vector<8x64xf32>
    %cst_62 = arith.constant dense<0.000000e+00> : vector<8x256xf32>
    %88 = tpu.matmul %87, %86, %cst_62 {dimension_numbers = #tpu.dot_dimension_numbers<[1], [0], [0], [1], [0, 0, 1, 1], [], []>} : vector<8x64xf32>, vector<64x256xf32>, vector<8x256xf32> -> vector<8x256xf32>
    %c0_63 = arith.constant 0 : index
    %c0_64 = arith.constant 0 : index
    %89 = vector.load %arg14[%c0_63, %c0_64] : memref<8x1xf32, #tpu.memory_space<vmem>>, vector<8x1xf32>
    %90 = vector.broadcast %89 : vector<8x1xf32> to vector<8x256xf32>
    %91 = arith.addf %88, %90 : vector<8x256xf32>
    %c0_65 = arith.constant 0 : index
    %c0_66 = arith.constant 0 : index
    %c0_67 = arith.constant 0 : index
    %92 = vector.load %arg19[%c0_65, %c0_66, %c0_67] : memref<1x8x256xf32, #tpu.memory_space<vmem>>, vector<1x8x256xf32>
    %93 = vector.shape_cast %92 : vector<1x8x256xf32> to vector<8x256xf32>
    %94 = vector.shape_cast %91 : vector<8x256xf32> to vector<1x8x256xf32>
    tpu.vector_store %arg19[%c0_65, %c0_66, %c0_67], %94 {strides = array<i32>} : memref<1x8x256xf32, #tpu.memory_space<vmem>>, vector<1x8x256xf32>,
    return
  }
  func.func @transform_0(%arg0: i32) -> (i32, i32, i32) {
    %c0_i32 = arith.constant 0 : i32
    %c0_i32_0 = arith.constant 0 : i32
    %c0_i32_1 = arith.constant 0 : i32
    return %arg0, %c0_i32, %c0_i32_0 : i32, i32, i32
  }
  func.func @transform_1(%arg0: i32) -> (i32, i32, i32) {
    %c0_i32 = arith.constant 0 : i32
    %c0_i32_0 = arith.constant 0 : i32
    %c0_i32_1 = arith.constant 0 : i32
    return %arg0, %c0_i32, %c0_i32_0 : i32, i32, i32
  }
  func.func @transform_2(%arg0: i32) -> (i32, i32) {
    %c0_i32 = arith.constant 0 : i32
    %c0_i32_0 = arith.constant 0 : i32
    %c0_i32_1 = arith.constant 0 : i32
    return %c0_i32, %c0_i32_0 : i32, i32
  }
  func.func @transform_3(%arg0: i32) -> (i32, i32) {
    %c0_i32 = arith.constant 0 : i32
    %c0_i32_0 = arith.constant 0 : i32
    %c0_i32_1 = arith.constant 0 : i32
    return %c0_i32, %c0_i32_0 : i32, i32
  }
  func.func @transform_4(%arg0: i32) -> (i32, i32) {
    %c0_i32 = arith.constant 0 : i32
    %c0_i32_0 = arith.constant 0 : i32
    %c0_i32_1 = arith.constant 0 : i32
    return %c0_i32, %c0_i32_0 : i32, i32
  }
  func.func @transform_5(%arg0: i32) -> (i32, i32) {
    %c0_i32 = arith.constant 0 : i32
    %c0_i32_0 = arith.constant 0 : i32
    %c0_i32_1 = arith.constant 0 : i32
    return %c0_i32, %c0_i32_0 : i32, i32
  }
  func.func @transform_6(%arg0: i32) -> (i32, i32) {
    %c0_i32 = arith.constant 0 : i32
    %c0_i32_0 = arith.constant 0 : i32
    %c0_i32_1 = arith.constant 0 : i32
    return %c0_i32, %c0_i32_0 : i32, i32
  }
  func.func @transform_7(%arg0: i32) -> (i32, i32) {
    %c0_i32 = arith.constant 0 : i32
    %c0_i32_0 = arith.constant 0 : i32
    %c0_i32_1 = arith.constant 0 : i32
    return %c0_i32, %c0_i32_0 : i32, i32
  }
  func.func @transform_8(%arg0: i32) -> (i32, i32) {
    %c0_i32 = arith.constant 0 : i32
    %c0_i32_0 = arith.constant 0 : i32
    %c0_i32_1 = arith.constant 0 : i32
    return %c0_i32, %c0_i32_0 : i32, i32
  }
  func.func @transform_9(%arg0: i32) -> (i32, i32) {
    %c0_i32 = arith.constant 0 : i32
    %c0_i32_0 = arith.constant 0 : i32
    %c0_i32_1 = arith.constant 0 : i32
    return %c0_i32, %c0_i32_0 : i32, i32
  }
  func.func @transform_10(%arg0: i32) -> (i32, i32) {
    %c0_i32 = arith.constant 0 : i32
    %c0_i32_0 = arith.constant 0 : i32
    %c0_i32_1 = arith.constant 0 : i32
    return %c0_i32, %c0_i32_0 : i32, i32
  }
  func.func @transform_11(%arg0: i32) -> (i32, i32) {
    %c0_i32 = arith.constant 0 : i32
    %c0_i32_0 = arith.constant 0 : i32
    %c0_i32_1 = arith.constant 0 : i32
    return %c0_i32, %c0_i32_0 : i32, i32
  }
  func.func @transform_12(%arg0: i32) -> (i32, i32) {
    %c0_i32 = arith.constant 0 : i32
    %c0_i32_0 = arith.constant 0 : i32
    %c0_i32_1 = arith.constant 0 : i32
    return %c0_i32, %c0_i32_0 : i32, i32
  }
  func.func @transform_13(%arg0: i32) -> (i32, i32) {
    %c0_i32 = arith.constant 0 : i32
    %c0_i32_0 = arith.constant 0 : i32
    %c0_i32_1 = arith.constant 0 : i32
    return %c0_i32, %c0_i32_0 : i32, i32
  }
  func.func @transform_14(%arg0: i32) -> (i32, i32) {
    %c0_i32 = arith.constant 0 : i32
    %c0_i32_0 = arith.constant 0 : i32
    %c0_i32_1 = arith.constant 0 : i32
    return %c0_i32, %c0_i32_0 : i32, i32
  }
  func.func @transform_15(%arg0: i32) -> (i32, i32) {
    %c0_i32 = arith.constant 0 : i32
    %c0_i32_0 = arith.constant 0 : i32
    %c0_i32_1 = arith.constant 0 : i32
    return %c0_i32, %c0_i32_0 : i32, i32
  }
  func.func @transform_16(%arg0: i32) -> (i32, i32) {
    %c0_i32 = arith.constant 0 : i32
    %c0_i32_0 = arith.constant 0 : i32
    %c0_i32_1 = arith.constant 0 : i32
    return %c0_i32, %c0_i32_0 : i32, i32
  }
  func.func @transform_17(%arg0: i32) -> (i32, i32) {
    %c0_i32 = arith.constant 0 : i32
    %c0_i32_0 = arith.constant 0 : i32
    %c0_i32_1 = arith.constant 0 : i32
    return %c0_i32, %c0_i32_0 : i32, i32
  }
  func.func @transform_18(%arg0: i32) -> (i32, i32, i32) {
    %c0_i32 = arith.constant 0 : i32
    %c0_i32_0 = arith.constant 0 : i32
    %c0_i32_1 = arith.constant 0 : i32
    return %arg0, %c0_i32, %c0_i32_0 : i32, i32, i32
  }
  func.func @transform_19(%arg0: i32) -> (i32, i32, i32) {
    %c0_i32 = arith.constant 0 : i32
    %c0_i32_0 = arith.constant 0 : i32
    %c0_i32_1 = arith.constant 0 : i32
    return %arg0, %c0_i32, %c0_i32_0 : i32, i32, i32
  }
}

</mosaic_0001>

<llo_original>
// kernel: tpu_custom_call.1
$region0: #{tpu_custom_call.1}
  #allocation0 [shape = 'u32[]', space=smem, size = 0x4, offset = 0x4, fixed_abs, tag = 'smem constant byte address 0x4 - core index']
  #allocation1 [shape = 'u32[144,128]{1,0:T(1,128)}', space=vmem, size = 0x12000, scoped, tag = 'internal scratch']
  %s0 = inlined_call_operand.vmem [shape: f32[2,512,16], index: 0, kind: input, shape index: {}]
  %s1 = inlined_call_operand.vmem [shape: f32[2,64,256], index: 1, kind: input, shape index: {}]
  %s2 = inlined_call_operand.vmem [shape: f32[512,1], index: 2, kind: input, shape index: {}]
  %s3 = inlined_call_operand.vmem [shape: f32[512,1], index: 3, kind: input, shape index: {}]
  %s4 = inlined_call_operand.vmem [shape: f32[16,512], index: 4, kind: input, shape index: {}]
  %s5 = inlined_call_operand.vmem [shape: f32[512,16], index: 5, kind: input, shape index: {}]
  %s6 = inlined_call_operand.vmem [shape: f32[512,256], index: 6, kind: input, shape index: {}]
  %s7 = inlined_call_operand.vmem [shape: f32[1,256], index: 7, kind: input, shape index: {}]
  %s8 = inlined_call_operand.vmem [shape: f32[64,1], index: 8, kind: input, shape index: {}]
  %s9 = inlined_call_operand.vmem [shape: f32[64,1], index: 9, kind: input, shape index: {}]
  %s10 = inlined_call_operand.vmem [shape: f32[16,64], index: 10, kind: input, shape index: {}]
  %s11 = inlined_call_operand.vmem [shape: f32[64,16], index: 11, kind: input, shape index: {}]
  %s12 = inlined_call_operand.vmem [shape: f32[8,64], index: 12, kind: input, shape index: {}]
  %s13 = inlined_call_operand.vmem [shape: f32[8,1], index: 13, kind: input, shape index: {}]
  %s14 = inlined_call_operand.vmem [shape: f32[7,256], index: 14, kind: input, shape index: {}]
  %s15 = inlined_call_operand.vmem [shape: f32[256,256], index: 15, kind: input, shape index: {}]
  %s16 = inlined_call_operand.vmem [shape: f32[256,256], index: 16, kind: input, shape index: {}]
  %s17 = inlined_call_operand.vmem [shape: f32[1,256], index: 17, kind: input, shape index: {}]
  %s18 = inlined_call_operand.hbm [shape: f32[2,8,256], index: 18, kind: output, shape index: {0}]
  %s19 = inlined_call_operand.vmem [shape: f32[2,7,256], index: 19, kind: output, shape index: {1}]
  %20 = xla_tuple %s18, %s19
  %s21 = sld [smem:[#allocation0]]
  $region113: #{tpu_custom_call.1} parent=0
    _
  %s23 = ssub.s32 1, %s21
  %s24 = scalar_select 0, %s23, %s21
  $region1: #{tpu_custom_call.1} parent=0
    #allocation2 [shape = 'u8[16384]{0}', space=vmem, size = 0x4000, scoped, tag = 'output window, operand 0']
    #allocation3 [shape = 's32[2]{0}', space=sflag, size = 0x8, scoped, tag = 'scoped memory for tpu_custom_call.1']
    %25 = vsyncpa [#allocation3], 0
    %s26 = scalar_lea.sflag [#allocation3], 1
    %27 = vsyncpa %s26, 0
    loop: start=0, step=1, limit=4
    $region2: #{tpu_custom_call.1} parent=1 // loop_pre_header
      _
    $region3: #{tpu_custom_call.1} parent=1 // loop_header
      %s29 = sphi 0, %s33
      %p30 = scmp.ge.s32.totalorder %s29, 4
      %s39 = sphi 0, %s41
      %s42 = sphi 0, %s39
      %s43 = sphi 0, %s42
      %s59 = sphi 0, %s43
      %s65 = sphi 0, %s67
      %s68 = sphi 0, %s65
      %s69 = sphi 0, %s68
      %s85 = sphi 0, %s69
      %s89 = sphi 0, %s89
      %s91 = sphi 0, %s89
      %s92 = sphi 0, %s91
      %s106 = sphi 0, %s92
      %s110 = sphi 0, %s110
      %s112 = sphi 0, %s110
      %s113 = sphi 0, %s112
      %s127 = sphi 0, %s113
      %s131 = sphi 0, %s131
      %s133 = sphi 0, %s131
      %s134 = sphi 0, %s133
      %s148 = sphi 0, %s134
      %s152 = sphi 0, %s152
      %s154 = sphi 0, %s152
      %s155 = sphi 0, %s154
      %s169 = sphi 0, %s155
      %s173 = sphi 0, %s173
      %s175 = sphi 0, %s173
      %s176 = sphi 0, %s175
      %s190 = sphi 0, %s176
      %s194 = sphi 0, %s194
      %s196 = sphi 0, %s194
      %s197 = sphi 0, %s196
      %s211 = sphi 0, %s197
      %s215 = sphi 0, %s215
      %s217 = sphi 0, %s215
      %s218 = sphi 0, %s217
      %s232 = sphi 0, %s218
      %s236 = sphi 0, %s236
      %s238 = sphi 0, %s236
      %s239 = sphi 0, %s238
      %s253 = sphi 0, %s239
      %s257 = sphi 0, %s257
      %s259 = sphi 0, %s257
      %s260 = sphi 0, %s259
      %s274 = sphi 0, %s260
      %s278 = sphi 0, %s278
      %s280 = sphi 0, %s278
      %s281 = sphi 0, %s280
      %s295 = sphi 0, %s281
      %s299 = sphi 0, %s299
      %s301 = sphi 0, %s299
      %s302 = sphi 0, %s301
      %s316 = sphi 0, %s302
      %s320 = sphi 0, %s320
      %s322 = sphi 0, %s320
      %s323 = sphi 0, %s322
      %s337 = sphi 0, %s323
      %s341 = sphi 0, %s341
      %s343 = sphi 0, %s341
      %s344 = sphi 0, %s343
      %s358 = sphi 0, %s344
      %s362 = sphi 0, %s362
      %s364 = sphi 0, %s362
      %s365 = sphi 0, %s364
      %s379 = sphi 0, %s365
      %s383 = sphi 0, %s383
      %s385 = sphi 0, %s383
      %s386 = sphi 0, %s385
      %s400 = sphi 0, %s386
      %s404 = sphi 0, %s404
      %s406 = sphi 0, %s404
      %s407 = sphi 0, %s406
      %s421 = sphi 0, %s407
      %s427 = sphi 0, %s429
      %s430 = sphi 0, %s427
      %s431 = sphi 0, %s430
      %s447 = sphi 0, %s431
      %s453 = sphi 0, %s455
      %s456 = sphi 0, %s453
      %s457 = sphi 0, %s456
      %s473 = sphi 0, %s457
    $region4: #{tpu_custom_call.1} parent=1 // loop_header_branch
      %32 = sbr.rel (%p30) target = $region8
    $region5: #{tpu_custom_call.1} parent=1 // loop_body
      %s34 = ssub.s32 %s29, 1
      %s35 = ssub.s32 %s29, 2
      %s36 = sadd.s32 %s29, 1
      %s37 = ssub.s32 %s29, %s36
      %p38 = scmp.eq.s32.totalorder %s37, 0
      %s40 = sadd.s32 %s39, 1
      %s41 = scalar_select %p38, %s39, %s40
      %p44 = pneg %p38
      %p45 = scmp.eq.s32.totalorder %s29, 1
      %p46 = por %p44, %p45
      %p47 = scmp.ne.s32.totalorder %s39, %s42
      %p48 = scmp.eq.s32.totalorder %s29, 0
      %p49 = por %p47, %p48
      %p50 = scmp.ne.s32.totalorder %s39, %s42
      %p51 = scmp.eq.s32.totalorder %s34, 1
      %p52 = por %p50, %p51
      %p53 = scmp.ne.s32.totalorder %s42, %s43
      %p54 = scmp.eq.s32.totalorder %s34, 0
      %p55 = por %p53, %p54
      %p56 = scmp.ne.s32.totalorder %s42, %s43
      %p57 = scmp.eq.s32.totalorder %s35, 1
      %p58 = por %p56, %p57
      %p60 = scmp.ne.s32.totalorder %s43, %s59
      %p61 = scmp.eq.s32.totalorder %s35, 0
      %p62 = por %p60, %p61
      %s63 = ssub.s32 %s29, %s36
      %p64 = scmp.eq.s32.totalorder %s63, 0
      %s66 = sadd.s32 %s65, 1
      %s67 = scalar_select %p64, %s65, %s66
      %p70 = pneg %p64
      %p71 = scmp.eq.s32.totalorder %s29, 1
      %p72 = por %p70, %p71
      %p73 = scmp.ne.s32.totalorder %s65, %s68
      %p74 = scmp.eq.s32.totalorder %s29, 0
      %p75 = por %p73, %p74
      %p76 = scmp.ne.s32.totalorder %s65, %s68
      %p77 = scmp.eq.s32.totalorder %s34, 1
      %p78 = por %p76, %p77
      %p79 = scmp.ne.s32.totalorder %s68, %s69
      %p80 = scmp.eq.s32.totalorder %s34, 0
      %p81 = por %p79, %p80
      %p82 = scmp.ne.s32.totalorder %s68, %s69
      %p83 = scmp.eq.s32.totalorder %s35, 1
      %p84 = por %p82, %p83
      %p86 = scmp.ne.s32.totalorder %s69, %s85
      %p87 = scmp.eq.s32.totalorder %s35, 0
      %p88 = por %p86, %p87
      %s90 = sadd.s32 %s89, 1
      %p93 = scmp.eq.s32.totalorder %s29, 1
      %p94 = scmp.ne.s32.totalorder %s89, %s91
      %p95 = scmp.eq.s32.totalorder %s29, 0
      %p96 = por %p94, %p95
      %p97 = scmp.ne.s32.totalorder %s89, %s91
      %p98 = scmp.eq.s32.totalorder %s34, 1
      %p99 = por %p97, %p98
      %p100 = scmp.ne.s32.totalorder %s91, %s92
      %p101 = scmp.eq.s32.totalorder %s34, 0
      %p102 = por %p100, %p101
      %p103 = scmp.ne.s32.totalorder %s91, %s92
      %p104 = scmp.eq.s32.totalorder %s35, 1
      %p105 = por %p103, %p104
      %p107 = scmp.ne.s32.totalorder %s92, %s106
      %p108 = scmp.eq.s32.totalorder %s35, 0
      %p109 = por %p107, %p108
      %s111 = sadd.s32 %s110, 1
      %p114 = scmp.eq.s32.totalorder %s29, 1
      %p115 = scmp.ne.s32.totalorder %s110, %s112
      %p116 = scmp.eq.s32.totalorder %s29, 0
      %p117 = por %p115, %p116
      %p118 = scmp.ne.s32.totalorder %s110, %s112
      %p119 = scmp.eq.s32.totalorder %s34, 1
      %p120 = por %p118, %p119
      %p121 = scmp.ne.s32.totalorder %s112, %s113
      %p122 = scmp.eq.s32.totalorder %s34, 0
      %p123 = por %p121, %p122
      %p124 = scmp.ne.s32.totalorder %s112, %s113
      %p125 = scmp.eq.s32.totalorder %s35, 1
      %p126 = por %p124, %p125
      %p128 = scmp.ne.s32.totalorder %s113, %s127
      %p129 = scmp.eq.s32.totalorder %s35, 0
      %p130 = por %p128, %p129
      %s132 = sadd.s32 %s131, 1
      %p135 = scmp.eq.s32.totalorder %s29, 1
      %p136 = scmp.ne.s32.totalorder %s131, %s133
      %p137 = scmp.eq.s32.totalorder %s29, 0
      %p138 = por %p136, %p137
      %p139 = scmp.ne.s32.totalorder %s131, %s133
      %p140 = scmp.eq.s32.totalorder %s34, 1
      %p141 = por %p139, %p140
      %p142 = scmp.ne.s32.totalorder %s133, %s134
      %p143 = scmp.eq.s32.totalorder %s34, 0
      %p144 = por %p142, %p143
      %p145 = scmp.ne.s32.totalorder %s133, %s134
      %p146 = scmp.eq.s32.totalorder %s35, 1
      %p147 = por %p145, %p146
      %p149 = scmp.ne.s32.totalorder %s134, %s148
      %p150 = scmp.eq.s32.totalorder %s35, 0
      %p151 = por %p149, %p150
      %s153 = sadd.s32 %s152, 1
      %p156 = scmp.eq.s32.totalorder %s29, 1
      %p157 = scmp.ne.s32.totalorder %s152, %s154
      %p158 = scmp.eq.s32.totalorder %s29, 0
      %p159 = por %p157, %p158
      %p160 = scmp.ne.s32.totalorder %s152, %s154
      %p161 = scmp.eq.s32.totalorder %s34, 1
      %p162 = por %p160, %p161
      %p163 = scmp.ne.s32.totalorder %s154, %s155
      %p164 = scmp.eq.s32.totalorder %s34, 0
      %p165 = por %p163, %p164
      %p166 = scmp.ne.s32.totalorder %s154, %s155
      %p167 = scmp.eq.s32.totalorder %s35, 1
      %p168 = por %p166, %p167
      %p170 = scmp.ne.s32.totalorder %s155, %s169
      %p171 = scmp.eq.s32.totalorder %s35, 0
      %p172 = por %p170, %p171
      %s174 = sadd.s32 %s173, 1
      %p177 = scmp.eq.s32.totalorder %s29, 1
      %p178 = scmp.ne.s32.totalorder %s173, %s175
      %p179 = scmp.eq.s32.totalorder %s29, 0
      %p180 = por %p178, %p179
      %p181 = scmp.ne.s32.totalorder %s173, %s175
      %p182 = scmp.eq.s32.totalorder %s34, 1
      %p183 = por %p181, %p182
      %p184 = scmp.ne.s32.totalorder %s175, %s176
      %p185 = scmp.eq.s32.totalorder %s34, 0
      %p186 = por %p184, %p185
      %p187 = scmp.ne.s32.totalorder %s175, %s176
      %p188 = scmp.eq.s32.totalorder %s35, 1
      %p189 = por %p187, %p188
      %p191 = scmp.ne.s32.totalorder %s176, %s190
      %p192 = scmp.eq.s32.totalorder %s35, 0
      %p193 = por %p191, %p192
      %s195 = sadd.s32 %s194, 1
      %p198 = scmp.eq.s32.totalorder %s29, 1
      %p199 = scmp.ne.s32.totalorder %s194, %s196
      %p200 = scmp.eq.s32.totalorder %s29, 0
      %p201 = por %p199, %p200
      %p202 = scmp.ne.s32.totalorder %s194, %s196
      %p203 = scmp.eq.s32.totalorder %s34, 1
      %p204 = por %p202, %p203
      %p205 = scmp.ne.s32.totalorder %s196, %s197
      %p206 = scmp.eq.s32.totalorder %s34, 0
      %p207 = por %p205, %p206
      %p208 = scmp.ne.s32.totalorder %s196, %s197
      %p209 = scmp.eq.s32.totalorder %s35, 1
      %p210 = por %p208, %p209
      %p212 = scmp.ne.s32.totalorder %s197, %s211
      %p213 = scmp.eq.s32.totalorder %s35, 0
      %p214 = por %p212, %p213
      %s216 = sadd.s32 %s215, 1
      %p219 = scmp.eq.s32.totalorder %s29, 1
      %p220 = scmp.ne.s32.totalorder %s215, %s217
      %p221 = scmp.eq.s32.totalorder %s29, 0
      %p222 = por %p220, %p221
      %p223 = scmp.ne.s32.totalorder %s215, %s217
      %p224 = scmp.eq.s32.totalorder %s34, 1
      %p225 = por %p223, %p224
      %p226 = scmp.ne.s32.totalorder %s217, %s218
      %p227 = scmp.eq.s32.totalorder %s34, 0
      %p228 = por %p226, %p227
      %p229 = scmp.ne.s32.totalorder %s217, %s218
      %p230 = scmp.eq.s32.totalorder %s35, 1
      %p231 = por %p229, %p230
      %p233 = scmp.ne.s32.totalorder %s218, %s232
      %p234 = scmp.eq.s32.totalorder %s35, 0
      %p235 = por %p233, %p234
      %s237 = sadd.s32 %s236, 1
      %p240 = scmp.eq.s32.totalorder %s29, 1
      %p241 = scmp.ne.s32.totalorder %s236, %s238
      %p242 = scmp.eq.s32.totalorder %s29, 0
      %p243 = por %p241, %p242
      %p244 = scmp.ne.s32.totalorder %s236, %s238
      %p245 = scmp.eq.s32.totalorder %s34, 1
      %p246 = por %p244, %p245
      %p247 = scmp.ne.s32.totalorder %s238, %s239
      %p248 = scmp.eq.s32.totalorder %s34, 0
      %p249 = por %p247, %p248
      %p250 = scmp.ne.s32.totalorder %s238, %s239
      %p251 = scmp.eq.s32.totalorder %s35, 1
      %p252 = por %p250, %p251
      %p254 = scmp.ne.s32.totalorder %s239, %s253
      %p255 = scmp.eq.s32.totalorder %s35, 0
      %p256 = por %p254, %p255
      %s258 = sadd.s32 %s257, 1
      %p261 = scmp.eq.s32.totalorder %s29, 1
      %p262 = scmp.ne.s32.totalorder %s257, %s259
      %p263 = scmp.eq.s32.totalorder %s29, 0
      %p264 = por %p262, %p263
      %p265 = scmp.ne.s32.totalorder %s257, %s259
      %p266 = scmp.eq.s32.totalorder %s34, 1
      %p267 = por %p265, %p266
      %p268 = scmp.ne.s32.totalorder %s259, %s260
      %p269 = scmp.eq.s32.totalorder %s34, 0
      %p270 = por %p268, %p269
      %p271 = scmp.ne.s32.totalorder %s259, %s260
      %p272 = scmp.eq.s32.totalorder %s35, 1
      %p273 = por %p271, %p272
      %p275 = scmp.ne.s32.totalorder %s260, %s274
      %p276 = scmp.eq.s32.totalorder %s35, 0
      %p277 = por %p275, %p276
      %s279 = sadd.s32 %s278, 1
      %p282 = scmp.eq.s32.totalorder %s29, 1
      %p283 = scmp.ne.s32.totalorder %s278, %s280
      %p284 = scmp.eq.s32.totalorder %s29, 0
      %p285 = por %p283, %p284
      %p286 = scmp.ne.s32.totalorder %s278, %s280
      %p287 = scmp.eq.s32.totalorder %s34, 1
      %p288 = por %p286, %p287
      %p289 = scmp.ne.s32.totalorder %s280, %s281
      %p290 = scmp.eq.s32.totalorder %s34, 0
      %p291 = por %p289, %p290
      %p292 = scmp.ne.s32.totalorder %s280, %s281
      %p293 = scmp.eq.s32.totalorder %s35, 1
      %p294 = por %p292, %p293
      %p296 = scmp.ne.s32.totalorder %s281, %s295
      %p297 = scmp.eq.s32.totalorder %s35, 0
      %p298 = por %p296, %p297
      %s300 = sadd.s32 %s299, 1
      %p303 = scmp.eq.s32.totalorder %s29, 1
      %p304 = scmp.ne.s32.totalorder %s299, %s301
      %p305 = scmp.eq.s32.totalorder %s29, 0
      %p306 = por %p304, %p305
      %p307 = scmp.ne.s32.totalorder %s299, %s301
      %p308 = scmp.eq.s32.totalorder %s34, 1
      %p309 = por %p307, %p308
      %p310 = scmp.ne.s32.totalorder %s301, %s302
      %p311 = scmp.eq.s32.totalorder %s34, 0
      %p312 = por %p310, %p311
      %p313 = scmp.ne.s32.totalorder %s301, %s302
      %p314 = scmp.eq.s32.totalorder %s35, 1
      %p315 = por %p313, %p314
      %p317 = scmp.ne.s32.totalorder %s302, %s316
      %p318 = scmp.eq.s32.totalorder %s35, 0
      %p319 = por %p317, %p318
      %s321 = sadd.s32 %s320, 1
      %p324 = scmp.eq.s32.totalorder %s29, 1
      %p325 = scmp.ne.s32.totalorder %s320, %s322
      %p326 = scmp.eq.s32.totalorder %s29, 0
      %p327 = por %p325, %p326
      %p328 = scmp.ne.s32.totalorder %s320, %s322
      %p329 = scmp.eq.s32.totalorder %s34, 1
      %p330 = por %p328, %p329
      %p331 = scmp.ne.s32.totalorder %s322, %s323
      %p332 = scmp.eq.s32.totalorder %s34, 0
      %p333 = por %p331, %p332
      %p334 = scmp.ne.s32.totalorder %s322, %s323
      %p335 = scmp.eq.s32.totalorder %s35, 1
      %p336 = por %p334, %p335
      %p338 = scmp.ne.s32.totalorder %s323, %s337
      %p339 = scmp.eq.s32.totalorder %s35, 0
      %p340 = por %p338, %p339
      %s342 = sadd.s32 %s341, 1
      %p345 = scmp.eq.s32.totalorder %s29, 1
      %p346 = scmp.ne.s32.totalorder %s341, %s343
      %p347 = scmp.eq.s32.totalorder %s29, 0
      %p348 = por %p346, %p347
      %p349 = scmp.ne.s32.totalorder %s341, %s343
      %p350 = scmp.eq.s32.totalorder %s34, 1
      %p351 = por %p349, %p350
      %p352 = scmp.ne.s32.totalorder %s343, %s344
      %p353 = scmp.eq.s32.totalorder %s34, 0
      %p354 = por %p352, %p353
      %p355 = scmp.ne.s32.totalorder %s343, %s344
      %p356 = scmp.eq.s32.totalorder %s35, 1
      %p357 = por %p355, %p356
      %p359 = scmp.ne.s32.totalorder %s344, %s358
      %p360 = scmp.eq.s32.totalorder %s35, 0
      %p361 = por %p359, %p360
      %s363 = sadd.s32 %s362, 1
      %p366 = scmp.eq.s32.totalorder %s29, 1
      %p367 = scmp.ne.s32.totalorder %s362, %s364
      %p368 = scmp.eq.s32.totalorder %s29, 0
      %p369 = por %p367, %p368
      %p370 = scmp.ne.s32.totalorder %s362, %s364
      %p371 = scmp.eq.s32.totalorder %s34, 1
      %p372 = por %p370, %p371
      %p373 = scmp.ne.s32.totalorder %s364, %s365
      %p374 = scmp.eq.s32.totalorder %s34, 0
      %p375 = por %p373, %p374
      %p376 = scmp.ne.s32.totalorder %s364, %s365
      %p377 = scmp.eq.s32.totalorder %s35, 1
      %p378 = por %p376, %p377
      %p380 = scmp.ne.s32.totalorder %s365, %s379
      %p381 = scmp.eq.s32.totalorder %s35, 0
      %p382 = por %p380, %p381
      %s384 = sadd.s32 %s383, 1
      %p387 = scmp.eq.s32.totalorder %s29, 1
      %p388 = scmp.ne.s32.totalorder %s383, %s385
      %p389 = scmp.eq.s32.totalorder %s29, 0
      %p390 = por %p388, %p389
      %p391 = scmp.ne.s32.totalorder %s383, %s385
      %p392 = scmp.eq.s32.totalorder %s34, 1
      %p393 = por %p391, %p392
      %p394 = scmp.ne.s32.totalorder %s385, %s386
      %p395 = scmp.eq.s32.totalorder %s34, 0
      %p396 = por %p394, %p395
      %p397 = scmp.ne.s32.totalorder %s385, %s386
      %p398 = scmp.eq.s32.totalorder %s35, 1
      %p399 = por %p397, %p398
      %p401 = scmp.ne.s32.totalorder %s386, %s400
      %p402 = scmp.eq.s32.totalorder %s35, 0
      %p403 = por %p401, %p402
      %s405 = sadd.s32 %s404, 1
      %p408 = scmp.eq.s32.totalorder %s29, 1
      %p409 = scmp.ne.s32.totalorder %s404, %s406
      %p410 = scmp.eq.s32.totalorder %s29, 0
      %p411 = por %p409, %p410
      %p412 = scmp.ne.s32.totalorder %s404, %s406
      %p413 = scmp.eq.s32.totalorder %s34, 1
      %p414 = por %p412, %p413
      %p415 = scmp.ne.s32.totalorder %s406, %s407
      %p416 = scmp.eq.s32.totalorder %s34, 0
      %p417 = por %p415, %p416
      %p418 = scmp.ne.s32.totalorder %s406, %s407
      %p419 = scmp.eq.s32.totalorder %s35, 1
      %p420 = por %p418, %p419
      %p422 = scmp.ne.s32.totalorder %s407, %s421
      %p423 = scmp.eq.s32.totalorder %s35, 0
      %p424 = por %p422, %p423
      %s425 = ssub.s32 %s29, %s36
      %p426 = scmp.eq.s32.totalorder %s425, 0
      %s428 = sadd.s32 %s427, 1
      %s429 = scalar_select %p426, %s427, %s428
      %p432 = pneg %p426
      %p433 = scmp.eq.s32.totalorder %s29, 1
      %p434 = por %p432, %p433
      %p435 = scmp.ne.s32.totalorder %s427, %s430
      %p436 = scmp.eq.s32.totalorder %s29, 0
      %p437 = por %p435, %p436
      %p438 = scmp.ne.s32.totalorder %s427, %s430
      %p439 = scmp.eq.s32.totalorder %s34, 1
      %p440 = por %p438, %p439
      %p441 = scmp.ne.s32.totalorder %s430, %s431
      %p442 = scmp.eq.s32.totalorder %s34, 0
      %p443 = por %p441, %p442
      %p444 = scmp.ne.s32.totalorder %s430, %s431
      %p445 = scmp.eq.s32.totalorder %s35, 1
      %p446 = por %p444, %p445
      %p448 = scmp.ne.s32.totalorder %s431, %s447
      %p449 = scmp.eq.s32.totalorder %s35, 0
      %p450 = por %p448, %p449
      %s451 = ssub.s32 %s29, %s36
      %p452 = scmp.eq.s32.totalorder %s451, 0
      %s454 = sadd.s32 %s453, 1
      %s455 = scalar_select %p452, %s453, %s454
      %p458 = pneg %p452
      %p459 = scmp.eq.s32.totalorder %s29, 1
      %p460 = por %p458, %p459
      %p461 = scmp.ne.s32.totalorder %s453, %s456
      %p462 = scmp.eq.s32.totalorder %s29, 0
      %p463 = por %p461, %p462
      %p464 = scmp.ne.s32.totalorder %s453, %s456
      %p465 = scmp.eq.s32.totalorder %s34, 1
      %p466 = por %p464, %p465
      %p467 = scmp.ne.s32.totalorder %s456, %s457
      %p468 = scmp.eq.s32.totalorder %s34, 0
      %p469 = por %p467, %p468
      %p470 = scmp.ne.s32.totalorder %s456, %s457
      %p471 = scmp.eq.s32.totalorder %s35, 1
      %p472 = por %p470, %p471
      %p474 = scmp.ne.s32.totalorder %s457, %s473
      %p475 = scmp.eq.s32.totalorder %s35, 0
      %p476 = por %p474, %p475
      %p477 = scmp.le.s32.totalorder 1, %s29
      %p478 = scmp.lt.s32.totalorder %s29, 3
      %p479 = pnand %p477, %p478
      %p480 = pneg %p479
      // Predicated region
      $region9: #{tpu_custom_call.1} parent=5 // pred_check
        _
      $region10: #{tpu_custom_call.1} parent=5 // pred_check_branch
        %482 = sbr.rel (%p479) target = $region12
      $region11: #{tpu_custom_call.1} parent=5 // pred_region
        %s483 = ssub.s32 %s29, 1
        // Predicated region
        $region13: #{tpu_custom_call.1} parent=11 // pred_check
          %p484 = pneg %p102
        $region14: #{tpu_custom_call.1} parent=11 // pred_check_branch
          %486 = sbr.rel (%p484) target = $region16
        $region15: #{tpu_custom_call.1} parent=11 // pred_region
          _
        $region16: #{tpu_custom_call.1} parent=11 // pred_fallthru
          _
        // Predicated region
        $region17: #{tpu_custom_call.1} parent=11 // pred_check
          %p487 = pneg %p123
        $region18: #{tpu_custom_call.1} parent=11 // pred_check_branch
          %489 = sbr.rel (%p487) target = $region20
        $region19: #{tpu_custom_call.1} parent=11 // pred_region
          _
        $region20: #{tpu_custom_call.1} parent=11 // pred_fallthru
          _
        // Predicated region
        $region21: #{tpu_custom_call.1} parent=11 // pred_check
          %p490 = pneg %p144
        $region22: #{tpu_custom_call.1} parent=11 // pred_check_branch
          %492 = sbr.rel (%p490) target = $region24
        $region23: #{tpu_custom_call.1} parent=11 // pred_region
          _
        $region24: #{tpu_custom_call.1} parent=11 // pred_fallthru
          _
        // Predicated region
        $region25: #{tpu_custom_call.1} parent=11 // pred_check
          %p493 = pneg %p165
        $region26: #{tpu_custom_call.1} parent=11 // pred_check_branch
          %495 = sbr.rel (%p493) target = $region28
        $region27: #{tpu_custom_call.1} parent=11 // pred_region
          _
        $region28: #{tpu_custom_call.1} parent=11 // pred_fallthru
          _
        // Predicated region
        $region29: #{tpu_custom_call.1} parent=11 // pred_check
          %p496 = pneg %p186
        $region30: #{tpu_custom_call.1} parent=11 // pred_check_branch
          %498 = sbr.rel (%p496) target = $region32
        $region31: #{tpu_custom_call.1} parent=11 // pred_region
          _
        $region32: #{tpu_custom_call.1} parent=11 // pred_fallthru
          _
        // Predicated region
        $region33: #{tpu_custom_call.1} parent=11 // pred_check
          %p499 = pneg %p207
        $region34: #{tpu_custom_call.1} parent=11 // pred_check_branch
          %501 = sbr.rel (%p499) target = $region36
        $region35: #{tpu_custom_call.1} parent=11 // pred_region
          _
        $region36: #{tpu_custom_call.1} parent=11 // pred_fallthru
          _
        // Predicated region
        $region37: #{tpu_custom_call.1} parent=11 // pred_check
          %p502 = pneg %p228
        $region38: #{tpu_custom_call.1} parent=11 // pred_check_branch
          %504 = sbr.rel (%p502) target = $region40
        $region39: #{tpu_custom_call.1} parent=11 // pred_region
          _
        $region40: #{tpu_custom_call.1} parent=11 // pred_fallthru
          _
        // Predicated region
        $region41: #{tpu_custom_call.1} parent=11 // pred_check
          %p505 = pneg %p249
        $region42: #{tpu_custom_call.1} parent=11 // pred_check_branch
          %507 = sbr.rel (%p505) target = $region44
        $region43: #{tpu_custom_call.1} parent=11 // pred_region
          _
        $region44: #{tpu_custom_call.1} parent=11 // pred_fallthru
          _
        // Predicated region
        $region45: #{tpu_custom_call.1} parent=11 // pred_check
          %p508 = pneg %p270
        $region46: #{tpu_custom_call.1} parent=11 // pred_check_branch
          %510 = sbr.rel (%p508) target = $region48
        $region47: #{tpu_custom_call.1} parent=11 // pred_region
          _
        $region48: #{tpu_custom_call.1} parent=11 // pred_fallthru
          _
        // Predicated region
        $region49: #{tpu_custom_call.1} parent=11 // pred_check
          %p511 = pneg %p291
        $region50: #{tpu_custom_call.1} parent=11 // pred_check_branch
          %513 = sbr.rel (%p511) target = $region52
        $region51: #{tpu_custom_call.1} parent=11 // pred_region
          _
        $region52: #{tpu_custom_call.1} parent=11 // pred_fallthru
          _
        // Predicated region
        $region53: #{tpu_custom_call.1} parent=11 // pred_check
          %p514 = pneg %p312
        $region54: #{tpu_custom_call.1} parent=11 // pred_check_branch
          %516 = sbr.rel (%p514) target = $region56
        $region55: #{tpu_custom_call.1} parent=11 // pred_region
          _
        $region56: #{tpu_custom_call.1} parent=11 // pred_fallthru
          _
        // Predicated region
        $region57: #{tpu_custom_call.1} parent=11 // pred_check
          %p517 = pneg %p333
        $region58: #{tpu_custom_call.1} parent=11 // pred_check_branch
          %519 = sbr.rel (%p517) target = $region60
        $region59: #{tpu_custom_call.1} parent=11 // pred_region
          _
        $region60: #{tpu_custom_call.1} parent=11 // pred_fallthru
          _
        // Predicated region
        $region61: #{tpu_custom_call.1} parent=11 // pred_check
          %p520 = pneg %p354
        $region62: #{tpu_custom_call.1} parent=11 // pred_check_branch
          %522 = sbr.rel (%p520) target = $region64
        $region63: #{tpu_custom_call.1} parent=11 // pred_region
          _
        $region64: #{tpu_custom_call.1} parent=11 // pred_fallthru
          _
        // Predicated region
        $region65: #{tpu_custom_call.1} parent=11 // pred_check
          %p523 = pneg %p375
        $region66: #{tpu_custom_call.1} parent=11 // pred_check_branch
          %525 = sbr.rel (%p523) target = $region68
        $region67: #{tpu_custom_call.1} parent=11 // pred_region
          _
        $region68: #{tpu_custom_call.1} parent=11 // pred_fallthru
          _
        // Predicated region
        $region69: #{tpu_custom_call.1} parent=11 // pred_check
          %p526 = pneg %p396
        $region70: #{tpu_custom_call.1} parent=11 // pred_check_branch
          %528 = sbr.rel (%p526) target = $region72
        $region71: #{tpu_custom_call.1} parent=11 // pred_region
          _
        $region72: #{tpu_custom_call.1} parent=11 // pred_fallthru
          _
        // Predicated region
        $region73: #{tpu_custom_call.1} parent=11 // pred_check
          %p529 = pneg %p417
        $region74: #{tpu_custom_call.1} parent=11 // pred_check_branch
          %531 = sbr.rel (%p529) target = $region76
        $region75: #{tpu_custom_call.1} parent=11 // pred_region
          _
        $region76: #{tpu_custom_call.1} parent=11 // pred_fallthru
          _
      $region12: #{tpu_custom_call.1} parent=5 // pred_fallthru
        _
      %p532 = scmp.lt.s32.totalorder %s29, 2
      // Predicated region
      $region77: #{tpu_custom_call.1} parent=5 // pred_check
        %p533 = pneg %p532
      $region78: #{tpu_custom_call.1} parent=5 // pred_check_branch
        %535 = sbr.rel (%p533) target = $region80
      $region79: #{tpu_custom_call.1} parent=5 // pred_region
        // Predicated region
        $region81: #{tpu_custom_call.1} parent=79 // pred_check
          %p536 = pneg %p49
        $region82: #{tpu_custom_call.1} parent=79 // pred_check_branch
          %538 = sbr.rel (%p536) target = $region84
        $region83: #{tpu_custom_call.1} parent=79 // pred_region
          %p539 = scmp.lt.s32.totalorder %s29, 1
          %s540 = scalar_select %p539, %s29, 1
          %s541 = smul.addr %s540, 64
          %s542 = smul.addr %s541, 8
          %s543 = scalar_lea.vmem %s0, %s542
        $region84: #{tpu_custom_call.1} parent=79 // pred_fallthru
          _
        // Predicated region
        $region85: #{tpu_custom_call.1} parent=79 // pred_check
          %p544 = pneg %p75
        $region86: #{tpu_custom_call.1} parent=79 // pred_check_branch
          %546 = sbr.rel (%p544) target = $region88
        $region87: #{tpu_custom_call.1} parent=79 // pred_region
          %p547 = scmp.lt.s32.totalorder %s29, 1
          %s548 = scalar_select %p547, %s29, 1
          %s549 = smul.addr %s548, 16
          %s550 = smul.addr %s549, 8
          %s551 = scalar_lea.vmem %s1, %s550
        $region88: #{tpu_custom_call.1} parent=79 // pred_fallthru
          _
      $region80: #{tpu_custom_call.1} parent=5 // pred_fallthru
        _
      %p552 = scmp.le.s32.totalorder 1, %s29
      %p553 = scmp.lt.s32.totalorder %s29, 3
      %p554 = pnand %p552, %p553
      %p555 = pneg %p554
      // Predicated region
      $region89: #{tpu_custom_call.1} parent=5 // pred_check
        _
      $region90: #{tpu_custom_call.1} parent=5 // pred_check_branch
        %557 = sbr.rel (%p554) target = $region92
      $region91: #{tpu_custom_call.1} parent=5 // pred_region
        %s558 = ssub.s32 %s29, 1
        %p559 = scmp.lt.s32.totalorder %s34, 1
        %s560 = scalar_select %p559, %s34, 1
        %s561 = smul.addr %s560, 64
        %s562 = smul.addr %s561, 8
        %s563 = scalar_lea.vmem %s0, %s562
        %p564 = pneg %p55
        %p565 = pneg %p52
        %p566 = scmp.lt.s32.totalorder %s34, 1
        %s567 = scalar_select %p566, %s34, 1
        %s568 = smul.addr %s567, 16
        %s569 = smul.addr %s568, 8
        %s570 = scalar_lea.vmem %s1, %s569
        %p571 = pneg %p81
        %p572 = pneg %p78
        %p573 = pneg %p102
        %p574 = pneg %p99
        %p575 = pneg %p123
        %p576 = pneg %p120
        %p577 = pneg %p144
        %p578 = pneg %p141
        %p579 = pneg %p165
        %p580 = pneg %p162
        %p581 = pneg %p186
        %p582 = pneg %p183
        %p583 = pneg %p207
        %p584 = pneg %p204
        %p585 = pneg %p228
        %p586 = pneg %p225
        %p587 = pneg %p249
        %p588 = pneg %p246
        %p589 = pneg %p270
        %p590 = pneg %p267
        %p591 = pneg %p291
        %p592 = pneg %p288
        %p593 = pneg %p312
        %p594 = pneg %p309
        %p595 = pneg %p333
        %p596 = pneg %p330
        %p597 = pneg %p354
        %p598 = pneg %p351
        %p599 = pneg %p375
        %p600 = pneg %p372
        %p601 = pneg %p396
        %p602 = pneg %p393
        %p603 = pneg %p417
        %p604 = pneg %p414
        %p605 = pneg %p443
        %p606 = pneg %p440
        %s607 = sand.u32 %s430, 1
        %s608 = scalar_lea.sflag [#allocation3], %s607
        %s609 = sand.u32 %s430, 1
        %s610 = smul.addr %s609, 16
        %s611 = scalar_lea.vmem [#allocation2], %s610
        %p612 = pneg %p469
        %p613 = pneg %p466
        %p614 = scmp.lt.s32.totalorder %s34, 1
        %s615 = scalar_select %p614, %s34, 1
        %s616 = smul.addr %s615, 2
        %s617 = smul.addr %s616, 8
        %s618 = scalar_lea.vmem %s19, %s617
        %p619 = scmp.lt.s32.totalorder %s34, 1
        %s620 = scalar_select %p619, %s34, 1
        %s621 = smul.addr %s620, 64
        %s622 = smul.addr %s621, 8
        %s623 = scalar_lea.vmem %s0, %s622
        %p624 = scmp.lt.s32.totalorder %s34, 1
        %s625 = scalar_select %p624, %s34, 1
        %s626 = smul.addr %s625, 16
        %s627 = smul.addr %s626, 8
        %s628 = scalar_lea.vmem %s1, %s627
        %p629 = scmp.lt.s32.totalorder %s34, 1
        %s630 = scalar_select %p629, %s34, 1
        %s631 = smul.addr %s630, 2
        %s632 = smul.addr %s631, 8
        %s633 = scalar_lea.vmem %s19, %s632
        %v634 = vld [vmem:[%s623] sm:$0xff]
        %v635 = vld [vmem:[%s623 + $0x8] sm:$0xff]
        %v636 = vld [vmem:[%s623 + $0x10] sm:$0xff]
        %v637 = vld [vmem:[%s623 + $0x18] sm:$0xff]
        %v638 = vld [vmem:[%s623 + $0x20] sm:$0xff]
        %v639 = vld [vmem:[%s623 + $0x28] sm:$0xff]
        %v640 = vld [vmem:[%s623 + $0x30] sm:$0xff]
        %v641 = vld [vmem:[%s623 + $0x38] sm:$0xff]
        %v642 = vld [vmem:[%s623 + $0x40] sm:$0xff]
        %v643 = vld [vmem:[%s623 + $0x48] sm:$0xff]
        %v644 = vld [vmem:[%s623 + $0x50] sm:$0xff]
        %v645 = vld [vmem:[%s623 + $0x58] sm:$0xff]
        %v646 = vld [vmem:[%s623 + $0x60] sm:$0xff]
        %v647 = vld [vmem:[%s623 + $0x68] sm:$0xff]
        %v648 = vld [vmem:[%s623 + $0x70] sm:$0xff]
        %v649 = vld [vmem:[%s623 + $0x78] sm:$0xff]
        %v650 = vld [vmem:[%s623 + $0x80] sm:$0xff]
        %v651 = vld [vmem:[%s623 + $0x88] sm:$0xff]
        %v652 = vld [vmem:[%s623 + $0x90] sm:$0xff]
        %v653 = vld [vmem:[%s623 + $0x98] sm:$0xff]
        %v654 = vld [vmem:[%s623 + $0xa0] sm:$0xff]
        %v655 = vld [vmem:[%s623 + $0xa8] sm:$0xff]
        %v656 = vld [vmem:[%s623 + $0xb0] sm:$0xff]
        %v657 = vld [vmem:[%s623 + $0xb8] sm:$0xff]
        %v658 = vld [vmem:[%s623 + $0xc0] sm:$0xff]
        %v659 = vld [vmem:[%s623 + $0xc8] sm:$0xff]
        %v660 = vld [vmem:[%s623 + $0xd0] sm:$0xff]
        %v661 = vld [vmem:[%s623 + $0xd8] sm:$0xff]
        %v662 = vld [vmem:[%s623 + $0xe0] sm:$0xff]
        %v663 = vld [vmem:[%s623 + $0xe8] sm:$0xff]
        %v664 = vld [vmem:[%s623 + $0xf0] sm:$0xff]
        %v665 = vld [vmem:[%s623 + $0xf8] sm:$0xff]
        %v666 = vld [vmem:[%s623 + $0x100] sm:$0xff]
        %v667 = vld [vmem:[%s623 + $0x108] sm:$0xff]
        %v668 = vld [vmem:[%s623 + $0x110] sm:$0xff]
        %v669 = vld [vmem:[%s623 + $0x118] sm:$0xff]
        %v670 = vld [vmem:[%s623 + $0x120] sm:$0xff]
        %v671 = vld [vmem:[%s623 + $0x128] sm:$0xff]
        %v672 = vld [vmem:[%s623 + $0x130] sm:$0xff]
        %v673 = vld [vmem:[%s623 + $0x138] sm:$0xff]
        %v674 = vld [vmem:[%s623 + $0x140] sm:$0xff]
        %v675 = vld [vmem:[%s623 + $0x148] sm:$0xff]
        %v676 = vld [vmem:[%s623 + $0x150] sm:$0xff]
        %v677 = vld [vmem:[%s623 + $0x158] sm:$0xff]
        %v678 = vld [vmem:[%s623 + $0x160] sm:$0xff]
        %v679 = vld [vmem:[%s623 + $0x168] sm:$0xff]
        %v680 = vld [vmem:[%s623 + $0x170] sm:$0xff]
        %v681 = vld [vmem:[%s623 + $0x178] sm:$0xff]
        %v682 = vld [vmem:[%s623 + $0x180] sm:$0xff]
        %v683 = vld [vmem:[%s623 + $0x188] sm:$0xff]
        %v684 = vld [vmem:[%s623 + $0x190] sm:$0xff]
        %v685 = vld [vmem:[%s623 + $0x198] sm:$0xff]
        %v686 = vld [vmem:[%s623 + $0x1a0] sm:$0xff]
        %v687 = vld [vmem:[%s623 + $0x1a8] sm:$0xff]
        %v688 = vld [vmem:[%s623 + $0x1b0] sm:$0xff]
        %v689 = vld [vmem:[%s623 + $0x1b8] sm:$0xff]
        %v690 = vld [vmem:[%s623 + $0x1c0] sm:$0xff]
        %v691 = vld [vmem:[%s623 + $0x1c8] sm:$0xff]
        %v692 = vld [vmem:[%s623 + $0x1d0] sm:$0xff]
        %v693 = vld [vmem:[%s623 + $0x1d8] sm:$0xff]
        %v694 = vld [vmem:[%s623 + $0x1e0] sm:$0xff]
        %v695 = vld [vmem:[%s623 + $0x1e8] sm:$0xff]
        %v696 = vld [vmem:[%s623 + $0x1f0] sm:$0xff]
        %v697 = vld [vmem:[%s623 + $0x1f8] sm:$0xff]
        %v698 = vld [vmem:[%s2] sm:$0xff]
        %v699 = vld [vmem:[%s2 + $0x8] sm:$0xff]
        %v700 = vld [vmem:[%s2 + $0x10] sm:$0xff]
        %v701 = vld [vmem:[%s2 + $0x18] sm:$0xff]
        %v702 = vld [vmem:[%s2 + $0x20] sm:$0xff]
        %v703 = vld [vmem:[%s2 + $0x28] sm:$0xff]
        %v704 = vld [vmem:[%s2 + $0x30] sm:$0xff]
        %v705 = vld [vmem:[%s2 + $0x38] sm:$0xff]
        %v706 = vld [vmem:[%s2 + $0x40] sm:$0xff]
        %v707 = vld [vmem:[%s2 + $0x48] sm:$0xff]
        %v708 = vld [vmem:[%s2 + $0x50] sm:$0xff]
        %v709 = vld [vmem:[%s2 + $0x58] sm:$0xff]
        %v710 = vld [vmem:[%s2 + $0x60] sm:$0xff]
        %v711 = vld [vmem:[%s2 + $0x68] sm:$0xff]
        %v712 = vld [vmem:[%s2 + $0x70] sm:$0xff]
        %v713 = vld [vmem:[%s2 + $0x78] sm:$0xff]
        %v714 = vld [vmem:[%s2 + $0x80] sm:$0xff]
        %v715 = vld [vmem:[%s2 + $0x88] sm:$0xff]
        %v716 = vld [vmem:[%s2 + $0x90] sm:$0xff]
        %v717 = vld [vmem:[%s2 + $0x98] sm:$0xff]
        %v718 = vld [vmem:[%s2 + $0xa0] sm:$0xff]
        %v719 = vld [vmem:[%s2 + $0xa8] sm:$0xff]
        %v720 = vld [vmem:[%s2 + $0xb0] sm:$0xff]
        %v721 = vld [vmem:[%s2 + $0xb8] sm:$0xff]
        %v722 = vld [vmem:[%s2 + $0xc0] sm:$0xff]
        %v723 = vld [vmem:[%s2 + $0xc8] sm:$0xff]
        %v724 = vld [vmem:[%s2 + $0xd0] sm:$0xff]
        %v725 = vld [vmem:[%s2 + $0xd8] sm:$0xff]
        %v726 = vld [vmem:[%s2 + $0xe0] sm:$0xff]
        %v727 = vld [vmem:[%s2 + $0xe8] sm:$0xff]
        %v728 = vld [vmem:[%s2 + $0xf0] sm:$0xff]
        %v729 = vld [vmem:[%s2 + $0xf8] sm:$0xff]
        %v730 = vld [vmem:[%s2 + $0x100] sm:$0xff]
        %v731 = vld [vmem:[%s2 + $0x108] sm:$0xff]
        %v732 = vld [vmem:[%s2 + $0x110] sm:$0xff]
        %v733 = vld [vmem:[%s2 + $0x118] sm:$0xff]
        %v734 = vld [vmem:[%s2 + $0x120] sm:$0xff]
        %v735 = vld [vmem:[%s2 + $0x128] sm:$0xff]
        %v736 = vld [vmem:[%s2 + $0x130] sm:$0xff]
        %v737 = vld [vmem:[%s2 + $0x138] sm:$0xff]
        %v738 = vld [vmem:[%s2 + $0x140] sm:$0xff]
        %v739 = vld [vmem:[%s2 + $0x148] sm:$0xff]
        %v740 = vld [vmem:[%s2 + $0x150] sm:$0xff]
        %v741 = vld [vmem:[%s2 + $0x158] sm:$0xff]
        %v742 = vld [vmem:[%s2 + $0x160] sm:$0xff]
        %v743 = vld [vmem:[%s2 + $0x168] sm:$0xff]
        %v744 = vld [vmem:[%s2 + $0x170] sm:$0xff]
        %v745 = vld [vmem:[%s2 + $0x178] sm:$0xff]
        %v746 = vld [vmem:[%s2 + $0x180] sm:$0xff]
        %v747 = vld [vmem:[%s2 + $0x188] sm:$0xff]
        %v748 = vld [vmem:[%s2 + $0x190] sm:$0xff]
        %v749 = vld [vmem:[%s2 + $0x198] sm:$0xff]
        %v750 = vld [vmem:[%s2 + $0x1a0] sm:$0xff]
        %v751 = vld [vmem:[%s2 + $0x1a8] sm:$0xff]
        %v752 = vld [vmem:[%s2 + $0x1b0] sm:$0xff]
        %v753 = vld [vmem:[%s2 + $0x1b8] sm:$0xff]
        %v754 = vld [vmem:[%s2 + $0x1c0] sm:$0xff]
        %v755 = vld [vmem:[%s2 + $0x1c8] sm:$0xff]
        %v756 = vld [vmem:[%s2 + $0x1d0] sm:$0xff]
        %v757 = vld [vmem:[%s2 + $0x1d8] sm:$0xff]
        %v758 = vld [vmem:[%s2 + $0x1e0] sm:$0xff]
        %v759 = vld [vmem:[%s2 + $0x1e8] sm:$0xff]
        %v760 = vld [vmem:[%s2 + $0x1f0] sm:$0xff]
        %v761 = vld [vmem:[%s2 + $0x1f8] sm:$0xff]
        %v762 = vld [vmem:[%s3] sm:$0xff]
        %v763 = vld [vmem:[%s3 + $0x8] sm:$0xff]
        %v764 = vld [vmem:[%s3 + $0x10] sm:$0xff]
        %v765 = vld [vmem:[%s3 + $0x18] sm:$0xff]
        %v766 = vld [vmem:[%s3 + $0x20] sm:$0xff]
        %v767 = vld [vmem:[%s3 + $0x28] sm:$0xff]
        %v768 = vld [vmem:[%s3 + $0x30] sm:$0xff]
        %v769 = vld [vmem:[%s3 + $0x38] sm:$0xff]
        %v770 = vld [vmem:[%s3 + $0x40] sm:$0xff]
        %v771 = vld [vmem:[%s3 + $0x48] sm:$0xff]
        %v772 = vld [vmem:[%s3 + $0x50] sm:$0xff]
        %v773 = vld [vmem:[%s3 + $0x58] sm:$0xff]
        %v774 = vld [vmem:[%s3 + $0x60] sm:$0xff]
        %v775 = vld [vmem:[%s3 + $0x68] sm:$0xff]
        %v776 = vld [vmem:[%s3 + $0x70] sm:$0xff]
        %v777 = vld [vmem:[%s3 + $0x78] sm:$0xff]
        %v778 = vld [vmem:[%s3 + $0x80] sm:$0xff]
        %v779 = vld [vmem:[%s3 + $0x88] sm:$0xff]
        %v780 = vld [vmem:[%s3 + $0x90] sm:$0xff]
        %v781 = vld [vmem:[%s3 + $0x98] sm:$0xff]
        %v782 = vld [vmem:[%s3 + $0xa0] sm:$0xff]
        %v783 = vld [vmem:[%s3 + $0xa8] sm:$0xff]
        %v784 = vld [vmem:[%s3 + $0xb0] sm:$0xff]
        %v785 = vld [vmem:[%s3 + $0xb8] sm:$0xff]
        %v786 = vld [vmem:[%s3 + $0xc0] sm:$0xff]
        %v787 = vld [vmem:[%s3 + $0xc8] sm:$0xff]
        %v788 = vld [vmem:[%s3 + $0xd0] sm:$0xff]
        %v789 = vld [vmem:[%s3 + $0xd8] sm:$0xff]
        %v790 = vld [vmem:[%s3 + $0xe0] sm:$0xff]
        %v791 = vld [vmem:[%s3 + $0xe8] sm:$0xff]
        %v792 = vld [vmem:[%s3 + $0xf0] sm:$0xff]
        %v793 = vld [vmem:[%s3 + $0xf8] sm:$0xff]
        %v794 = vld [vmem:[%s3 + $0x100] sm:$0xff]
        %v795 = vld [vmem:[%s3 + $0x108] sm:$0xff]
        %v796 = vld [vmem:[%s3 + $0x110] sm:$0xff]
        %v797 = vld [vmem:[%s3 + $0x118] sm:$0xff]
        %v798 = vld [vmem:[%s3 + $0x120] sm:$0xff]
        %v799 = vld [vmem:[%s3 + $0x128] sm:$0xff]
        %v800 = vld [vmem:[%s3 + $0x130] sm:$0xff]
        %v801 = vld [vmem:[%s3 + $0x138] sm:$0xff]
        %v802 = vld [vmem:[%s3 + $0x140] sm:$0xff]
        %v803 = vld [vmem:[%s3 + $0x148] sm:$0xff]
        %v804 = vld [vmem:[%s3 + $0x150] sm:$0xff]
        %v805 = vld [vmem:[%s3 + $0x158] sm:$0xff]
        %v806 = vld [vmem:[%s3 + $0x160] sm:$0xff]
        %v807 = vld [vmem:[%s3 + $0x168] sm:$0xff]
        %v808 = vld [vmem:[%s3 + $0x170] sm:$0xff]
        %v809 = vld [vmem:[%s3 + $0x178] sm:$0xff]
        %v810 = vld [vmem:[%s3 + $0x180] sm:$0xff]
        %v811 = vld [vmem:[%s3 + $0x188] sm:$0xff]
        %v812 = vld [vmem:[%s3 + $0x190] sm:$0xff]
        %v813 = vld [vmem:[%s3 + $0x198] sm:$0xff]
        %v814 = vld [vmem:[%s3 + $0x1a0] sm:$0xff]
        %v815 = vld [vmem:[%s3 + $0x1a8] sm:$0xff]
        %v816 = vld [vmem:[%s3 + $0x1b0] sm:$0xff]
        %v817 = vld [vmem:[%s3 + $0x1b8] sm:$0xff]
        %v818 = vld [vmem:[%s3 + $0x1c0] sm:$0xff]
        %v819 = vld [vmem:[%s3 + $0x1c8] sm:$0xff]
        %v820 = vld [vmem:[%s3 + $0x1d0] sm:$0xff]
        %v821 = vld [vmem:[%s3 + $0x1d8] sm:$0xff]
        %v822 = vld [vmem:[%s3 + $0x1e0] sm:$0xff]
        %v823 = vld [vmem:[%s3 + $0x1e8] sm:$0xff]
        %v824 = vld [vmem:[%s3 + $0x1f0] sm:$0xff]
        %v825 = vld [vmem:[%s3 + $0x1f8] sm:$0xff]
        %v826 = vld [vmem:[%s4] sm:$0xff]
        %v827 = vld [vmem:[%s4 + $0x8] sm:$0xff]
        %v828 = vld [vmem:[%s4 + $0x10] sm:$0xff]
        %v829 = vld [vmem:[%s4 + $0x18] sm:$0xff]
        %v830 = vld [vmem:[%s4 + $0x20] sm:$0xff]
        %v831 = vld [vmem:[%s4 + $0x28] sm:$0xff]
        %v832 = vld [vmem:[%s4 + $0x30] sm:$0xff]
        %v833 = vld [vmem:[%s4 + $0x38] sm:$0xff]
        %v834 = vld [vmem:[%s5] sm:$0xff]
        %v835 = vld [vmem:[%s5 + $0x8] sm:$0xff]
        %v836 = vld [vmem:[%s5 + $0x10] sm:$0xff]
        %v837 = vld [vmem:[%s5 + $0x18] sm:$0xff]
        %v838 = vld [vmem:[%s5 + $0x20] sm:$0xff]
        %v839 = vld [vmem:[%s5 + $0x28] sm:$0xff]
        %v840 = vld [vmem:[%s5 + $0x30] sm:$0xff]
        %v841 = vld [vmem:[%s5 + $0x38] sm:$0xff]
        %v842 = vld [vmem:[%s5 + $0x40] sm:$0xff]
        %v843 = vld [vmem:[%s5 + $0x48] sm:$0xff]
        %v844 = vld [vmem:[%s5 + $0x50] sm:$0xff]
        %v845 = vld [vmem:[%s5 + $0x58] sm:$0xff]
        %v846 = vld [vmem:[%s5 + $0x60] sm:$0xff]
        %v847 = vld [vmem:[%s5 + $0x68] sm:$0xff]
        %v848 = vld [vmem:[%s5 + $0x70] sm:$0xff]
        %v849 = vld [vmem:[%s5 + $0x78] sm:$0xff]
        %v850 = vld [vmem:[%s5 + $0x80] sm:$0xff]
        %v851 = vld [vmem:[%s5 + $0x88] sm:$0xff]
        %v852 = vld [vmem:[%s5 + $0x90] sm:$0xff]
        %v853 = vld [vmem:[%s5 + $0x98] sm:$0xff]
        %v854 = vld [vmem:[%s5 + $0xa0] sm:$0xff]
        %v855 = vld [vmem:[%s5 + $0xa8] sm:$0xff]
        %v856 = vld [vmem:[%s5 + $0xb0] sm:$0xff]
        %v857 = vld [vmem:[%s5 + $0xb8] sm:$0xff]
        %v858 = vld [vmem:[%s5 + $0xc0] sm:$0xff]
        %v859 = vld [vmem:[%s5 + $0xc8] sm:$0xff]
        %v860 = vld [vmem:[%s5 + $0xd0] sm:$0xff]
        %v861 = vld [vmem:[%s5 + $0xd8] sm:$0xff]
        %v862 = vld [vmem:[%s5 + $0xe0] sm:$0xff]
        %v863 = vld [vmem:[%s5 + $0xe8] sm:$0xff]
        %v864 = vld [vmem:[%s5 + $0xf0] sm:$0xff]
        %v865 = vld [vmem:[%s5 + $0xf8] sm:$0xff]
        %v866 = vld [vmem:[%s5 + $0x100] sm:$0xff]
        %v867 = vld [vmem:[%s5 + $0x108] sm:$0xff]
        %v868 = vld [vmem:[%s5 + $0x110] sm:$0xff]
        %v869 = vld [vmem:[%s5 + $0x118] sm:$0xff]
        %v870 = vld [vmem:[%s5 + $0x120] sm:$0xff]
        %v871 = vld [vmem:[%s5 + $0x128] sm:$0xff]
        %v872 = vld [vmem:[%s5 + $0x130] sm:$0xff]
        %v873 = vld [vmem:[%s5 + $0x138] sm:$0xff]
        %v874 = vld [vmem:[%s5 + $0x140] sm:$0xff]
        %v875 = vld [vmem:[%s5 + $0x148] sm:$0xff]
        %v876 = vld [vmem:[%s5 + $0x150] sm:$0xff]
        %v877 = vld [vmem:[%s5 + $0x158] sm:$0xff]
        %v878 = vld [vmem:[%s5 + $0x160] sm:$0xff]
        %v879 = vld [vmem:[%s5 + $0x168] sm:$0xff]
        %v880 = vld [vmem:[%s5 + $0x170] sm:$0xff]
        %v881 = vld [vmem:[%s5 + $0x178] sm:$0xff]
        %v882 = vld [vmem:[%s5 + $0x180] sm:$0xff]
        %v883 = vld [vmem:[%s5 + $0x188] sm:$0xff]
        %v884 = vld [vmem:[%s5 + $0x190] sm:$0xff]
        %v885 = vld [vmem:[%s5 + $0x198] sm:$0xff]
        %v886 = vld [vmem:[%s5 + $0x1a0] sm:$0xff]
        %v887 = vld [vmem:[%s5 + $0x1a8] sm:$0xff]
        %v888 = vld [vmem:[%s5 + $0x1b0] sm:$0xff]
        %v889 = vld [vmem:[%s5 + $0x1b8] sm:$0xff]
        %v890 = vld [vmem:[%s5 + $0x1c0] sm:$0xff]
        %v891 = vld [vmem:[%s5 + $0x1c8] sm:$0xff]
        %v892 = vld [vmem:[%s5 + $0x1d0] sm:$0xff]
        %v893 = vld [vmem:[%s5 + $0x1d8] sm:$0xff]
        %v894 = vld [vmem:[%s5 + $0x1e0] sm:$0xff]
        %v895 = vld [vmem:[%s5 + $0x1e8] sm:$0xff]
        %v896 = vld [vmem:[%s5 + $0x1f0] sm:$0xff]
        %v897 = vld [vmem:[%s5 + $0x1f8] sm:$0xff]
        %898 = vmatprep.subr.mxu0 0.0
        %899 = vmatpush1.msra.mxu0 %v634
        %900 = vmatprep.subr.mxu0 0.0
        %901 = vmatpush1.msra.mxu0 %v635
        %902 = vmatprep.subr.mxu0 0.0
        %903 = vmatpush1.msra.mxu0 %v636
        %904 = vmatprep.subr.mxu0 0.0
        %905 = vmatpush1.msra.mxu0 %v637
        %906 = vmatprep.subr.mxu0 0.0
        %907 = vmatpush1.msra.mxu0 %v638
        %908 = vmatprep.subr.mxu0 0.0
        %909 = vmatpush1.msra.mxu0 %v639
        %910 = vmatprep.subr.mxu0 0.0
        %911 = vmatpush1.msra.mxu0 %v640
        %912 = vmatprep.subr.mxu0 0.0
        %913 = vmatpush1.msra.mxu0 %v641
        %914 = vmatprep.subr.mxu0 0.0
        %915 = vmatpush1.msra.mxu0 %v642
        %916 = vmatprep.subr.mxu0 0.0
        %917 = vmatpush1.msra.mxu0 %v643
        %918 = vmatprep.subr.mxu0 0.0
        %919 = vmatpush1.msra.mxu0 %v644
        %920 = vmatprep.subr.mxu0 0.0
        %921 = vmatpush1.msra.mxu0 %v645
        %922 = vmatprep.subr.mxu0 0.0
        %923 = vmatpush1.msra.mxu0 %v646
        %924 = vmatprep.subr.mxu0 0.0
        %925 = vmatpush1.msra.mxu0 %v647
        %926 = vmatprep.subr.mxu0 0.0
        %927 = vmatpush1.msra.mxu0 %v648
        %928 = vmatprep.subr.mxu0 0.0
        %929 = vmatpush1.msra.mxu0 %v649
        %930 = vmatprep.subr.mxu0 0.0
        %931 = vmatpush1.msra.mxu0 %v650
        %932 = vmatprep.subr.mxu0 0.0
        %933 = vmatpush1.msra.mxu0 %v651
        %934 = vmatprep.subr.mxu0 0.0
        %935 = vmatpush1.msra.mxu0 %v652
        %936 = vmatprep.subr.mxu0 0.0
        %937 = vmatpush1.msra.mxu0 %v653
        %938 = vmatprep.subr.mxu0 0.0
        %939 = vmatpush1.msra.mxu0 %v654
        %940 = vmatprep.subr.mxu0 0.0
        %941 = vmatpush1.msra.mxu0 %v655
        %942 = vmatprep.subr.mxu0 0.0
        %943 = vmatpush1.msra.mxu0 %v656
        %944 = vmatprep.subr.mxu0 0.0
        %945 = vmatpush1.msra.mxu0 %v657
        %946 = vmatprep.subr.mxu0 0.0
        %947 = vmatpush1.msra.mxu0 %v658
        %948 = vmatprep.subr.mxu0 0.0
        %949 = vmatpush1.msra.mxu0 %v659
        %950 = vmatprep.subr.mxu0 0.0
        %951 = vmatpush1.msra.mxu0 %v660
        %952 = vmatprep.subr.mxu0 0.0
        %953 = vmatpush1.msra.mxu0 %v661
        %954 = vmatprep.subr.mxu0 0.0
        %955 = vmatpush1.msra.mxu0 %v662
        %956 = vmatprep.subr.mxu0 0.0
        %957 = vmatpush1.msra.mxu0 %v663
        %958 = vmatprep.subr.mxu0 0.0
        %959 = vmatpush1.msra.mxu0 %v664
        %960 = vmatprep.subr.mxu0 0.0
        %961 = vmatpush1.msra.mxu0 %v665
        %962 = vmatprep.mubr.f32.mxu0 %v827
        %963 = vmatmul.mubr.f32.gmra.mrb[0].mxu0 %v826
        %v964 = vpop.f32.mrb[0].mxu0
        %v965 = vadd.f32 0.0, %v964
        %v966 = vpop.f32.mrb[0].mxu0
        %967 = vmatprep.mubr.f32.mxu0 %v831
        %968 = vmatmul.mubr.f32.gmra.mrb[0].mxu0 %v830
        %v969 = vpop.f32.mrb[0].mxu0
        %v970 = vadd.f32 0.0, %v969
        %v971 = vpop.f32.mrb[0].mxu0
        %972 = vdwg.mxu0
        %973 = vmatprep.subr.mxu0 0.0
        %974 = vmatpush1.msra.mxu0 %v666
        %975 = vmatprep.subr.mxu0 0.0
        %976 = vmatpush1.msra.mxu0 %v667
        %977 = vmatprep.subr.mxu0 0.0
        %978 = vmatpush1.msra.mxu0 %v668
        %979 = vmatprep.subr.mxu0 0.0
        %980 = vmatpush1.msra.mxu0 %v669
        %981 = vmatprep.subr.mxu0 0.0
        %982 = vmatpush1.msra.mxu0 %v670
        %983 = vmatprep.subr.mxu0 0.0
        %984 = vmatpush1.msra.mxu0 %v671
        %985 = vmatprep.subr.mxu0 0.0
        %986 = vmatpush1.msra.mxu0 %v672
        %987 = vmatprep.subr.mxu0 0.0
        %988 = vmatpush1.msra.mxu0 %v673
        %989 = vmatprep.subr.mxu0 0.0
        %990 = vmatpush1.msra.mxu0 %v674
        %991 = vmatprep.subr.mxu0 0.0
        %992 = vmatpush1.msra.mxu0 %v675
        %993 = vmatprep.subr.mxu0 0.0
        %994 = vmatpush1.msra.mxu0 %v676
        %995 = vmatprep.subr.mxu0 0.0
        %996 = vmatpush1.msra.mxu0 %v677
        %997 = vmatprep.subr.mxu0 0.0
        %998 = vmatpush1.msra.mxu0 %v678
        %999 = vmatprep.subr.mxu0 0.0
        %1000 = vmatpush1.msra.mxu0 %v679
        %1001 = vmatprep.subr.mxu0 0.0
        %1002 = vmatpush1.msra.mxu0 %v680
        %1003 = vmatprep.subr.mxu0 0.0
        %1004 = vmatpush1.msra.mxu0 %v681
        %1005 = vmatprep.subr.mxu0 0.0
        %1006 = vmatpush1.msra.mxu0 %v682
        %1007 = vmatprep.subr.mxu0 0.0
        %1008 = vmatpush1.msra.mxu0 %v683
        %1009 = vmatprep.subr.mxu0 0.0
        %1010 = vmatpush1.msra.mxu0 %v684
        %1011 = vmatprep.subr.mxu0 0.0
        %1012 = vmatpush1.msra.mxu0 %v685
        %1013 = vmatprep.subr.mxu0 0.0
        %1014 = vmatpush1.msra.mxu0 %v686
        %1015 = vmatprep.subr.mxu0 0.0
        %1016 = vmatpush1.msra.mxu0 %v687
        %1017 = vmatprep.subr.mxu0 0.0
        %1018 = vmatpush1.msra.mxu0 %v688
        %1019 = vmatprep.subr.mxu0 0.0
        %1020 = vmatpush1.msra.mxu0 %v689
        %1021 = vmatprep.subr.mxu0 0.0
        %1022 = vmatpush1.msra.mxu0 %v690
        %1023 = vmatprep.subr.mxu0 0.0
        %1024 = vmatpush1.msra.mxu0 %v691
        %1025 = vmatprep.subr.mxu0 0.0
        %1026 = vmatpush1.msra.mxu0 %v692
        %1027 = vmatprep.subr.mxu0 0.0
        %1028 = vmatpush1.msra.mxu0 %v693
        %1029 = vmatprep.subr.mxu0 0.0
        %1030 = vmatpush1.msra.mxu0 %v694
        %1031 = vmatprep.subr.mxu0 0.0
        %1032 = vmatpush1.msra.mxu0 %v695
        %1033 = vmatprep.subr.mxu0 0.0
        %1034 = vmatpush1.msra.mxu0 %v696
        %1035 = vmatprep.subr.mxu0 0.0
        %1036 = vmatpush1.msra.mxu0 %v697
        %1037 = vmatprep.mubr.f32.mxu0 %v829
        %1038 = vmatmul.mubr.f32.gmra.mrb[0].mxu0 %v828
        %v1039 = vpop.f32.mrb[0].mxu0
        %v1040 = vadd.f32 %v965, %v1039
        %v1041 = vpop.f32.mrb[0].mxu0
        %1042 = vmatprep.mubr.f32.mxu0 %v833
        %1043 = vmatmul.mubr.f32.gmra.mrb[0].mxu0 %v832
        %v1044 = vpop.f32.mrb[0].mxu0
        %v1045 = vadd.f32 %v970, %v1044
        %v1046 = vpop.f32.mrb[0].mxu0
        %1047 = vdwg.mxu0
        %vm1048 = vcmask 130048
        %v1049 = vsel %vm1048, %v1040, 0.0
        %1050 = vadd.xlane.f32.xlu0 %v1049
        %v1051 = vpop.xlane.xlu0 %1050
        %v1052 = vsel %vm1048, %v1045, 0.0
        %1053 = vadd.xlane.f32.xlu0 %v1052
        %v1054 = vpop.xlane.xlu0 %1053
        %v1055 = vmul.f32 %v634, %v634
        %v1056 = vmul.f32 %v635, %v635
        %v1057 = vmul.f32 %v636, %v636
        %v1058 = vmul.f32 %v637, %v637
        %v1059 = vmul.f32 %v638, %v638
        %v1060 = vmul.f32 %v639, %v639
        %v1061 = vmul.f32 %v640, %v640
        %v1062 = vmul.f32 %v641, %v641
        %v1063 = vmul.f32 %v642, %v642
        %v1064 = vmul.f32 %v643, %v643
        %v1065 = vmul.f32 %v644, %v644
        %v1066 = vmul.f32 %v645, %v645
        %v1067 = vmul.f32 %v646, %v646
        %v1068 = vmul.f32 %v647, %v647
        %v1069 = vmul.f32 %v648, %v648
        %v1070 = vmul.f32 %v649, %v649
        %v1071 = vmul.f32 %v650, %v650
        %v1072 = vmul.f32 %v651, %v651
        %v1073 = vmul.f32 %v652, %v652
        %v1074 = vmul.f32 %v653, %v653
        %v1075 = vmul.f32 %v654, %v654
        %v1076 = vmul.f32 %v655, %v655
        %v1077 = vmul.f32 %v656, %v656
        %v1078 = vmul.f32 %v657, %v657
        %v1079 = vmul.f32 %v658, %v658
        %v1080 = vmul.f32 %v659, %v659
        %v1081 = vmul.f32 %v660, %v660
        %v1082 = vmul.f32 %v661, %v661
        %v1083 = vmul.f32 %v662, %v662
        %v1084 = vmul.f32 %v663, %v663
        %v1085 = vmul.f32 %v664, %v664
        %v1086 = vmul.f32 %v665, %v665
        %v1087 = vmul.f32 %v666, %v666
        %v1088 = vmul.f32 %v667, %v667
        %v1089 = vmul.f32 %v668, %v668
        %v1090 = vmul.f32 %v669, %v669
        %v1091 = vmul.f32 %v670, %v670
        %v1092 = vmul.f32 %v671, %v671
        %v1093 = vmul.f32 %v672, %v672
        %v1094 = vmul.f32 %v673, %v673
        %v1095 = vmul.f32 %v674, %v674
        %v1096 = vmul.f32 %v675, %v675
        %v1097 = vmul.f32 %v676, %v676
        %v1098 = vmul.f32 %v677, %v677
        %v1099 = vmul.f32 %v678, %v678
        %v1100 = vmul.f32 %v679, %v679
        %v1101 = vmul.f32 %v680, %v680
        %v1102 = vmul.f32 %v681, %v681
        %v1103 = vmul.f32 %v682, %v682
        %v1104 = vmul.f32 %v683, %v683
        %v1105 = vmul.f32 %v684, %v684
        %v1106 = vmul.f32 %v685, %v685
        %v1107 = vmul.f32 %v686, %v686
        %v1108 = vmul.f32 %v687, %v687
        %v1109 = vmul.f32 %v688, %v688
        %v1110 = vmul.f32 %v689, %v689
        %v1111 = vmul.f32 %v690, %v690
        %v1112 = vmul.f32 %v691, %v691
        %v1113 = vmul.f32 %v692, %v692
        %v1114 = vmul.f32 %v693, %v693
        %v1115 = vmul.f32 %v694, %v694
        %v1116 = vmul.f32 %v695, %v695
        %v1117 = vmul.f32 %v696, %v696
        %v1118 = vmul.f32 %v697, %v697
        %1119 = vmatprep.subr.mxu0 0.0
        %1120 = vmatpush1.msra.mxu0 %v1055
        %1121 = vmatprep.subr.mxu0 0.0
        %1122 = vmatpush1.msra.mxu0 %v1056
        %1123 = vmatprep.subr.mxu0 0.0
        %1124 = vmatpush1.msra.mxu0 %v1057
        %1125 = vmatprep.subr.mxu0 0.0
        %1126 = vmatpush1.msra.mxu0 %v1058
        %1127 = vmatprep.subr.mxu0 0.0
        %1128 = vmatpush1.msra.mxu0 %v1059
        %1129 = vmatprep.subr.mxu0 0.0
        %1130 = vmatpush1.msra.mxu0 %v1060
        %1131 = vmatprep.subr.mxu0 0.0
        %1132 = vmatpush1.msra.mxu0 %v1061
        %1133 = vmatprep.subr.mxu0 0.0
        %1134 = vmatpush1.msra.mxu0 %v1062
        %1135 = vmatprep.subr.mxu0 0.0
        %1136 = vmatpush1.msra.mxu0 %v1063
        %1137 = vmatprep.subr.mxu0 0.0
        %1138 = vmatpush1.msra.mxu0 %v1064
        %1139 = vmatprep.subr.mxu0 0.0
        %1140 = vmatpush1.msra.mxu0 %v1065
        %1141 = vmatprep.subr.mxu0 0.0
        %1142 = vmatpush1.msra.mxu0 %v1066
        %1143 = vmatprep.subr.mxu0 0.0
        %1144 = vmatpush1.msra.mxu0 %v1067
        %1145 = vmatprep.subr.mxu0 0.0
        %1146 = vmatpush1.msra.mxu0 %v1068
        %1147 = vmatprep.subr.mxu0 0.0
        %1148 = vmatpush1.msra.mxu0 %v1069
        %1149 = vmatprep.subr.mxu0 0.0
        %1150 = vmatpush1.msra.mxu0 %v1070
        %1151 = vmatprep.subr.mxu0 0.0
        %1152 = vmatpush1.msra.mxu0 %v1071
        %1153 = vmatprep.subr.mxu0 0.0
        %1154 = vmatpush1.msra.mxu0 %v1072
        %1155 = vmatprep.subr.mxu0 0.0
        %1156 = vmatpush1.msra.mxu0 %v1073
        %1157 = vmatprep.subr.mxu0 0.0
        %1158 = vmatpush1.msra.mxu0 %v1074
        %1159 = vmatprep.subr.mxu0 0.0
        %1160 = vmatpush1.msra.mxu0 %v1075
        %1161 = vmatprep.subr.mxu0 0.0
        %1162 = vmatpush1.msra.mxu0 %v1076
        %1163 = vmatprep.subr.mxu0 0.0
        %1164 = vmatpush1.msra.mxu0 %v1077
        %1165 = vmatprep.subr.mxu0 0.0
        %1166 = vmatpush1.msra.mxu0 %v1078
        %1167 = vmatprep.subr.mxu0 0.0
        %1168 = vmatpush1.msra.mxu0 %v1079
        %1169 = vmatprep.subr.mxu0 0.0
        %1170 = vmatpush1.msra.mxu0 %v1080
        %1171 = vmatprep.subr.mxu0 0.0
        %1172 = vmatpush1.msra.mxu0 %v1081
        %1173 = vmatprep.subr.mxu0 0.0
        %1174 = vmatpush1.msra.mxu0 %v1082
        %1175 = vmatprep.subr.mxu0 0.0
        %1176 = vmatpush1.msra.mxu0 %v1083
        %1177 = vmatprep.subr.mxu0 0.0
        %1178 = vmatpush1.msra.mxu0 %v1084
        %1179 = vmatprep.subr.mxu0 0.0
        %1180 = vmatpush1.msra.mxu0 %v1085
        %1181 = vmatprep.subr.mxu0 0.0
        %1182 = vmatpush1.msra.mxu0 %v1086
        %1183 = vmatprep.mubr.f32.mxu0 %v827
        %1184 = vmatmul.mubr.f32.gmra.mrb[0].mxu0 %v826
        %v1185 = vpop.f32.mrb[0].mxu0
        %v1186 = vadd.f32 0.0, %v1185
        %v1187 = vpop.f32.mrb[0].mxu0
        %1188 = vmatprep.mubr.f32.mxu0 %v831
        %1189 = vmatmul.mubr.f32.gmra.mrb[0].mxu0 %v830
        %v1190 = vpop.f32.mrb[0].mxu0
        %v1191 = vadd.f32 0.0, %v1190
        %v1192 = vpop.f32.mrb[0].mxu0
        %1193 = vdwg.mxu0
        %1194 = vmatprep.subr.mxu0 0.0
        %1195 = vmatpush1.msra.mxu0 %v1087
        %1196 = vmatprep.subr.mxu0 0.0
        %1197 = vmatpush1.msra.mxu0 %v1088
        %1198 = vmatprep.subr.mxu0 0.0
        %1199 = vmatpush1.msra.mxu0 %v1089
        %1200 = vmatprep.subr.mxu0 0.0
        %1201 = vmatpush1.msra.mxu0 %v1090
        %1202 = vmatprep.subr.mxu0 0.0
        %1203 = vmatpush1.msra.mxu0 %v1091
        %1204 = vmatprep.subr.mxu0 0.0
        %1205 = vmatpush1.msra.mxu0 %v1092
        %1206 = vmatprep.subr.mxu0 0.0
        %1207 = vmatpush1.msra.mxu0 %v1093
        %1208 = vmatprep.subr.mxu0 0.0
        %1209 = vmatpush1.msra.mxu0 %v1094
        %1210 = vmatprep.subr.mxu0 0.0
        %1211 = vmatpush1.msra.mxu0 %v1095
        %1212 = vmatprep.subr.mxu0 0.0
        %1213 = vmatpush1.msra.mxu0 %v1096
        %1214 = vmatprep.subr.mxu0 0.0
        %1215 = vmatpush1.msra.mxu0 %v1097
        %1216 = vmatprep.subr.mxu0 0.0
        %1217 = vmatpush1.msra.mxu0 %v1098
        %1218 = vmatprep.subr.mxu0 0.0
        %1219 = vmatpush1.msra.mxu0 %v1099
        %1220 = vmatprep.subr.mxu0 0.0
        %1221 = vmatpush1.msra.mxu0 %v1100
        %1222 = vmatprep.subr.mxu0 0.0
        %1223 = vmatpush1.msra.mxu0 %v1101
        %1224 = vmatprep.subr.mxu0 0.0
        %1225 = vmatpush1.msra.mxu0 %v1102
        %1226 = vmatprep.subr.mxu0 0.0
        %1227 = vmatpush1.msra.mxu0 %v1103
        %1228 = vmatprep.subr.mxu0 0.0
        %1229 = vmatpush1.msra.mxu0 %v1104
        %1230 = vmatprep.subr.mxu0 0.0
        %1231 = vmatpush1.msra.mxu0 %v1105
        %1232 = vmatprep.subr.mxu0 0.0
        %1233 = vmatpush1.msra.mxu0 %v1106
        %1234 = vmatprep.subr.mxu0 0.0
        %1235 = vmatpush1.msra.mxu0 %v1107
        %1236 = vmatprep.subr.mxu0 0.0
        %1237 = vmatpush1.msra.mxu0 %v1108
        %1238 = vmatprep.subr.mxu0 0.0
        %1239 = vmatpush1.msra.mxu0 %v1109
        %1240 = vmatprep.subr.mxu0 0.0
        %1241 = vmatpush1.msra.mxu0 %v1110
        %1242 = vmatprep.subr.mxu0 0.0
        %1243 = vmatpush1.msra.mxu0 %v1111
        %1244 = vmatprep.subr.mxu0 0.0
        %1245 = vmatpush1.msra.mxu0 %v1112
        %1246 = vmatprep.subr.mxu0 0.0
        %1247 = vmatpush1.msra.mxu0 %v1113
        %1248 = vmatprep.subr.mxu0 0.0
        %1249 = vmatpush1.msra.mxu0 %v1114
        %1250 = vmatprep.subr.mxu0 0.0
        %1251 = vmatpush1.msra.mxu0 %v1115
        %1252 = vmatprep.subr.mxu0 0.0
        %1253 = vmatpush1.msra.mxu0 %v1116
        %1254 = vmatprep.subr.mxu0 0.0
        %1255 = vmatpush1.msra.mxu0 %v1117
        %1256 = vmatprep.subr.mxu0 0.0
        %1257 = vmatpush1.msra.mxu0 %v1118
        %1258 = vmatprep.mubr.f32.mxu0 %v829
        %1259 = vmatmul.mubr.f32.gmra.mrb[0].mxu0 %v828
        %v1260 = vpop.f32.mrb[0].mxu0
        %v1261 = vadd.f32 %v1186, %v1260
        %v1262 = vpop.f32.mrb[0].mxu0
        %1263 = vmatprep.mubr.f32.mxu0 %v833
        %1264 = vmatmul.mubr.f32.gmra.mrb[0].mxu0 %v832
        %v1265 = vpop.f32.mrb[0].mxu0
        %v1266 = vadd.f32 %v1191, %v1265
        %v1267 = vpop.f32.mrb[0].mxu0
        %1268 = vdwg.mxu0
        %v1269 = vsel %vm1048, %v1261, 0.0
        %1270 = vadd.xlane.f32.xlu0 %v1269
        %v1271 = vpop.xlane.xlu0 %1270
        %v1272 = vsel %vm1048, %v1266, 0.0
        %1273 = vadd.xlane.f32.xlu0 %v1272
        %v1274 = vpop.xlane.xlu0 %1273
        %v1275 = vrcp.pop 512.0
        %v1276 = vmul.f32 %v1051, %v1275
        %v1277 = vmul.f32 %v1054, %v1275
        %v1278 = vmul.f32 %v1271, %v1275
        %v1279 = vmul.f32 %v1274, %v1275
        %v1280 = vmul.f32 %v1276, %v1276
        %v1281 = vmul.f32 %v1277, %v1277
        %v1282 = vsub.f32 %v1278, %v1280
        %v1283 = vsub.f32 %v1279, %v1281
        %v1284 = vadd.f32 %v1282, 1e-05
        %v1285 = vadd.f32 %v1283, 1e-05
        %v1286 = vrsqrt.pop %v1284
        %v1287 = vrsqrt.pop %v1285
        %v1289 = vsel %vm1048, %v834, 0
        %v1292 = vsel %vm1048, %v835, 0
        %v1295 = vsel %vm1048, %v836, 0
        %v1298 = vsel %vm1048, %v837, 0
        %v1301 = vsel %vm1048, %v838, 0
        %v1304 = vsel %vm1048, %v839, 0
        %v1307 = vsel %vm1048, %v840, 0
        %v1310 = vsel %vm1048, %v841, 0
        %v1313 = vsel %vm1048, %v842, 0
        %v1316 = vsel %vm1048, %v843, 0
        %v1319 = vsel %vm1048, %v844, 0
        %v1322 = vsel %vm1048, %v845, 0
        %v1325 = vsel %vm1048, %v846, 0
        %v1328 = vsel %vm1048, %v847, 0
        %v1331 = vsel %vm1048, %v848, 0
        %v1334 = vsel %vm1048, %v849, 0
        %v1337 = vsel %vm1048, %v850, 0
        %v1340 = vsel %vm1048, %v851, 0
        %v1343 = vsel %vm1048, %v852, 0
        %v1346 = vsel %vm1048, %v853, 0
        %v1349 = vsel %vm1048, %v854, 0
        %v1352 = vsel %vm1048, %v855, 0
        %v1355 = vsel %vm1048, %v856, 0
        %v1358 = vsel %vm1048, %v857, 0
        %v1361 = vsel %vm1048, %v858, 0
        %v1364 = vsel %vm1048, %v859, 0
        %v1367 = vsel %vm1048, %v860, 0
        %v1370 = vsel %vm1048, %v861, 0
        %v1373 = vsel %vm1048, %v862, 0
        %v1376 = vsel %vm1048, %v863, 0
        %v1379 = vsel %vm1048, %v864, 0
        %v1382 = vsel %vm1048, %v865, 0
        %v1385 = vsel %vm1048, %v866, 0
        %v1388 = vsel %vm1048, %v867, 0
        %v1391 = vsel %vm1048, %v868, 0
        %v1394 = vsel %vm1048, %v869, 0
        %v1397 = vsel %vm1048, %v870, 0
        %v1400 = vsel %vm1048, %v871, 0
        %v1403 = vsel %vm1048, %v872, 0
        %v1406 = vsel %vm1048, %v873, 0
        %v1409 = vsel %vm1048, %v874, 0
        %v1412 = vsel %vm1048, %v875, 0
        %v1415 = vsel %vm1048, %v876, 0
        %v1418 = vsel %vm1048, %v877, 0
        %v1421 = vsel %vm1048, %v878, 0
        %v1424 = vsel %vm1048, %v879, 0
        %v1427 = vsel %vm1048, %v880, 0
        %v1430 = vsel %vm1048, %v881, 0
        %v1433 = vsel %vm1048, %v882, 0
        %v1436 = vsel %vm1048, %v883, 0
        %v1439 = vsel %vm1048, %v884, 0
        %v1442 = vsel %vm1048, %v885, 0
        %v1445 = vsel %vm1048, %v886, 0
        %v1448 = vsel %vm1048, %v887, 0
        %v1451 = vsel %vm1048, %v888, 0
        %v1454 = vsel %vm1048, %v889, 0
        %v1457 = vsel %vm1048, %v890, 0
        %v1460 = vsel %vm1048, %v891, 0
        %v1463 = vsel %vm1048, %v892, 0
        %v1466 = vsel %vm1048, %v893, 0
        %v1469 = vsel %vm1048, %v894, 0
        %v1472 = vsel %vm1048, %v895, 0
        %v1475 = vsel %vm1048, %v896, 0
        %v1478 = vsel %vm1048, %v897, 0
        %1480 = vmatprep.subr.mxu0 0.0
        %1481 = vmatpush1.msra.mxu0 %v1276
        %1482 = vmatprep.subr.mxu0 0.0
        %1483 = vmatpush1.msra.mxu0 %v1277
        %1484 = vmatprep.subr.mxu0 0.0
        %1485 = vmatpush1.msra.mxu0 0.0
        %1486 = vmatprep.subr.mxu0 0.0
        %1487 = vmatpush1.msra.mxu0 0.0
        %1488 = vmatprep.subr.mxu0 0.0
        %1489 = vmatpush1.msra.mxu0 0.0
        %1490 = vmatprep.subr.mxu0 0.0
        %1491 = vmatpush1.msra.mxu0 0.0
        %1492 = vmatprep.subr.mxu0 0.0
        %1493 = vmatpush1.msra.mxu0 0.0
        %1494 = vmatprep.subr.mxu0 0.0
        %1495 = vmatpush1.msra.mxu0 0.0
        %1496 = vmatprep.subr.mxu0 0.0
        %1497 = vmatpush1.msra.mxu0 0.0
        %1498 = vmatprep.subr.mxu0 0.0
        %1499 = vmatpush1.msra.mxu0 0.0
        %1500 = vmatprep.subr.mxu0 0.0
        %1501 = vmatpush1.msra.mxu0 0.0
        %1502 = vmatprep.subr.mxu0 0.0
        %1503 = vmatpush1.msra.mxu0 0.0
        %1504 = vmatprep.subr.mxu0 0.0
        %1505 = vmatpush1.msra.mxu0 0.0
        %1506 = vmatprep.subr.mxu0 0.0
        %1507 = vmatpush1.msra.mxu0 0.0
        %1508 = vmatprep.subr.mxu0 0.0
        %1509 = vmatpush1.msra.mxu0 0.0
        %1510 = vmatprep.subr.mxu0 0.0
        %1511 = vmatpush1.msra.mxu0 0.0
        %1512 = vmatprep.subr.mxu0 0.0
        %1513 = vmatpush1.msra.mxu0 0.0
        %1514 = vmatprep.subr.mxu0 0.0
        %1515 = vmatpush1.msra.mxu0 0.0
        %1516 = vmatprep.subr.mxu0 0.0
        %1517 = vmatpush1.msra.mxu0 0.0
        %1518 = vmatprep.subr.mxu0 0.0
        %1519 = vmatpush1.msra.mxu0 0.0
        %1520 = vmatprep.subr.mxu0 0.0
        %1521 = vmatpush1.msra.mxu0 0.0
        %1522 = vmatprep.subr.mxu0 0.0
        %1523 = vmatpush1.msra.mxu0 0.0
        %1524 = vmatprep.subr.mxu0 0.0
        %1525 = vmatpush1.msra.mxu0 0.0
        %1526 = vmatprep.subr.mxu0 0.0
        %1527 = vmatpush1.msra.mxu0 0.0
        %1528 = vmatprep.subr.mxu0 0.0
        %1529 = vmatpush1.msra.mxu0 0.0
        %1530 = vmatprep.subr.mxu0 0.0
        %1531 = vmatpush1.msra.mxu0 0.0
        %1532 = vmatprep.subr.mxu0 0.0
        %1533 = vmatpush1.msra.mxu0 0.0
        %1534 = vmatprep.subr.mxu0 0.0
        %1535 = vmatpush1.msra.mxu0 0.0
        %1536 = vmatprep.subr.mxu0 0.0
        %1537 = vmatpush1.msra.mxu0 0.0
        %1538 = vmatprep.subr.mxu0 0.0
        %1539 = vmatpush1.msra.mxu0 0.0
        %1540 = vmatprep.subr.mxu0 0.0
        %1541 = vmatpush1.msra.mxu0 0.0
        %1542 = vmatprep.subr.mxu0 0.0
        %1543 = vmatpush1.msra.mxu0 0.0
        %1544 = vmatprep.mubr.f32.mxu0 0.0
        %1545 = vmatmul.mubr.f32.gmra.mrb[0].mxu0 %v1289
        %v1546 = vpop.f32.mrb[0].mxu0
        %v1547 = vadd.f32 0.0, %v1546
        %v1548 = vpop.f32.mrb[0].mxu0
        %1549 = vmatprep.mubr.f32.mxu0 0.0
        %1550 = vmatmul.mubr.f32.gmra.mrb[0].mxu0 %v1292
        %v1551 = vpop.f32.mrb[0].mxu0
        %v1552 = vadd.f32 0.0, %v1551
        %v1553 = vpop.f32.mrb[0].mxu0
        %1554 = vmatprep.mubr.f32.mxu0 0.0
        %1555 = vmatmul.mubr.f32.gmra.mrb[0].mxu0 %v1295
        %v1556 = vpop.f32.mrb[0].mxu0
        %v1557 = vadd.f32 0.0, %v1556
        %v1558 = vpop.f32.mrb[0].mxu0
        %1559 = vmatprep.mubr.f32.mxu0 0.0
        %1560 = vmatmul.mubr.f32.gmra.mrb[0].mxu0 %v1298
        %v1561 = vpop.f32.mrb[0].mxu0
        %v1562 = vadd.f32 0.0, %v1561
        %v1563 = vpop.f32.mrb[0].mxu0
        %1564 = vmatprep.mubr.f32.mxu0 0.0
        %1565 = vmatmul.mubr.f32.gmra.mrb[0].mxu0 %v1301
        %v1566 = vpop.f32.mrb[0].mxu0
        %v1567 = vadd.f32 0.0, %v1566
        %v1568 = vpop.f32.mrb[0].mxu0
        %1569 = vmatprep.mubr.f32.mxu0 0.0
        %1570 = vmatmul.mubr.f32.gmra.mrb[0].mxu0 %v1304
        %v1571 = vpop.f32.mrb[0].mxu0
        %v1572 = vadd.f32 0.0, %v1571
        %v1573 = vpop.f32.mrb[0].mxu0
        %1574 = vmatprep.mubr.f32.mxu0 0.0
        %1575 = vmatmul.mubr.f32.gmra.mrb[0].mxu0 %v1307
        %v1576 = vpop.f32.mrb[0].mxu0
        %v1577 = vadd.f32 0.0, %v1576
        %v1578 = vpop.f32.mrb[0].mxu0
        %1579 = vmatprep.mubr.f32.mxu0 0.0
        %1580 = vmatmul.mubr.f32.gmra.mrb[0].mxu0 %v1310
        %v1581 = vpop.f32.mrb[0].mxu0
        %v1582 = vadd.f32 0.0, %v1581
        %v1583 = vpop.f32.mrb[0].mxu0
        %1584 = vmatprep.mubr.f32.mxu0 0.0
        %1585 = vmatmul.mubr.f32.gmra.mrb[0].mxu0 %v1313
        %v1586 = vpop.f32.mrb[0].mxu0
        %v1587 = vadd.f32 0.0, %v1586
        %v1588 = vpop.f32.mrb[0].mxu0
        %1589 = vmatprep.mubr.f32.mxu0 0.0
        %1590 = vmatmul.mubr.f32.gmra.mrb[0].mxu0 %v1316
        %v1591 = vpop.f32.mrb[0].mxu0
        %v1592 = vadd.f32 0.0, %v1591
        %v1593 = vpop.f32.mrb[0].mxu0
        %1594 = vmatprep.mubr.f32.mxu0 0.0
        %1595 = vmatmul.mubr.f32.gmra.mrb[0].mxu0 %v1319
        %v1596 = vpop.f32.mrb[0].mxu0
        %v1597 = vadd.f32 0.0, %v1596
        %v1598 = vpop.f32.mrb[0].mxu0
        %1599 = vmatprep.mubr.f32.mxu0 0.0
        %1600 = vmatmul.mubr.f32.gmra.mrb[0].mxu0 %v1322
        %v1601 = vpop.f32.mrb[0].mxu0
        %v1602 = vadd.f32 0.0, %v1601
        %v1603 = vpop.f32.mrb[0].mxu0
        %1604 = vmatprep.mubr.f32.mxu0 0.0
        %1605 = vmatmul.mubr.f32.gmra.mrb[0].mxu0 %v1325
        %v1606 = vpop.f32.mrb[0].mxu0
        %v1607 = vadd.f32 0.0, %v1606
        %v1608 = vpop.f32.mrb[0].mxu0
        %1609 = vmatprep.mubr.f32.mxu0 0.0
        %1610 = vmatmul.mubr.f32.gmra.mrb[0].mxu0 %v1328
        %v1611 = vpop.f32.mrb[0].mxu0
        %v1612 = vadd.f32 0.0, %v1611
        %v1613 = vpop.f32.mrb[0].mxu0
        %1614 = vmatprep.mubr.f32.mxu0 0.0
        %1615 = vmatmul.mubr.f32.gmra.mrb[0].mxu0 %v1331
        %v1616 = vpop.f32.mrb[0].mxu0
        %v1617 = vadd.f32 0.0, %v1616
        %v1618 = vpop.f32.mrb[0].mxu0
        %1619 = vmatprep.mubr.f32.mxu0 0.0
        %1620 = vmatmul.mubr.f32.gmra.mrb[0].mxu0 %v1334
        %v1621 = vpop.f32.mrb[0].mxu0
        %v1622 = vadd.f32 0.0, %v1621
        %v1623 = vpop.f32.mrb[0].mxu0
        %1624 = vmatprep.mubr.f32.mxu0 0.0
        %1625 = vmatmul.mubr.f32.gmra.mrb[0].mxu0 %v1337
        %v1626 = vpop.f32.mrb[0].mxu0
        %v1627 = vadd.f32 0.0, %v1626
        %v1628 = vpop.f32.mrb[0].mxu0
        %1629 = vmatprep.mubr.f32.mxu0 0.0
        %1630 = vmatmul.mubr.f32.gmra.mrb[0].mxu0 %v1340
        %v1631 = vpop.f32.mrb[0].mxu0
        %v1632 = vadd.f32 0.0, %v1631
        %v1633 = vpop.f32.mrb[0].mxu0
        %1634 = vmatprep.mubr.f32.mxu0 0.0
        %1635 = vmatmul.mubr.f32.gmra.mrb[0].mxu0 %v1343
        %v1636 = vpop.f32.mrb[0].mxu0
        %v1637 = vadd.f32 0.0, %v1636
        %v1638 = vpop.f32.mrb[0].mxu0
        %1639 = vmatprep.mubr.f32.mxu0 0.0
        %1640 = vmatmul.mubr.f32.gmra.mrb[0].mxu0 %v1346
        %v1641 = vpop.f32.mrb[0].mxu0
        %v1642 = vadd.f32 0.0, %v1641
        %v1643 = vpop.f32.mrb[0].mxu0
        %1644 = vmatprep.mubr.f32.mxu0 0.0
        %1645 = vmatmul.mubr.f32.gmra.mrb[0].mxu0 %v1349
        %v1646 = vpop.f32.mrb[0].mxu0
        %v1647 = vadd.f32 0.0, %v1646
        %v1648 = vpop.f32.mrb[0].mxu0
        %1649 = vmatprep.mubr.f32.mxu0 0.0
        %1650 = vmatmul.mubr.f32.gmra.mrb[0].mxu0 %v1352
        %v1651 = vpop.f32.mrb[0].mxu0
        %v1652 = vadd.f32 0.0, %v1651
        %v1653 = vpop.f32.mrb[0].mxu0
        %1654 = vmatprep.mubr.f32.mxu0 0.0
        %1655 = vmatmul.mubr.f32.gmra.mrb[0].mxu0 %v1355
        %v1656 = vpop.f32.mrb[0].mxu0
        %v1657 = vadd.f32 0.0, %v1656
        %v1658 = vpop.f32.mrb[0].mxu0
        %1659 = vmatprep.mubr.f32.mxu0 0.0
        %1660 = vmatmul.mubr.f32.gmra.mrb[0].mxu0 %v1358
        %v1661 = vpop.f32.mrb[0].mxu0
        %v1662 = vadd.f32 0.0, %v1661
        %v1663 = vpop.f32.mrb[0].mxu0
        %1664 = vmatprep.mubr.f32.mxu0 0.0
        %1665 = vmatmul.mubr.f32.gmra.mrb[0].mxu0 %v1361
        %v1666 = vpop.f32.mrb[0].mxu0
        %v1667 = vadd.f32 0.0, %v1666
        %v1668 = vpop.f32.mrb[0].mxu0
        %1669 = vmatprep.mubr.f32.mxu0 0.0
        %1670 = vmatmul.mubr.f32.gmra.mrb[0].mxu0 %v1364
        %v1671 = vpop.f32.mrb[0].mxu0
        %v1672 = vadd.f32 0.0, %v1671
        %v1673 = vpop.f32.mrb[0].mxu0
        %1674 = vmatprep.mubr.f32.mxu0 0.0
        %1675 = vmatmul.mubr.f32.gmra.mrb[0].mxu0 %v1367
        %v1676 = vpop.f32.mrb[0].mxu0
        %v1677 = vadd.f32 0.0, %v1676
        %v1678 = vpop.f32.mrb[0].mxu0
        %1679 = vmatprep.mubr.f32.mxu0 0.0
        %1680 = vmatmul.mubr.f32.gmra.mrb[0].mxu0 %v1370
        %v1681 = vpop.f32.mrb[0].mxu0
        %v1682 = vadd.f32 0.0, %v1681
        %v1683 = vpop.f32.mrb[0].mxu0
        %1684 = vmatprep.mubr.f32.mxu0 0.0
        %1685 = vmatmul.mubr.f32.gmra.mrb[0].mxu0 %v1373
        %v1686 = vpop.f32.mrb[0].mxu0
        %v1687 = vadd.f32 0.0, %v1686
        %v1688 = vpop.f32.mrb[0].mxu0
        %1689 = vmatprep.mubr.f32.mxu0 0.0
        %1690 = vmatmul.mubr.f32.gmra.mrb[0].mxu0 %v1376
        %v1691 = vpop.f32.mrb[0].mxu0
        %v1692 = vadd.f32 0.0, %v1691
        %v1693 = vpop.f32.mrb[0].mxu0
        %1694 = vmatprep.mubr.f32.mxu0 0.0
        %1695 = vmatmul.mubr.f32.gmra.mrb[0].mxu0 %v1379
        %v1696 = vpop.f32.mrb[0].mxu0
        %v1697 = vadd.f32 0.0, %v1696
        %v1698 = vpop.f32.mrb[0].mxu0
        %1699 = vmatprep.mubr.f32.mxu0 0.0
        %1700 = vmatmul.mubr.f32.gmra.mrb[0].mxu0 %v1382
        %v1701 = vpop.f32.mrb[0].mxu0
        %v1702 = vadd.f32 0.0, %v1701
        %v1703 = vpop.f32.mrb[0].mxu0
        %1704 = vmatprep.mubr.f32.mxu0 0.0
        %1705 = vmatmul.mubr.f32.gmra.mrb[0].mxu0 %v1385
        %v1706 = vpop.f32.mrb[0].mxu0
        %v1707 = vadd.f32 0.0, %v1706
        %v1708 = vpop.f32.mrb[0].mxu0
        %1709 = vmatprep.mubr.f32.mxu0 0.0
        %1710 = vmatmul.mubr.f32.gmra.mrb[0].mxu0 %v1388
        %v1711 = vpop.f32.mrb[0].mxu0
        %v1712 = vadd.f32 0.0, %v1711
        %v1713 = vpop.f32.mrb[0].mxu0
        %1714 = vmatprep.mubr.f32.mxu0 0.0
        %1715 = vmatmul.mubr.f32.gmra.mrb[0].mxu0 %v1391
        %v1716 = vpop.f32.mrb[0].mxu0
        %v1717 = vadd.f32 0.0, %v1716
        %v1718 = vpop.f32.mrb[0].mxu0
        %1719 = vmatprep.mubr.f32.mxu0 0.0
        %1720 = vmatmul.mubr.f32.gmra.mrb[0].mxu0 %v1394
        %v1721 = vpop.f32.mrb[0].mxu0
        %v1722 = vadd.f32 0.0, %v1721
        %v1723 = vpop.f32.mrb[0].mxu0
        %1724 = vmatprep.mubr.f32.mxu0 0.0
        %1725 = vmatmul.mubr.f32.gmra.mrb[0].mxu0 %v1397
        %v1726 = vpop.f32.mrb[0].mxu0
        %v1727 = vadd.f32 0.0, %v1726
        %v1728 = vpop.f32.mrb[0].mxu0
        %1729 = vmatprep.mubr.f32.mxu0 0.0
        %1730 = vmatmul.mubr.f32.gmra.mrb[0].mxu0 %v1400
        %v1731 = vpop.f32.mrb[0].mxu0
        %v1732 = vadd.f32 0.0, %v1731
        %v1733 = vpop.f32.mrb[0].mxu0
        %1734 = vmatprep.mubr.f32.mxu0 0.0
        %1735 = vmatmul.mubr.f32.gmra.mrb[0].mxu0 %v1403
        %v1736 = vpop.f32.mrb[0].mxu0
        %v1737 = vadd.f32 0.0, %v1736
        %v1738 = vpop.f32.mrb[0].mxu0
        %1739 = vmatprep.mubr.f32.mxu0 0.0
        %1740 = vmatmul.mubr.f32.gmra.mrb[0].mxu0 %v1406
        %v1741 = vpop.f32.mrb[0].mxu0
        %v1742 = vadd.f32 0.0, %v1741
        %v1743 = vpop.f32.mrb[0].mxu0
        %1744 = vmatprep.mubr.f32.mxu0 0.0
        %1745 = vmatmul.mubr.f32.gmra.mrb[0].mxu0 %v1409
        %v1746 = vpop.f32.mrb[0].mxu0
        %v1747 = vadd.f32 0.0, %v1746
        %v1748 = vpop.f32.mrb[0].mxu0
        %1749 = vmatprep.mubr.f32.mxu0 0.0
        %1750 = vmatmul.mubr.f32.gmra.mrb[0].mxu0 %v1412
        %v1751 = vpop.f32.mrb[0].mxu0
        %v1752 = vadd.f32 0.0, %v1751
        %v1753 = vpop.f32.mrb[0].mxu0
        %1754 = vmatprep.mubr.f32.mxu0 0.0
        %1755 = vmatmul.mubr.f32.gmra.mrb[0].mxu0 %v1415
        %v1756 = vpop.f32.mrb[0].mxu0
        %v1757 = vadd.f32 0.0, %v1756
        %v1758 = vpop.f32.mrb[0].mxu0
        %1759 = vmatprep.mubr.f32.mxu0 0.0
        %1760 = vmatmul.mubr.f32.gmra.mrb[0].mxu0 %v1418
        %v1761 = vpop.f32.mrb[0].mxu0
        %v1762 = vadd.f32 0.0, %v1761
        %v1763 = vpop.f32.mrb[0].mxu0
        %1764 = vmatprep.mubr.f32.mxu0 0.0
        %1765 = vmatmul.mubr.f32.gmra.mrb[0].mxu0 %v1421
        %v1766 = vpop.f32.mrb[0].mxu0
        %v1767 = vadd.f32 0.0, %v1766
        %v1768 = vpop.f32.mrb[0].mxu0
        %1769 = vmatprep.mubr.f32.mxu0 0.0
        %1770 = vmatmul.mubr.f32.gmra.mrb[0].mxu0 %v1424
        %v1771 = vpop.f32.mrb[0].mxu0
        %v1772 = vadd.f32 0.0, %v1771
        %v1773 = vpop.f32.mrb[0].mxu0
        %1774 = vmatprep.mubr.f32.mxu0 0.0
        %1775 = vmatmul.mubr.f32.gmra.mrb[0].mxu0 %v1427
        %v1776 = vpop.f32.mrb[0].mxu0
        %v1777 = vadd.f32 0.0, %v1776
        %v1778 = vpop.f32.mrb[0].mxu0
        %1779 = vmatprep.mubr.f32.mxu0 0.0
        %1780 = vmatmul.mubr.f32.gmra.mrb[0].mxu0 %v1430
        %v1781 = vpop.f32.mrb[0].mxu0
        %v1782 = vadd.f32 0.0, %v1781
        %v1783 = vpop.f32.mrb[0].mxu0
        %1784 = vmatprep.mubr.f32.mxu0 0.0
        %1785 = vmatmul.mubr.f32.gmra.mrb[0].mxu0 %v1433
        %v1786 = vpop.f32.mrb[0].mxu0
        %v1787 = vadd.f32 0.0, %v1786
        %v1788 = vpop.f32.mrb[0].mxu0
        %1789 = vmatprep.mubr.f32.mxu0 0.0
        %1790 = vmatmul.mubr.f32.gmra.mrb[0].mxu0 %v1436
        %v1791 = vpop.f32.mrb[0].mxu0
        %v1792 = vadd.f32 0.0, %v1791
        %v1793 = vpop.f32.mrb[0].mxu0
        %1794 = vmatprep.mubr.f32.mxu0 0.0
        %1795 = vmatmul.mubr.f32.gmra.mrb[0].mxu0 %v1439
        %v1796 = vpop.f32.mrb[0].mxu0
        %v1797 = vadd.f32 0.0, %v1796
        %v1798 = vpop.f32.mrb[0].mxu0
        %1799 = vmatprep.mubr.f32.mxu0 0.0
        %1800 = vmatmul.mubr.f32.gmra.mrb[0].mxu0 %v1442
        %v1801 = vpop.f32.mrb[0].mxu0
        %v1802 = vadd.f32 0.0, %v1801
        %v1803 = vpop.f32.mrb[0].mxu0
        %1804 = vmatprep.mubr.f32.mxu0 0.0
        %1805 = vmatmul.mubr.f32.gmra.mrb[0].mxu0 %v1445
        %v1806 = vpop.f32.mrb[0].mxu0
        %v1807 = vadd.f32 0.0, %v1806
        %v1808 = vpop.f32.mrb[0].mxu0
        %1809 = vmatprep.mubr.f32.mxu0 0.0
        %1810 = vmatmul.mubr.f32.gmra.mrb[0].mxu0 %v1448
        %v1811 = vpop.f32.mrb[0].mxu0
        %v1812 = vadd.f32 0.0, %v1811
        %v1813 = vpop.f32.mrb[0].mxu0
        %1814 = vmatprep.mubr.f32.mxu0 0.0
        %1815 = vmatmul.mubr.f32.gmra.mrb[0].mxu0 %v1451
        %v1816 = vpop.f32.mrb[0].mxu0
        %v1817 = vadd.f32 0.0, %v1816
        %v1818 = vpop.f32.mrb[0].mxu0
        %1819 = vmatprep.mubr.f32.mxu0 0.0
        %1820 = vmatmul.mubr.f32.gmra.mrb[0].mxu0 %v1454
        %v1821 = vpop.f32.mrb[0].mxu0
        %v1822 = vadd.f32 0.0, %v1821
        %v1823 = vpop.f32.mrb[0].mxu0
        %1824 = vmatprep.mubr.f32.mxu0 0.0
        %1825 = vmatmul.mubr.f32.gmra.mrb[0].mxu0 %v1457
        %v1826 = vpop.f32.mrb[0].mxu0
        %v1827 = vadd.f32 0.0, %v1826
        %v1828 = vpop.f32.mrb[0].mxu0
        %1829 = vmatprep.mubr.f32.mxu0 0.0
        %1830 = vmatmul.mubr.f32.gmra.mrb[0].mxu0 %v1460
        %v1831 = vpop.f32.mrb[0].mxu0
        %v1832 = vadd.f32 0.0, %v1831
        %v1833 = vpop.f32.mrb[0].mxu0
        %1834 = vmatprep.mubr.f32.mxu0 0.0
        %1835 = vmatmul.mubr.f32.gmra.mrb[0].mxu0 %v1463
        %v1836 = vpop.f32.mrb[0].mxu0
        %v1837 = vadd.f32 0.0, %v1836
        %v1838 = vpop.f32.mrb[0].mxu0
        %1839 = vmatprep.mubr.f32.mxu0 0.0
        %1840 = vmatmul.mubr.f32.gmra.mrb[0].mxu0 %v1466
        %v1841 = vpop.f32.mrb[0].mxu0
        %v1842 = vadd.f32 0.0, %v1841
        %v1843 = vpop.f32.mrb[0].mxu0
        %1844 = vmatprep.mubr.f32.mxu0 0.0
        %1845 = vmatmul.mubr.f32.gmra.mrb[0].mxu0 %v1469
        %v1846 = vpop.f32.mrb[0].mxu0
        %v1847 = vadd.f32 0.0, %v1846
        %v1848 = vpop.f32.mrb[0].mxu0
        %1849 = vmatprep.mubr.f32.mxu0 0.0
        %1850 = vmatmul.mubr.f32.gmra.mrb[0].mxu0 %v1472
        %v1851 = vpop.f32.mrb[0].mxu0
        %v1852 = vadd.f32 0.0, %v1851
        %v1853 = vpop.f32.mrb[0].mxu0
        %1854 = vmatprep.mubr.f32.mxu0 0.0
        %1855 = vmatmul.mubr.f32.gmra.mrb[0].mxu0 %v1475
        %v1856 = vpop.f32.mrb[0].mxu0
        %v1857 = vadd.f32 0.0, %v1856
        %v1858 = vpop.f32.mrb[0].mxu0
        %1859 = vmatprep.mubr.f32.mxu0 0.0
        %1860 = vmatmul.mubr.f32.gmra.mrb[0].mxu0 %v1478
        %v1861 = vpop.f32.mrb[0].mxu0
        %v1862 = vadd.f32 0.0, %v1861
        %v1863 = vpop.f32.mrb[0].mxu0
        %1864 = vdwg.mxu0
        %1865 = vmatprep.subr.mxu0 0.0
        %1866 = vmatpush1.msra.mxu0 %v1286
        %1867 = vmatprep.subr.mxu0 0.0
        %1868 = vmatpush1.msra.mxu0 %v1287
        %1869 = vmatprep.subr.mxu0 0.0
        %1870 = vmatpush1.msra.mxu0 0.0
        %1871 = vmatprep.subr.mxu0 0.0
        %1872 = vmatpush1.msra.mxu0 0.0
        %1873 = vmatprep.subr.mxu0 0.0
        %1874 = vmatpush1.msra.mxu0 0.0
        %1875 = vmatprep.subr.mxu0 0.0
        %1876 = vmatpush1.msra.mxu0 0.0
        %1877 = vmatprep.subr.mxu0 0.0
        %1878 = vmatpush1.msra.mxu0 0.0
        %1879 = vmatprep.subr.mxu0 0.0
        %1880 = vmatpush1.msra.mxu0 0.0
        %1881 = vmatprep.subr.mxu0 0.0
        %1882 = vmatpush1.msra.mxu0 0.0
        %1883 = vmatprep.subr.mxu0 0.0
        %1884 = vmatpush1.msra.mxu0 0.0
        %1885 = vmatprep.subr.mxu0 0.0
        %1886 = vmatpush1.msra.mxu0 0.0
        %1887 = vmatprep.subr.mxu0 0.0
        %1888 = vmatpush1.msra.mxu0 0.0
        %1889 = vmatprep.subr.mxu0 0.0
        %1890 = vmatpush1.msra.mxu0 0.0
        %1891 = vmatprep.subr.mxu0 0.0
        %1892 = vmatpush1.msra.mxu0 0.0
        %1893 = vmatprep.subr.mxu0 0.0
        %1894 = vmatpush1.msra.mxu0 0.0
        %1895 = vmatprep.subr.mxu0 0.0
        %1896 = vmatpush1.msra.mxu0 0.0
        %1897 = vmatprep.subr.mxu0 0.0
        %1898 = vmatpush1.msra.mxu0 0.0
        %1899 = vmatprep.subr.mxu0 0.0
        %1900 = vmatpush1.msra.mxu0 0.0
        %1901 = vmatprep.subr.mxu0 0.0
        %1902 = vmatpush1.msra.mxu0 0.0
        %1903 = vmatprep.subr.mxu0 0.0
        %1904 = vmatpush1.msra.mxu0 0.0
        %1905 = vmatprep.subr.mxu0 0.0
        %1906 = vmatpush1.msra.mxu0 0.0
        %1907 = vmatprep.subr.mxu0 0.0
        %1908 = vmatpush1.msra.mxu0 0.0
        %1909 = vmatprep.subr.mxu0 0.0
        %1910 = vmatpush1.msra.mxu0 0.0
        %1911 = vmatprep.subr.mxu0 0.0
        %1912 = vmatpush1.msra.mxu0 0.0
        %1913 = vmatprep.subr.mxu0 0.0
        %1914 = vmatpush1.msra.mxu0 0.0
        %1915 = vmatprep.subr.mxu0 0.0
        %1916 = vmatpush1.msra.mxu0 0.0
        %1917 = vmatprep.subr.mxu0 0.0
        %1918 = vmatpush1.msra.mxu0 0.0
        %1919 = vmatprep.subr.mxu0 0.0
        %1920 = vmatpush1.msra.mxu0 0.0
        %1921 = vmatprep.subr.mxu0 0.0
        %1922 = vmatpush1.msra.mxu0 0.0
        %1923 = vmatprep.subr.mxu0 0.0
        %1924 = vmatpush1.msra.mxu0 0.0
        %1925 = vmatprep.subr.mxu0 0.0
        %1926 = vmatpush1.msra.mxu0 0.0
        %1927 = vmatprep.subr.mxu0 0.0
        %1928 = vmatpush1.msra.mxu0 0.0
        %1929 = vmatprep.mubr.f32.mxu0 0.0
        %1930 = vmatmul.mubr.f32.gmra.mrb[0].mxu0 %v1289
        %v1931 = vpop.f32.mrb[0].mxu0
        %v1932 = vadd.f32 0.0, %v1931
        %v1933 = vpop.f32.mrb[0].mxu0
        %1934 = vmatprep.mubr.f32.mxu0 0.0
        %1935 = vmatmul.mubr.f32.gmra.mrb[0].mxu0 %v1292
        %v1936 = vpop.f32.mrb[0].mxu0
        %v1937 = vadd.f32 0.0, %v1936
        %v1938 = vpop.f32.mrb[0].mxu0
        %1939 = vmatprep.mubr.f32.mxu0 0.0
        %1940 = vmatmul.mubr.f32.gmra.mrb[0].mxu0 %v1295
        %v1941 = vpop.f32.mrb[0].mxu0
        %v1942 = vadd.f32 0.0, %v1941
        %v1943 = vpop.f32.mrb[0].mxu0
        %1944 = vmatprep.mubr.f32.mxu0 0.0
        %1945 = vmatmul.mubr.f32.gmra.mrb[0].mxu0 %v1298
        %v1946 = vpop.f32.mrb[0].mxu0
        %v1947 = vadd.f32 0.0, %v1946
        %v1948 = vpop.f32.mrb[0].mxu0
        %1949 = vmatprep.mubr.f32.mxu0 0.0
        %1950 = vmatmul.mubr.f32.gmra.mrb[0].mxu0 %v1301
        %v1951 = vpop.f32.mrb[0].mxu0
        %v1952 = vadd.f32 0.0, %v1951
        %v1953 = vpop.f32.mrb[0].mxu0
        %1954 = vmatprep.mubr.f32.mxu0 0.0
        %1955 = vmatmul.mubr.f32.gmra.mrb[0].mxu0 %v1304
        %v1956 = vpop.f32.mrb[0].mxu0
        %v1957 = vadd.f32 0.0, %v1956
        %v1958 = vpop.f32.mrb[0].mxu0
        %1959 = vmatprep.mubr.f32.mxu0 0.0
        %1960 = vmatmul.mubr.f32.gmra.mrb[0].mxu0 %v1307
        %v1961 = vpop.f32.mrb[0].mxu0
        %v1962 = vadd.f32 0.0, %v1961
        %v1963 = vpop.f32.mrb[0].mxu0
        %1964 = vmatprep.mubr.f32.mxu0 0.0
        %1965 = vmatmul.mubr.f32.gmra.mrb[0].mxu0 %v1310
        %v1966 = vpop.f32.mrb[0].mxu0
        %v1967 = vadd.f32 0.0, %v1966
        %v1968 = vpop.f32.mrb[0].mxu0
        %1969 = vmatprep.mubr.f32.mxu0 0.0
        %1970 = vmatmul.mubr.f32.gmra.mrb[0].mxu0 %v1313
        %v1971 = vpop.f32.mrb[0].mxu0
        %v1972 = vadd.f32 0.0, %v1971
        %v1973 = vpop.f32.mrb[0].mxu0
        %1974 = vmatprep.mubr.f32.mxu0 0.0
        %1975 = vmatmul.mubr.f32.gmra.mrb[0].mxu0 %v1316
        %v1976 = vpop.f32.mrb[0].mxu0
        %v1977 = vadd.f32 0.0, %v1976
        %v1978 = vpop.f32.mrb[0].mxu0
        %1979 = vmatprep.mubr.f32.mxu0 0.0
        %1980 = vmatmul.mubr.f32.gmra.mrb[0].mxu0 %v1319
        %v1981 = vpop.f32.mrb[0].mxu0
        %v1982 = vadd.f32 0.0, %v1981
        %v1983 = vpop.f32.mrb[0].mxu0
        %1984 = vmatprep.mubr.f32.mxu0 0.0
        %1985 = vmatmul.mubr.f32.gmra.mrb[0].mxu0 %v1322
        %v1986 = vpop.f32.mrb[0].mxu0
        %v1987 = vadd.f32 0.0, %v1986
        %v1988 = vpop.f32.mrb[0].mxu0
        %1989 = vmatprep.mubr.f32.mxu0 0.0
        %1990 = vmatmul.mubr.f32.gmra.mrb[0].mxu0 %v1325
        %v1991 = vpop.f32.mrb[0].mxu0
        %v1992 = vadd.f32 0.0, %v1991
        %v1993 = vpop.f32.mrb[0].mxu0
        %1994 = vmatprep.mubr.f32.mxu0 0.0
        %1995 = vmatmul.mubr.f32.gmra.mrb[0].mxu0 %v1328
        %v1996 = vpop.f32.mrb[0].mxu0
        %v1997 = vadd.f32 0.0, %v1996
        %v1998 = vpop.f32.mrb[0].mxu0
        %1999 = vmatprep.mubr.f32.mxu0 0.0
        %2000 = vmatmul.mubr.f32.gmra.mrb[0].mxu0 %v1331
        %v2001 = vpop.f32.mrb[0].mxu0
        %v2002 = vadd.f32 0.0, %v2001
        %v2003 = vpop.f32.mrb[0].mxu0
        %2004 = vmatprep.mubr.f32.mxu0 0.0
        %2005 = vmatmul.mubr.f32.gmra.mrb[0].mxu0 %v1334
        %v2006 = vpop.f32.mrb[0].mxu0
        %v2007 = vadd.f32 0.0, %v2006
        %v2008 = vpop.f32.mrb[0].mxu0
        %2009 = vmatprep.mubr.f32.mxu0 0.0
        %2010 = vmatmul.mubr.f32.gmra.mrb[0].mxu0 %v1337
        %v2011 = vpop.f32.mrb[0].mxu0
        %v2012 = vadd.f32 0.0, %v2011
        %v2013 = vpop.f32.mrb[0].mxu0
        %2014 = vmatprep.mubr.f32.mxu0 0.0
        %2015 = vmatmul.mubr.f32.gmra.mrb[0].mxu0 %v1340
        %v2016 = vpop.f32.mrb[0].mxu0
        %v2017 = vadd.f32 0.0, %v2016
        %v2018 = vpop.f32.mrb[0].mxu0
        %2019 = vmatprep.mubr.f32.mxu0 0.0
        %2020 = vmatmul.mubr.f32.gmra.mrb[0].mxu0 %v1343
        %v2021 = vpop.f32.mrb[0].mxu0
        %v2022 = vadd.f32 0.0, %v2021
        %v2023 = vpop.f32.mrb[0].mxu0
        %2024 = vmatprep.mubr.f32.mxu0 0.0
        %2025 = vmatmul.mubr.f32.gmra.mrb[0].mxu0 %v1346
        %v2026 = vpop.f32.mrb[0].mxu0
        %v2027 = vadd.f32 0.0, %v2026
        %v2028 = vpop.f32.mrb[0].mxu0
        %2029 = vmatprep.mubr.f32.mxu0 0.0
        %2030 = vmatmul.mubr.f32.gmra.mrb[0].mxu0 %v1349
        %v2031 = vpop.f32.mrb[0].mxu0
        %v2032 = vadd.f32 0.0, %v2031
        %v2033 = vpop.f32.mrb[0].mxu0
        %2034 = vmatprep.mubr.f32.mxu0 0.0
        %2035 = vmatmul.mubr.f32.gmra.mrb[0].mxu0 %v1352
        %v2036 = vpop.f32.mrb[0].mxu0
        %v2037 = vadd.f32 0.0, %v2036
        %v2038 = vpop.f32.mrb[0].mxu0
        %2039 = vmatprep.mubr.f32.mxu0 0.0
        %2040 = vmatmul.mubr.f32.gmra.mrb[0].mxu0 %v1355
        %v2041 = vpop.f32.mrb[0].mxu0
        %v2042 = vadd.f32 0.0, %v2041
        %v2043 = vpop.f32.mrb[0].mxu0
        %2044 = vmatprep.mubr.f32.mxu0 0.0
        %2045 = vmatmul.mubr.f32.gmra.mrb[0].mxu0 %v1358
        %v2046 = vpop.f32.mrb[0].mxu0
        %v2047 = vadd.f32 0.0, %v2046
        %v2048 = vpop.f32.mrb[0].mxu0
        %2049 = vmatprep.mubr.f32.mxu0 0.0
        %2050 = vmatmul.mubr.f32.gmra.mrb[0].mxu0 %v1361
        %v2051 = vpop.f32.mrb[0].mxu0
        %v2052 = vadd.f32 0.0, %v2051
        %v2053 = vpop.f32.mrb[0].mxu0
        %2054 = vmatprep.mubr.f32.mxu0 0.0
        %2055 = vmatmul.mubr.f32.gmra.mrb[0].mxu0 %v1364
        %v2056 = vpop.f32.mrb[0].mxu0
        %v2057 = vadd.f32 0.0, %v2056
        %v2058 = vpop.f32.mrb[0].mxu0
        %2059 = vmatprep.mubr.f32.mxu0 0.0
        %2060 = vmatmul.mubr.f32.gmra.mrb[0].mxu0 %v1367
        %v2061 = vpop.f32.mrb[0].mxu0
        %v2062 = vadd.f32 0.0, %v2061
        %v2063 = vpop.f32.mrb[0].mxu0
        %2064 = vmatprep.mubr.f32.mxu0 0.0
        %2065 = vmatmul.mubr.f32.gmra.mrb[0].mxu0 %v1370
        %v2066 = vpop.f32.mrb[0].mxu0
        %v2067 = vadd.f32 0.0, %v2066
        %v2068 = vpop.f32.mrb[0].mxu0
        %2069 = vmatprep.mubr.f32.mxu0 0.0
        %2070 = vmatmul.mubr.f32.gmra.mrb[0].mxu0 %v1373
        %v2071 = vpop.f32.mrb[0].mxu0
        %v2072 = vadd.f32 0.0, %v2071
        %v2073 = vpop.f32.mrb[0].mxu0
        %2074 = vmatprep.mubr.f32.mxu0 0.0
        %2075 = vmatmul.mubr.f32.gmra.mrb[0].mxu0 %v1376
        %v2076 = vpop.f32.mrb[0].mxu0
        %v2077 = vadd.f32 0.0, %v2076
        %v2078 = vpop.f32.mrb[0].mxu0
        %2079 = vmatprep.mubr.f32.mxu0 0.0
        %2080 = vmatmul.mubr.f32.gmra.mrb[0].mxu0 %v1379
        %v2081 = vpop.f32.mrb[0].mxu0
        %v2082 = vadd.f32 0.0, %v2081
        %v2083 = vpop.f32.mrb[0].mxu0
        %2084 = vmatprep.mubr.f32.mxu0 0.0
        %2085 = vmatmul.mubr.f32.gmra.mrb[0].mxu0 %v1382
        %v2086 = vpop.f32.mrb[0].mxu0
        %v2087 = vadd.f32 0.0, %v2086
        %v2088 = vpop.f32.mrb[0].mxu0
        %2089 = vmatprep.mubr.f32.mxu0 0.0
        %2090 = vmatmul.mubr.f32.gmra.mrb[0].mxu0 %v1385
        %v2091 = vpop.f32.mrb[0].mxu0
        %v2092 = vadd.f32 0.0, %v2091
        %v2093 = vpop.f32.mrb[0].mxu0
        %2094 = vmatprep.mubr.f32.mxu0 0.0
        %2095 = vmatmul.mubr.f32.gmra.mrb[0].mxu0 %v1388
        %v2096 = vpop.f32.mrb[0].mxu0
        %v2097 = vadd.f32 0.0, %v2096
        %v2098 = vpop.f32.mrb[0].mxu0
        %2099 = vmatprep.mubr.f32.mxu0 0.0
        %2100 = vmatmul.mubr.f32.gmra.mrb[0].mxu0 %v1391
        %v2101 = vpop.f32.mrb[0].mxu0
        %v2102 = vadd.f32 0.0, %v2101
        %v2103 = vpop.f32.mrb[0].mxu0
        %2104 = vmatprep.mubr.f32.mxu0 0.0
        %2105 = vmatmul.mubr.f32.gmra.mrb[0].mxu0 %v1394
        %v2106 = vpop.f32.mrb[0].mxu0
        %v2107 = vadd.f32 0.0, %v2106
        %v2108 = vpop.f32.mrb[0].mxu0
        %2109 = vmatprep.mubr.f32.mxu0 0.0
        %2110 = vmatmul.mubr.f32.gmra.mrb[0].mxu0 %v1397
        %v2111 = vpop.f32.mrb[0].mxu0
        %v2112 = vadd.f32 0.0, %v2111
        %v2113 = vpop.f32.mrb[0].mxu0
        %2114 = vmatprep.mubr.f32.mxu0 0.0
        %2115 = vmatmul.mubr.f32.gmra.mrb[0].mxu0 %v1400
        %v2116 = vpop.f32.mrb[0].mxu0
        %v2117 = vadd.f32 0.0, %v2116
        %v2118 = vpop.f32.mrb[0].mxu0
        %2119 = vmatprep.mubr.f32.mxu0 0.0
        %2120 = vmatmul.mubr.f32.gmra.mrb[0].mxu0 %v1403
        %v2121 = vpop.f32.mrb[0].mxu0
        %v2122 = vadd.f32 0.0, %v2121
        %v2123 = vpop.f32.mrb[0].mxu0
        %2124 = vmatprep.mubr.f32.mxu0 0.0
        %2125 = vmatmul.mubr.f32.gmra.mrb[0].mxu0 %v1406
        %v2126 = vpop.f32.mrb[0].mxu0
        %v2127 = vadd.f32 0.0, %v2126
        %v2128 = vpop.f32.mrb[0].mxu0
        %2129 = vmatprep.mubr.f32.mxu0 0.0
        %2130 = vmatmul.mubr.f32.gmra.mrb[0].mxu0 %v1409
        %v2131 = vpop.f32.mrb[0].mxu0
        %v2132 = vadd.f32 0.0, %v2131
        %v2133 = vpop.f32.mrb[0].mxu0
        %2134 = vmatprep.mubr.f32.mxu0 0.0
        %2135 = vmatmul.mubr.f32.gmra.mrb[0].mxu0 %v1412
        %v2136 = vpop.f32.mrb[0].mxu0
        %v2137 = vadd.f32 0.0, %v2136
        %v2138 = vpop.f32.mrb[0].mxu0
        %2139 = vmatprep.mubr.f32.mxu0 0.0
        %2140 = vmatmul.mubr.f32.gmra.mrb[0].mxu0 %v1415
        %v2141 = vpop.f32.mrb[0].mxu0
        %v2142 = vadd.f32 0.0, %v2141
        %v2143 = vpop.f32.mrb[0].mxu0
        %2144 = vmatprep.mubr.f32.mxu0 0.0
        %2145 = vmatmul.mubr.f32.gmra.mrb[0].mxu0 %v1418
        %v2146 = vpop.f32.mrb[0].mxu0
        %v2147 = vadd.f32 0.0, %v2146
        %v2148 = vpop.f32.mrb[0].mxu0
        %2149 = vmatprep.mubr.f32.mxu0 0.0
        %2150 = vmatmul.mubr.f32.gmra.mrb[0].mxu0 %v1421
        %v2151 = vpop.f32.mrb[0].mxu0
        %v2152 = vadd.f32 0.0, %v2151
        %v2153 = vpop.f32.mrb[0].mxu0
        %2154 = vmatprep.mubr.f32.mxu0 0.0
        %2155 = vmatmul.mubr.f32.gmra.mrb[0].mxu0 %v1424
        %v2156 = vpop.f32.mrb[0].mxu0
        %v2157 = vadd.f32 0.0, %v2156
        %v2158 = vpop.f32.mrb[0].mxu0
        %2159 = vmatprep.mubr.f32.mxu0 0.0
        %2160 = vmatmul.mubr.f32.gmra.mrb[0].mxu0 %v1427
        %v2161 = vpop.f32.mrb[0].mxu0
        %v2162 = vadd.f32 0.0, %v2161
        %v2163 = vpop.f32.mrb[0].mxu0
        %2164 = vmatprep.mubr.f32.mxu0 0.0
        %2165 = vmatmul.mubr.f32.gmra.mrb[0].mxu0 %v1430
        %v2166 = vpop.f32.mrb[0].mxu0
        %v2167 = vadd.f32 0.0, %v2166
        %v2168 = vpop.f32.mrb[0].mxu0
        %2169 = vmatprep.mubr.f32.mxu0 0.0
        %2170 = vmatmul.mubr.f32.gmra.mrb[0].mxu0 %v1433
        %v2171 = vpop.f32.mrb[0].mxu0
        %v2172 = vadd.f32 0.0, %v2171
        %v2173 = vpop.f32.mrb[0].mxu0
        %2174 = vmatprep.mubr.f32.mxu0 0.0
        %2175 = vmatmul.mubr.f32.gmra.mrb[0].mxu0 %v1436
        %v2176 = vpop.f32.mrb[0].mxu0
        %v2177 = vadd.f32 0.0, %v2176
        %v2178 = vpop.f32.mrb[0].mxu0
        %2179 = vmatprep.mubr.f32.mxu0 0.0
        %2180 = vmatmul.mubr.f32.gmra.mrb[0].mxu0 %v1439
        %v2181 = vpop.f32.mrb[0].mxu0
        %v2182 = vadd.f32 0.0, %v2181
        %v2183 = vpop.f32.mrb[0].mxu0
        %2184 = vmatprep.mubr.f32.mxu0 0.0
        %2185 = vmatmul.mubr.f32.gmra.mrb[0].mxu0 %v1442
        %v2186 = vpop.f32.mrb[0].mxu0
        %v2187 = vadd.f32 0.0, %v2186
        %v2188 = vpop.f32.mrb[0].mxu0
        %2189 = vmatprep.mubr.f32.mxu0 0.0
        %2190 = vmatmul.mubr.f32.gmra.mrb[0].mxu0 %v1445
        %v2191 = vpop.f32.mrb[0].mxu0
        %v2192 = vadd.f32 0.0, %v2191
        %v2193 = vpop.f32.mrb[0].mxu0
        %2194 = vmatprep.mubr.f32.mxu0 0.0
        %2195 = vmatmul.mubr.f32.gmra.mrb[0].mxu0 %v1448
        %v2196 = vpop.f32.mrb[0].mxu0
        %v2197 = vadd.f32 0.0, %v2196
        %v2198 = vpop.f32.mrb[0].mxu0
        %2199 = vmatprep.mubr.f32.mxu0 0.0
        %2200 = vmatmul.mubr.f32.gmra.mrb[0].mxu0 %v1451
        %v2201 = vpop.f32.mrb[0].mxu0
        %v2202 = vadd.f32 0.0, %v2201
        %v2203 = vpop.f32.mrb[0].mxu0
        %2204 = vmatprep.mubr.f32.mxu0 0.0
        %2205 = vmatmul.mubr.f32.gmra.mrb[0].mxu0 %v1454
        %v2206 = vpop.f32.mrb[0].mxu0
        %v2207 = vadd.f32 0.0, %v2206
        %v2208 = vpop.f32.mrb[0].mxu0
        %2209 = vmatprep.mubr.f32.mxu0 0.0
        %2210 = vmatmul.mubr.f32.gmra.mrb[0].mxu0 %v1457
        %v2211 = vpop.f32.mrb[0].mxu0
        %v2212 = vadd.f32 0.0, %v2211
        %v2213 = vpop.f32.mrb[0].mxu0
        %2214 = vmatprep.mubr.f32.mxu0 0.0
        %2215 = vmatmul.mubr.f32.gmra.mrb[0].mxu0 %v1460
        %v2216 = vpop.f32.mrb[0].mxu0
        %v2217 = vadd.f32 0.0, %v2216
        %v2218 = vpop.f32.mrb[0].mxu0
        %2219 = vmatprep.mubr.f32.mxu0 0.0
        %2220 = vmatmul.mubr.f32.gmra.mrb[0].mxu0 %v1463
        %v2221 = vpop.f32.mrb[0].mxu0
        %v2222 = vadd.f32 0.0, %v2221
        %v2223 = vpop.f32.mrb[0].mxu0
        %2224 = vmatprep.mubr.f32.mxu0 0.0
        %2225 = vmatmul.mubr.f32.gmra.mrb[0].mxu0 %v1466
        %v2226 = vpop.f32.mrb[0].mxu0
        %v2227 = vadd.f32 0.0, %v2226
        %v2228 = vpop.f32.mrb[0].mxu0
        %2229 = vmatprep.mubr.f32.mxu0 0.0
        %2230 = vmatmul.mubr.f32.gmra.mrb[0].mxu0 %v1469
        %v2231 = vpop.f32.mrb[0].mxu0
        %v2232 = vadd.f32 0.0, %v2231
        %v2233 = vpop.f32.mrb[0].mxu0
        %2234 = vmatprep.mubr.f32.mxu0 0.0
        %2235 = vmatmul.mubr.f32.gmra.mrb[0].mxu0 %v1472
        %v2236 = vpop.f32.mrb[0].mxu0
        %v2237 = vadd.f32 0.0, %v2236
        %v2238 = vpop.f32.mrb[0].mxu0
        %2239 = vmatprep.mubr.f32.mxu0 0.0
        %2240 = vmatmul.mubr.f32.gmra.mrb[0].mxu0 %v1475
        %v2241 = vpop.f32.mrb[0].mxu0
        %v2242 = vadd.f32 0.0, %v2241
        %v2243 = vpop.f32.mrb[0].mxu0
        %2244 = vmatprep.mubr.f32.mxu0 0.0
        %2245 = vmatmul.mubr.f32.gmra.mrb[0].mxu0 %v1478
        %v2246 = vpop.f32.mrb[0].mxu0
        %v2247 = vadd.f32 0.0, %v2246
        %v2248 = vpop.f32.mrb[0].mxu0
        %2249 = vdwg.mxu0
        %2251 = vset.pattern.permute.xlu0 0
        %2252 = vperm.xlu0 %2251, %v1547
        %v2253 = vpop.permute.xlu0 %2252
        %2256 = vset.pattern.permute.xlu0 0
        %2257 = vperm.xlu0 %2256, %v1552
        %v2258 = vpop.permute.xlu0 %2257
        %2261 = vset.pattern.permute.xlu0 0
        %2262 = vperm.xlu0 %2261, %v1557
        %v2263 = vpop.permute.xlu0 %2262
        %2266 = vset.pattern.permute.xlu0 0
        %2267 = vperm.xlu0 %2266, %v1562
        %v2268 = vpop.permute.xlu0 %2267
        %2271 = vset.pattern.permute.xlu0 0
        %2272 = vperm.xlu0 %2271, %v1567
        %v2273 = vpop.permute.xlu0 %2272
        %2276 = vset.pattern.permute.xlu0 0
        %2277 = vperm.xlu0 %2276, %v1572
        %v2278 = vpop.permute.xlu0 %2277
        %2281 = vset.pattern.permute.xlu0 0
        %2282 = vperm.xlu0 %2281, %v1577
        %v2283 = vpop.permute.xlu0 %2282
        %2286 = vset.pattern.permute.xlu0 0
        %2287 = vperm.xlu0 %2286, %v1582
        %v2288 = vpop.permute.xlu0 %2287
        %2291 = vset.pattern.permute.xlu0 0
        %2292 = vperm.xlu0 %2291, %v1587
        %v2293 = vpop.permute.xlu0 %2292
        %2296 = vset.pattern.permute.xlu0 0
        %2297 = vperm.xlu0 %2296, %v1592
        %v2298 = vpop.permute.xlu0 %2297
        %2301 = vset.pattern.permute.xlu0 0
        %2302 = vperm.xlu0 %2301, %v1597
        %v2303 = vpop.permute.xlu0 %2302
        %2306 = vset.pattern.permute.xlu0 0
        %2307 = vperm.xlu0 %2306, %v1602
        %v2308 = vpop.permute.xlu0 %2307
        %2311 = vset.pattern.permute.xlu0 0
        %2312 = vperm.xlu0 %2311, %v1607
        %v2313 = vpop.permute.xlu0 %2312
        %2316 = vset.pattern.permute.xlu0 0
        %2317 = vperm.xlu0 %2316, %v1612
        %v2318 = vpop.permute.xlu0 %2317
        %2321 = vset.pattern.permute.xlu0 0
        %2322 = vperm.xlu0 %2321, %v1617
        %v2323 = vpop.permute.xlu0 %2322
        %2326 = vset.pattern.permute.xlu0 0
        %2327 = vperm.xlu0 %2326, %v1622
        %v2328 = vpop.permute.xlu0 %2327
        %2331 = vset.pattern.permute.xlu0 0
        %2332 = vperm.xlu0 %2331, %v1627
        %v2333 = vpop.permute.xlu0 %2332
        %2336 = vset.pattern.permute.xlu0 0
        %2337 = vperm.xlu0 %2336, %v1632
        %v2338 = vpop.permute.xlu0 %2337
        %2341 = vset.pattern.permute.xlu0 0
        %2342 = vperm.xlu0 %2341, %v1637
        %v2343 = vpop.permute.xlu0 %2342
        %2346 = vset.pattern.permute.xlu0 0
        %2347 = vperm.xlu0 %2346, %v1642
        %v2348 = vpop.permute.xlu0 %2347
        %2351 = vset.pattern.permute.xlu0 0
        %2352 = vperm.xlu0 %2351, %v1647
        %v2353 = vpop.permute.xlu0 %2352
        %2356 = vset.pattern.permute.xlu0 0
        %2357 = vperm.xlu0 %2356, %v1652
        %v2358 = vpop.permute.xlu0 %2357
        %2361 = vset.pattern.permute.xlu0 0
        %2362 = vperm.xlu0 %2361, %v1657
        %v2363 = vpop.permute.xlu0 %2362
        %2366 = vset.pattern.permute.xlu0 0
        %2367 = vperm.xlu0 %2366, %v1662
        %v2368 = vpop.permute.xlu0 %2367
        %2371 = vset.pattern.permute.xlu0 0
        %2372 = vperm.xlu0 %2371, %v1667
        %v2373 = vpop.permute.xlu0 %2372
        %2376 = vset.pattern.permute.xlu0 0
        %2377 = vperm.xlu0 %2376, %v1672
        %v2378 = vpop.permute.xlu0 %2377
        %2381 = vset.pattern.permute.xlu0 0
        %2382 = vperm.xlu0 %2381, %v1677
        %v2383 = vpop.permute.xlu0 %2382
        %2386 = vset.pattern.permute.xlu0 0
        %2387 = vperm.xlu0 %2386, %v1682
        %v2388 = vpop.permute.xlu0 %2387
        %2391 = vset.pattern.permute.xlu0 0
        %2392 = vperm.xlu0 %2391, %v1687
        %v2393 = vpop.permute.xlu0 %2392
        %2396 = vset.pattern.permute.xlu0 0
        %2397 = vperm.xlu0 %2396, %v1692
        %v2398 = vpop.permute.xlu0 %2397
        %2401 = vset.pattern.permute.xlu0 0
        %2402 = vperm.xlu0 %2401, %v1697
        %v2403 = vpop.permute.xlu0 %2402
        %2406 = vset.pattern.permute.xlu0 0
        %2407 = vperm.xlu0 %2406, %v1702
        %v2408 = vpop.permute.xlu0 %2407
        %2411 = vset.pattern.permute.xlu0 0
        %2412 = vperm.xlu0 %2411, %v1707
        %v2413 = vpop.permute.xlu0 %2412
        %2416 = vset.pattern.permute.xlu0 0
        %2417 = vperm.xlu0 %2416, %v1712
        %v2418 = vpop.permute.xlu0 %2417
        %2421 = vset.pattern.permute.xlu0 0
        %2422 = vperm.xlu0 %2421, %v1717
        %v2423 = vpop.permute.xlu0 %2422
        %2426 = vset.pattern.permute.xlu0 0
        %2427 = vperm.xlu0 %2426, %v1722
        %v2428 = vpop.permute.xlu0 %2427
        %2431 = vset.pattern.permute.xlu0 0
        %2432 = vperm.xlu0 %2431, %v1727
        %v2433 = vpop.permute.xlu0 %2432
        %2436 = vset.pattern.permute.xlu0 0
        %2437 = vperm.xlu0 %2436, %v1732
        %v2438 = vpop.permute.xlu0 %2437
        %2441 = vset.pattern.permute.xlu0 0
        %2442 = vperm.xlu0 %2441, %v1737
        %v2443 = vpop.permute.xlu0 %2442
        %2446 = vset.pattern.permute.xlu0 0
        %2447 = vperm.xlu0 %2446, %v1742
        %v2448 = vpop.permute.xlu0 %2447
        %2451 = vset.pattern.permute.xlu0 0
        %2452 = vperm.xlu0 %2451, %v1747
        %v2453 = vpop.permute.xlu0 %2452
        %2456 = vset.pattern.permute.xlu0 0
        %2457 = vperm.xlu0 %2456, %v1752
        %v2458 = vpop.permute.xlu0 %2457
        %2461 = vset.pattern.permute.xlu0 0
        %2462 = vperm.xlu0 %2461, %v1757
        %v2463 = vpop.permute.xlu0 %2462
        %2466 = vset.pattern.permute.xlu0 0
        %2467 = vperm.xlu0 %2466, %v1762
        %v2468 = vpop.permute.xlu0 %2467
        %2471 = vset.pattern.permute.xlu0 0
        %2472 = vperm.xlu0 %2471, %v1767
        %v2473 = vpop.permute.xlu0 %2472
        %2476 = vset.pattern.permute.xlu0 0
        %2477 = vperm.xlu0 %2476, %v1772
        %v2478 = vpop.permute.xlu0 %2477
        %2481 = vset.pattern.permute.xlu0 0
        %2482 = vperm.xlu0 %2481, %v1777
        %v2483 = vpop.permute.xlu0 %2482
        %2486 = vset.pattern.permute.xlu0 0
        %2487 = vperm.xlu0 %2486, %v1782
        %v2488 = vpop.permute.xlu0 %2487
        %2491 = vset.pattern.permute.xlu0 0
        %2492 = vperm.xlu0 %2491, %v1787
        %v2493 = vpop.permute.xlu0 %2492
        %2496 = vset.pattern.permute.xlu0 0
        %2497 = vperm.xlu0 %2496, %v1792
        %v2498 = vpop.permute.xlu0 %2497
        %2501 = vset.pattern.permute.xlu0 0
        %2502 = vperm.xlu0 %2501, %v1797
        %v2503 = vpop.permute.xlu0 %2502
        %2506 = vset.pattern.permute.xlu0 0
        %2507 = vperm.xlu0 %2506, %v1802
        %v2508 = vpop.permute.xlu0 %2507
        %2511 = vset.pattern.permute.xlu0 0
        %2512 = vperm.xlu0 %2511, %v1807
        %v2513 = vpop.permute.xlu0 %2512
        %2516 = vset.pattern.permute.xlu0 0
        %2517 = vperm.xlu0 %2516, %v1812
        %v2518 = vpop.permute.xlu0 %2517
        %2521 = vset.pattern.permute.xlu0 0
        %2522 = vperm.xlu0 %2521, %v1817
        %v2523 = vpop.permute.xlu0 %2522
        %2526 = vset.pattern.permute.xlu0 0
        %2527 = vperm.xlu0 %2526, %v1822
        %v2528 = vpop.permute.xlu0 %2527
        %2531 = vset.pattern.permute.xlu0 0
        %2532 = vperm.xlu0 %2531, %v1827
        %v2533 = vpop.permute.xlu0 %2532
        %2536 = vset.pattern.permute.xlu0 0
        %2537 = vperm.xlu0 %2536, %v1832
        %v2538 = vpop.permute.xlu0 %2537
        %2541 = vset.pattern.permute.xlu0 0
        %2542 = vperm.xlu0 %2541, %v1837
        %v2543 = vpop.permute.xlu0 %2542
        %2546 = vset.pattern.permute.xlu0 0
        %2547 = vperm.xlu0 %2546, %v1842
        %v2548 = vpop.permute.xlu0 %2547
        %2551 = vset.pattern.permute.xlu0 0
        %2552 = vperm.xlu0 %2551, %v1847
        %v2553 = vpop.permute.xlu0 %2552
        %2556 = vset.pattern.permute.xlu0 0
        %2557 = vperm.xlu0 %2556, %v1852
        %v2558 = vpop.permute.xlu0 %2557
        %2561 = vset.pattern.permute.xlu0 0
        %2562 = vperm.xlu0 %2561, %v1857
        %v2563 = vpop.permute.xlu0 %2562
        %2566 = vset.pattern.permute.xlu0 0
        %2567 = vperm.xlu0 %2566, %v1862
        %v2568 = vpop.permute.xlu0 %2567
        %v2570 = vsub.f32 %v634, %v2253
        %v2571 = vsub.f32 %v635, %v2258
        %v2572 = vsub.f32 %v636, %v2263
        %v2573 = vsub.f32 %v637, %v2268
        %v2574 = vsub.f32 %v638, %v2273
        %v2575 = vsub.f32 %v639, %v2278
        %v2576 = vsub.f32 %v640, %v2283
        %v2577 = vsub.f32 %v641, %v2288
        %v2578 = vsub.f32 %v642, %v2293
        %v2579 = vsub.f32 %v643, %v2298
        %v2580 = vsub.f32 %v644, %v2303
        %v2581 = vsub.f32 %v645, %v2308
        %v2582 = vsub.f32 %v646, %v2313
        %v2583 = vsub.f32 %v647, %v2318
        %v2584 = vsub.f32 %v648, %v2323
        %v2585 = vsub.f32 %v649, %v2328
        %v2586 = vsub.f32 %v650, %v2333
        %v2587 = vsub.f32 %v651, %v2338
        %v2588 = vsub.f32 %v652, %v2343
        %v2589 = vsub.f32 %v653, %v2348
        %v2590 = vsub.f32 %v654, %v2353
        %v2591 = vsub.f32 %v655, %v2358
        %v2592 = vsub.f32 %v656, %v2363
        %v2593 = vsub.f32 %v657, %v2368
        %v2594 = vsub.f32 %v658, %v2373
        %v2595 = vsub.f32 %v659, %v2378
        %v2596 = vsub.f32 %v660, %v2383
        %v2597 = vsub.f32 %v661, %v2388
        %v2598 = vsub.f32 %v662, %v2393
        %v2599 = vsub.f32 %v663, %v2398
        %v2600 = vsub.f32 %v664, %v2403
        %v2601 = vsub.f32 %v665, %v2408
        %v2602 = vsub.f32 %v666, %v2413
        %v2603 = vsub.f32 %v667, %v2418
        %v2604 = vsub.f32 %v668, %v2423
        %v2605 = vsub.f32 %v669, %v2428
        %v2606 = vsub.f32 %v670, %v2433
        %v2607 = vsub.f32 %v671, %v2438
        %v2608 = vsub.f32 %v672, %v2443
        %v2609 = vsub.f32 %v673, %v2448
        %v2610 = vsub.f32 %v674, %v2453
        %v2611 = vsub.f32 %v675, %v2458
        %v2612 = vsub.f32 %v676, %v2463
        %v2613 = vsub.f32 %v677, %v2468
        %v2614 = vsub.f32 %v678, %v2473
        %v2615 = vsub.f32 %v679, %v2478
        %v2616 = vsub.f32 %v680, %v2483
        %v2617 = vsub.f32 %v681, %v2488
        %v2618 = vsub.f32 %v682, %v2493
        %v2619 = vsub.f32 %v683, %v2498
        %v2620 = vsub.f32 %v684, %v2503
        %v2621 = vsub.f32 %v685, %v2508
        %v2622 = vsub.f32 %v686, %v2513
        %v2623 = vsub.f32 %v687, %v2518
        %v2624 = vsub.f32 %v688, %v2523
        %v2625 = vsub.f32 %v689, %v2528
        %v2626 = vsub.f32 %v690, %v2533
        %v2627 = vsub.f32 %v691, %v2538
        %v2628 = vsub.f32 %v692, %v2543
        %v2629 = vsub.f32 %v693, %v2548
        %v2630 = vsub.f32 %v694, %v2553
        %v2631 = vsub.f32 %v695, %v2558
        %v2632 = vsub.f32 %v696, %v2563
        %v2633 = vsub.f32 %v697, %v2568
        %2635 = vset.pattern.permute.xlu0 0
        %2636 = vperm.xlu0 %2635, %v1932
        %v2637 = vpop.permute.xlu0 %2636
        %2640 = vset.pattern.permute.xlu0 0
        %2641 = vperm.xlu0 %2640, %v1937
        %v2642 = vpop.permute.xlu0 %2641
        %2645 = vset.pattern.permute.xlu0 0
        %2646 = vperm.xlu0 %2645, %v1942
        %v2647 = vpop.permute.xlu0 %2646
        %2650 = vset.pattern.permute.xlu0 0
        %2651 = vperm.xlu0 %2650, %v1947
        %v2652 = vpop.permute.xlu0 %2651
        %2655 = vset.pattern.permute.xlu0 0
        %2656 = vperm.xlu0 %2655, %v1952
        %v2657 = vpop.permute.xlu0 %2656
        %2660 = vset.pattern.permute.xlu0 0
        %2661 = vperm.xlu0 %2660, %v1957
        %v2662 = vpop.permute.xlu0 %2661
        %2665 = vset.pattern.permute.xlu0 0
        %2666 = vperm.xlu0 %2665, %v1962
        %v2667 = vpop.permute.xlu0 %2666
        %2670 = vset.pattern.permute.xlu0 0
        %2671 = vperm.xlu0 %2670, %v1967
        %v2672 = vpop.permute.xlu0 %2671
        %2675 = vset.pattern.permute.xlu0 0
        %2676 = vperm.xlu0 %2675, %v1972
        %v2677 = vpop.permute.xlu0 %2676
        %2680 = vset.pattern.permute.xlu0 0
        %2681 = vperm.xlu0 %2680, %v1977
        %v2682 = vpop.permute.xlu0 %2681
        %2685 = vset.pattern.permute.xlu0 0
        %2686 = vperm.xlu0 %2685, %v1982
        %v2687 = vpop.permute.xlu0 %2686
        %2690 = vset.pattern.permute.xlu0 0
        %2691 = vperm.xlu0 %2690, %v1987
        %v2692 = vpop.permute.xlu0 %2691
        %2695 = vset.pattern.permute.xlu0 0
        %2696 = vperm.xlu0 %2695, %v1992
        %v2697 = vpop.permute.xlu0 %2696
        %2700 = vset.pattern.permute.xlu0 0
        %2701 = vperm.xlu0 %2700, %v1997
        %v2702 = vpop.permute.xlu0 %2701
        %2705 = vset.pattern.permute.xlu0 0
        %2706 = vperm.xlu0 %2705, %v2002
        %v2707 = vpop.permute.xlu0 %2706
        %2710 = vset.pattern.permute.xlu0 0
        %2711 = vperm.xlu0 %2710, %v2007
        %v2712 = vpop.permute.xlu0 %2711
        %2715 = vset.pattern.permute.xlu0 0
        %2716 = vperm.xlu0 %2715, %v2012
        %v2717 = vpop.permute.xlu0 %2716
        %2720 = vset.pattern.permute.xlu0 0
        %2721 = vperm.xlu0 %2720, %v2017
        %v2722 = vpop.permute.xlu0 %2721
        %2725 = vset.pattern.permute.xlu0 0
        %2726 = vperm.xlu0 %2725, %v2022
        %v2727 = vpop.permute.xlu0 %2726
        %2730 = vset.pattern.permute.xlu0 0
        %2731 = vperm.xlu0 %2730, %v2027
        %v2732 = vpop.permute.xlu0 %2731
        %2735 = vset.pattern.permute.xlu0 0
        %2736 = vperm.xlu0 %2735, %v2032
        %v2737 = vpop.permute.xlu0 %2736
        %2740 = vset.pattern.permute.xlu0 0
        %2741 = vperm.xlu0 %2740, %v2037
        %v2742 = vpop.permute.xlu0 %2741
        %2745 = vset.pattern.permute.xlu0 0
        %2746 = vperm.xlu0 %2745, %v2042
        %v2747 = vpop.permute.xlu0 %2746
        %2750 = vset.pattern.permute.xlu0 0
        %2751 = vperm.xlu0 %2750, %v2047
        %v2752 = vpop.permute.xlu0 %2751
        %2755 = vset.pattern.permute.xlu0 0
        %2756 = vperm.xlu0 %2755, %v2052
        %v2757 = vpop.permute.xlu0 %2756
        %2760 = vset.pattern.permute.xlu0 0
        %2761 = vperm.xlu0 %2760, %v2057
        %v2762 = vpop.permute.xlu0 %2761
        %2765 = vset.pattern.permute.xlu0 0
        %2766 = vperm.xlu0 %2765, %v2062
        %v2767 = vpop.permute.xlu0 %2766
        %2770 = vset.pattern.permute.xlu0 0
        %2771 = vperm.xlu0 %2770, %v2067
        %v2772 = vpop.permute.xlu0 %2771
        %2775 = vset.pattern.permute.xlu0 0
        %2776 = vperm.xlu0 %2775, %v2072
        %v2777 = vpop.permute.xlu0 %2776
        %2780 = vset.pattern.permute.xlu0 0
        %2781 = vperm.xlu0 %2780, %v2077
        %v2782 = vpop.permute.xlu0 %2781
        %2785 = vset.pattern.permute.xlu0 0
        %2786 = vperm.xlu0 %2785, %v2082
        %v2787 = vpop.permute.xlu0 %2786
        %2790 = vset.pattern.permute.xlu0 0
        %2791 = vperm.xlu0 %2790, %v2087
        %v2792 = vpop.permute.xlu0 %2791
        %2795 = vset.pattern.permute.xlu0 0
        %2796 = vperm.xlu0 %2795, %v2092
        %v2797 = vpop.permute.xlu0 %2796
        %2800 = vset.pattern.permute.xlu0 0
        %2801 = vperm.xlu0 %2800, %v2097
        %v2802 = vpop.permute.xlu0 %2801
        %2805 = vset.pattern.permute.xlu0 0
        %2806 = vperm.xlu0 %2805, %v2102
        %v2807 = vpop.permute.xlu0 %2806
        %2810 = vset.pattern.permute.xlu0 0
        %2811 = vperm.xlu0 %2810, %v2107
        %v2812 = vpop.permute.xlu0 %2811
        %2815 = vset.pattern.permute.xlu0 0
        %2816 = vperm.xlu0 %2815, %v2112
        %v2817 = vpop.permute.xlu0 %2816
        %2820 = vset.pattern.permute.xlu0 0
        %2821 = vperm.xlu0 %2820, %v2117
        %v2822 = vpop.permute.xlu0 %2821
        %2825 = vset.pattern.permute.xlu0 0
        %2826 = vperm.xlu0 %2825, %v2122
        %v2827 = vpop.permute.xlu0 %2826
        %2830 = vset.pattern.permute.xlu0 0
        %2831 = vperm.xlu0 %2830, %v2127
        %v2832 = vpop.permute.xlu0 %2831
        %2835 = vset.pattern.permute.xlu0 0
        %2836 = vperm.xlu0 %2835, %v2132
        %v2837 = vpop.permute.xlu0 %2836
        %2840 = vset.pattern.permute.xlu0 0
        %2841 = vperm.xlu0 %2840, %v2137
        %v2842 = vpop.permute.xlu0 %2841
        %2845 = vset.pattern.permute.xlu0 0
        %2846 = vperm.xlu0 %2845, %v2142
        %v2847 = vpop.permute.xlu0 %2846
        %2850 = vset.pattern.permute.xlu0 0
        %2851 = vperm.xlu0 %2850, %v2147
        %v2852 = vpop.permute.xlu0 %2851
        %2855 = vset.pattern.permute.xlu0 0
        %2856 = vperm.xlu0 %2855, %v2152
        %v2857 = vpop.permute.xlu0 %2856
        %2860 = vset.pattern.permute.xlu0 0
        %2861 = vperm.xlu0 %2860, %v2157
        %v2862 = vpop.permute.xlu0 %2861
        %2865 = vset.pattern.permute.xlu0 0
        %2866 = vperm.xlu0 %2865, %v2162
        %v2867 = vpop.permute.xlu0 %2866
        %2870 = vset.pattern.permute.xlu0 0
        %2871 = vperm.xlu0 %2870, %v2167
        %v2872 = vpop.permute.xlu0 %2871
        %2875 = vset.pattern.permute.xlu0 0
        %2876 = vperm.xlu0 %2875, %v2172
        %v2877 = vpop.permute.xlu0 %2876
        %2880 = vset.pattern.permute.xlu0 0
        %2881 = vperm.xlu0 %2880, %v2177
        %v2882 = vpop.permute.xlu0 %2881
        %2885 = vset.pattern.permute.xlu0 0
        %2886 = vperm.xlu0 %2885, %v2182
        %v2887 = vpop.permute.xlu0 %2886
        %2890 = vset.pattern.permute.xlu0 0
        %2891 = vperm.xlu0 %2890, %v2187
        %v2892 = vpop.permute.xlu0 %2891
        %2895 = vset.pattern.permute.xlu0 0
        %2896 = vperm.xlu0 %2895, %v2192
        %v2897 = vpop.permute.xlu0 %2896
        %2900 = vset.pattern.permute.xlu0 0
        %2901 = vperm.xlu0 %2900, %v2197
        %v2902 = vpop.permute.xlu0 %2901
        %2905 = vset.pattern.permute.xlu0 0
        %2906 = vperm.xlu0 %2905, %v2202
        %v2907 = vpop.permute.xlu0 %2906
        %2910 = vset.pattern.permute.xlu0 0
        %2911 = vperm.xlu0 %2910, %v2207
        %v2912 = vpop.permute.xlu0 %2911
        %2915 = vset.pattern.permute.xlu0 0
        %2916 = vperm.xlu0 %2915, %v2212
        %v2917 = vpop.permute.xlu0 %2916
        %2920 = vset.pattern.permute.xlu0 0
        %2921 = vperm.xlu0 %2920, %v2217
        %v2922 = vpop.permute.xlu0 %2921
        %2925 = vset.pattern.permute.xlu0 0
        %2926 = vperm.xlu0 %2925, %v2222
        %v2927 = vpop.permute.xlu0 %2926
        %2930 = vset.pattern.permute.xlu0 0
        %2931 = vperm.xlu0 %2930, %v2227
        %v2932 = vpop.permute.xlu0 %2931
        %2935 = vset.pattern.permute.xlu0 0
        %2936 = vperm.xlu0 %2935, %v2232
        %v2937 = vpop.permute.xlu0 %2936
        %2940 = vset.pattern.permute.xlu0 0
        %2941 = vperm.xlu0 %2940, %v2237
        %v2942 = vpop.permute.xlu0 %2941
        %2945 = vset.pattern.permute.xlu0 0
        %2946 = vperm.xlu0 %2945, %v2242
        %v2947 = vpop.permute.xlu0 %2946
        %2950 = vset.pattern.permute.xlu0 0
        %2951 = vperm.xlu0 %2950, %v2247
        %v2952 = vpop.permute.xlu0 %2951
        %v2954 = vmul.f32 %v2570, %v2637
        %v2955 = vmul.f32 %v2571, %v2642
        %v2956 = vmul.f32 %v2572, %v2647
        %v2957 = vmul.f32 %v2573, %v2652
        %v2958 = vmul.f32 %v2574, %v2657
        %v2959 = vmul.f32 %v2575, %v2662
        %v2960 = vmul.f32 %v2576, %v2667
        %v2961 = vmul.f32 %v2577, %v2672
        %v2962 = vmul.f32 %v2578, %v2677
        %v2963 = vmul.f32 %v2579, %v2682
        %v2964 = vmul.f32 %v2580, %v2687
        %v2965 = vmul.f32 %v2581, %v2692
        %v2966 = vmul.f32 %v2582, %v2697
        %v2967 = vmul.f32 %v2583, %v2702
        %v2968 = vmul.f32 %v2584, %v2707
        %v2969 = vmul.f32 %v2585, %v2712
        %v2970 = vmul.f32 %v2586, %v2717
        %v2971 = vmul.f32 %v2587, %v2722
        %v2972 = vmul.f32 %v2588, %v2727
        %v2973 = vmul.f32 %v2589, %v2732
        %v2974 = vmul.f32 %v2590, %v2737
        %v2975 = vmul.f32 %v2591, %v2742
        %v2976 = vmul.f32 %v2592, %v2747
        %v2977 = vmul.f32 %v2593, %v2752
        %v2978 = vmul.f32 %v2594, %v2757
        %v2979 = vmul.f32 %v2595, %v2762
        %v2980 = vmul.f32 %v2596, %v2767
        %v2981 = vmul.f32 %v2597, %v2772
        %v2982 = vmul.f32 %v2598, %v2777
        %v2983 = vmul.f32 %v2599, %v2782
        %v2984 = vmul.f32 %v2600, %v2787
        %v2985 = vmul.f32 %v2601, %v2792
        %v2986 = vmul.f32 %v2602, %v2797
        %v2987 = vmul.f32 %v2603, %v2802
        %v2988 = vmul.f32 %v2604, %v2807
        %v2989 = vmul.f32 %v2605, %v2812
        %v2990 = vmul.f32 %v2606, %v2817
        %v2991 = vmul.f32 %v2607, %v2822
        %v2992 = vmul.f32 %v2608, %v2827
        %v2993 = vmul.f32 %v2609, %v2832
        %v2994 = vmul.f32 %v2610, %v2837
        %v2995 = vmul.f32 %v2611, %v2842
        %v2996 = vmul.f32 %v2612, %v2847
        %v2997 = vmul.f32 %v2613, %v2852
        %v2998 = vmul.f32 %v2614, %v2857
        %v2999 = vmul.f32 %v2615, %v2862
        %v3000 = vmul.f32 %v2616, %v2867
        %v3001 = vmul.f32 %v2617, %v2872
        %v3002 = vmul.f32 %v2618, %v2877
        %v3003 = vmul.f32 %v2619, %v2882
        %v3004 = vmul.f32 %v2620, %v2887
        %v3005 = vmul.f32 %v2621, %v2892
        %v3006 = vmul.f32 %v2622, %v2897
        %v3007 = vmul.f32 %v2623, %v2902
        %v3008 = vmul.f32 %v2624, %v2907
        %v3009 = vmul.f32 %v2625, %v2912
        %v3010 = vmul.f32 %v2626, %v2917
        %v3011 = vmul.f32 %v2627, %v2922
        %v3012 = vmul.f32 %v2628, %v2927
        %v3013 = vmul.f32 %v2629, %v2932
        %v3014 = vmul.f32 %v2630, %v2937
        %v3015 = vmul.f32 %v2631, %v2942
        %v3016 = vmul.f32 %v2632, %v2947
        %v3017 = vmul.f32 %v2633, %v2952
        %3019 = vset.pattern.permute.xlu0 0
        %3020 = vperm.xlu0 %3019, %v698
        %v3021 = vpop.permute.xlu0 %3020
        %3024 = vset.pattern.permute.xlu0 0
        %3025 = vperm.xlu0 %3024, %v699
        %v3026 = vpop.permute.xlu0 %3025
        %3029 = vset.pattern.permute.xlu0 0
        %3030 = vperm.xlu0 %3029, %v700
        %v3031 = vpop.permute.xlu0 %3030
        %3034 = vset.pattern.permute.xlu0 0
        %3035 = vperm.xlu0 %3034, %v701
        %v3036 = vpop.permute.xlu0 %3035
        %3039 = vset.pattern.permute.xlu0 0
        %3040 = vperm.xlu0 %3039, %v702
        %v3041 = vpop.permute.xlu0 %3040
        %3044 = vset.pattern.permute.xlu0 0
        %3045 = vperm.xlu0 %3044, %v703
        %v3046 = vpop.permute.xlu0 %3045
        %3049 = vset.pattern.permute.xlu0 0
        %3050 = vperm.xlu0 %3049, %v704
        %v3051 = vpop.permute.xlu0 %3050
        %3054 = vset.pattern.permute.xlu0 0
        %3055 = vperm.xlu0 %3054, %v705
        %v3056 = vpop.permute.xlu0 %3055
        %3059 = vset.pattern.permute.xlu0 0
        %3060 = vperm.xlu0 %3059, %v706
        %v3061 = vpop.permute.xlu0 %3060
        %3064 = vset.pattern.permute.xlu0 0
        %3065 = vperm.xlu0 %3064, %v707
        %v3066 = vpop.permute.xlu0 %3065
        %3069 = vset.pattern.permute.xlu0 0
        %3070 = vperm.xlu0 %3069, %v708
        %v3071 = vpop.permute.xlu0 %3070
        %3074 = vset.pattern.permute.xlu0 0
        %3075 = vperm.xlu0 %3074, %v709
        %v3076 = vpop.permute.xlu0 %3075
        %3079 = vset.pattern.permute.xlu0 0
        %3080 = vperm.xlu0 %3079, %v710
        %v3081 = vpop.permute.xlu0 %3080
        %3084 = vset.pattern.permute.xlu0 0
        %3085 = vperm.xlu0 %3084, %v711
        %v3086 = vpop.permute.xlu0 %3085
        %3089 = vset.pattern.permute.xlu0 0
        %3090 = vperm.xlu0 %3089, %v712
        %v3091 = vpop.permute.xlu0 %3090
        %3094 = vset.pattern.permute.xlu0 0
        %3095 = vperm.xlu0 %3094, %v713
        %v3096 = vpop.permute.xlu0 %3095
        %3099 = vset.pattern.permute.xlu0 0
        %3100 = vperm.xlu0 %3099, %v714
        %v3101 = vpop.permute.xlu0 %3100
        %3104 = vset.pattern.permute.xlu0 0
        %3105 = vperm.xlu0 %3104, %v715
        %v3106 = vpop.permute.xlu0 %3105
        %3109 = vset.pattern.permute.xlu0 0
        %3110 = vperm.xlu0 %3109, %v716
        %v3111 = vpop.permute.xlu0 %3110
        %3114 = vset.pattern.permute.xlu0 0
        %3115 = vperm.xlu0 %3114, %v717
        %v3116 = vpop.permute.xlu0 %3115
        %3119 = vset.pattern.permute.xlu0 0
        %3120 = vperm.xlu0 %3119, %v718
        %v3121 = vpop.permute.xlu0 %3120
        %3124 = vset.pattern.permute.xlu0 0
        %3125 = vperm.xlu0 %3124, %v719
        %v3126 = vpop.permute.xlu0 %3125
        %3129 = vset.pattern.permute.xlu0 0
        %3130 = vperm.xlu0 %3129, %v720
        %v3131 = vpop.permute.xlu0 %3130
        %3134 = vset.pattern.permute.xlu0 0
        %3135 = vperm.xlu0 %3134, %v721
        %v3136 = vpop.permute.xlu0 %3135
        %3139 = vset.pattern.permute.xlu0 0
        %3140 = vperm.xlu0 %3139, %v722
        %v3141 = vpop.permute.xlu0 %3140
        %3144 = vset.pattern.permute.xlu0 0
        %3145 = vperm.xlu0 %3144, %v723
        %v3146 = vpop.permute.xlu0 %3145
        %3149 = vset.pattern.permute.xlu0 0
        %3150 = vperm.xlu0 %3149, %v724
        %v3151 = vpop.permute.xlu0 %3150
        %3154 = vset.pattern.permute.xlu0 0
        %3155 = vperm.xlu0 %3154, %v725
        %v3156 = vpop.permute.xlu0 %3155
        %3159 = vset.pattern.permute.xlu0 0
        %3160 = vperm.xlu0 %3159, %v726
        %v3161 = vpop.permute.xlu0 %3160
        %3164 = vset.pattern.permute.xlu0 0
        %3165 = vperm.xlu0 %3164, %v727
        %v3166 = vpop.permute.xlu0 %3165
        %3169 = vset.pattern.permute.xlu0 0
        %3170 = vperm.xlu0 %3169, %v728
        %v3171 = vpop.permute.xlu0 %3170
        %3174 = vset.pattern.permute.xlu0 0
        %3175 = vperm.xlu0 %3174, %v729
        %v3176 = vpop.permute.xlu0 %3175
        %3179 = vset.pattern.permute.xlu0 0
        %3180 = vperm.xlu0 %3179, %v730
        %v3181 = vpop.permute.xlu0 %3180
        %3184 = vset.pattern.permute.xlu0 0
        %3185 = vperm.xlu0 %3184, %v731
        %v3186 = vpop.permute.xlu0 %3185
        %3189 = vset.pattern.permute.xlu0 0
        %3190 = vperm.xlu0 %3189, %v732
        %v3191 = vpop.permute.xlu0 %3190
        %3194 = vset.pattern.permute.xlu0 0
        %3195 = vperm.xlu0 %3194, %v733
        %v3196 = vpop.permute.xlu0 %3195
        %3199 = vset.pattern.permute.xlu0 0
        %3200 = vperm.xlu0 %3199, %v734
        %v3201 = vpop.permute.xlu0 %3200
        %3204 = vset.pattern.permute.xlu0 0
        %3205 = vperm.xlu0 %3204, %v735
        %v3206 = vpop.permute.xlu0 %3205
        %3209 = vset.pattern.permute.xlu0 0
        %3210 = vperm.xlu0 %3209, %v736
        %v3211 = vpop.permute.xlu0 %3210
        %3214 = vset.pattern.permute.xlu0 0
        %3215 = vperm.xlu0 %3214, %v737
        %v3216 = vpop.permute.xlu0 %3215
        %3219 = vset.pattern.permute.xlu0 0
        %3220 = vperm.xlu0 %3219, %v738
        %v3221 = vpop.permute.xlu0 %3220
        %3224 = vset.pattern.permute.xlu0 0
        %3225 = vperm.xlu0 %3224, %v739
        %v3226 = vpop.permute.xlu0 %3225
        %3229 = vset.pattern.permute.xlu0 0
        %3230 = vperm.xlu0 %3229, %v740
        %v3231 = vpop.permute.xlu0 %3230
        %3234 = vset.pattern.permute.xlu0 0
        %3235 = vperm.xlu0 %3234, %v741
        %v3236 = vpop.permute.xlu0 %3235
        %3239 = vset.pattern.permute.xlu0 0
        %3240 = vperm.xlu0 %3239, %v742
        %v3241 = vpop.permute.xlu0 %3240
        %3244 = vset.pattern.permute.xlu0 0
        %3245 = vperm.xlu0 %3244, %v743
        %v3246 = vpop.permute.xlu0 %3245
        %3249 = vset.pattern.permute.xlu0 0
        %3250 = vperm.xlu0 %3249, %v744
        %v3251 = vpop.permute.xlu0 %3250
        %3254 = vset.pattern.permute.xlu0 0
        %3255 = vperm.xlu0 %3254, %v745
        %v3256 = vpop.permute.xlu0 %3255
        %3259 = vset.pattern.permute.xlu0 0
        %3260 = vperm.xlu0 %3259, %v746
        %v3261 = vpop.permute.xlu0 %3260
        %3264 = vset.pattern.permute.xlu0 0
        %3265 = vperm.xlu0 %3264, %v747
        %v3266 = vpop.permute.xlu0 %3265
        %3269 = vset.pattern.permute.xlu0 0
        %3270 = vperm.xlu0 %3269, %v748
        %v3271 = vpop.permute.xlu0 %3270
        %3274 = vset.pattern.permute.xlu0 0
        %3275 = vperm.xlu0 %3274, %v749
        %v3276 = vpop.permute.xlu0 %3275
        %3279 = vset.pattern.permute.xlu0 0
        %3280 = vperm.xlu0 %3279, %v750
        %v3281 = vpop.permute.xlu0 %3280
        %3284 = vset.pattern.permute.xlu0 0
        %3285 = vperm.xlu0 %3284, %v751
        %v3286 = vpop.permute.xlu0 %3285
        %3289 = vset.pattern.permute.xlu0 0
        %3290 = vperm.xlu0 %3289, %v752
        %v3291 = vpop.permute.xlu0 %3290
        %3294 = vset.pattern.permute.xlu0 0
        %3295 = vperm.xlu0 %3294, %v753
        %v3296 = vpop.permute.xlu0 %3295
        %3299 = vset.pattern.permute.xlu0 0
        %3300 = vperm.xlu0 %3299, %v754
        %v3301 = vpop.permute.xlu0 %3300
        %3304 = vset.pattern.permute.xlu0 0
        %3305 = vperm.xlu0 %3304, %v755
        %v3306 = vpop.permute.xlu0 %3305
        %3309 = vset.pattern.permute.xlu0 0
        %3310 = vperm.xlu0 %3309, %v756
        %v3311 = vpop.permute.xlu0 %3310
        %3314 = vset.pattern.permute.xlu0 0
        %3315 = vperm.xlu0 %3314, %v757
        %v3316 = vpop.permute.xlu0 %3315
        %3319 = vset.pattern.permute.xlu0 0
        %3320 = vperm.xlu0 %3319, %v758
        %v3321 = vpop.permute.xlu0 %3320
        %3324 = vset.pattern.permute.xlu0 0
        %3325 = vperm.xlu0 %3324, %v759
        %v3326 = vpop.permute.xlu0 %3325
        %3329 = vset.pattern.permute.xlu0 0
        %3330 = vperm.xlu0 %3329, %v760
        %v3331 = vpop.permute.xlu0 %3330
        %3334 = vset.pattern.permute.xlu0 0
        %3335 = vperm.xlu0 %3334, %v761
        %v3336 = vpop.permute.xlu0 %3335
        %v3338 = vmul.f32 %v2954, %v3021
        %v3339 = vmul.f32 %v2955, %v3026
        %v3340 = vmul.f32 %v2956, %v3031
        %v3341 = vmul.f32 %v2957, %v3036
        %v3342 = vmul.f32 %v2958, %v3041
        %v3343 = vmul.f32 %v2959, %v3046
        %v3344 = vmul.f32 %v2960, %v3051
        %v3345 = vmul.f32 %v2961, %v3056
        %v3346 = vmul.f32 %v2962, %v3061
        %v3347 = vmul.f32 %v2963, %v3066
        %v3348 = vmul.f32 %v2964, %v3071
        %v3349 = vmul.f32 %v2965, %v3076
        %v3350 = vmul.f32 %v2966, %v3081
        %v3351 = vmul.f32 %v2967, %v3086
        %v3352 = vmul.f32 %v2968, %v3091
        %v3353 = vmul.f32 %v2969, %v3096
        %v3354 = vmul.f32 %v2970, %v3101
        %v3355 = vmul.f32 %v2971, %v3106
        %v3356 = vmul.f32 %v2972, %v3111
        %v3357 = vmul.f32 %v2973, %v3116
        %v3358 = vmul.f32 %v2974, %v3121
        %v3359 = vmul.f32 %v2975, %v3126
        %v3360 = vmul.f32 %v2976, %v3131
        %v3361 = vmul.f32 %v2977, %v3136
        %v3362 = vmul.f32 %v2978, %v3141
        %v3363 = vmul.f32 %v2979, %v3146
        %v3364 = vmul.f32 %v2980, %v3151
        %v3365 = vmul.f32 %v2981, %v3156
        %v3366 = vmul.f32 %v2982, %v3161
        %v3367 = vmul.f32 %v2983, %v3166
        %v3368 = vmul.f32 %v2984, %v3171
        %v3369 = vmul.f32 %v2985, %v3176
        %v3370 = vmul.f32 %v2986, %v3181
        %v3371 = vmul.f32 %v2987, %v3186
        %v3372 = vmul.f32 %v2988, %v3191
        %v3373 = vmul.f32 %v2989, %v3196
        %v3374 = vmul.f32 %v2990, %v3201
        %v3375 = vmul.f32 %v2991, %v3206
        %v3376 = vmul.f32 %v2992, %v3211
        %v3377 = vmul.f32 %v2993, %v3216
        %v3378 = vmul.f32 %v2994, %v3221
        %v3379 = vmul.f32 %v2995, %v3226
        %v3380 = vmul.f32 %v2996, %v3231
        %v3381 = vmul.f32 %v2997, %v3236
        %v3382 = vmul.f32 %v2998, %v3241
        %v3383 = vmul.f32 %v2999, %v3246
        %v3384 = vmul.f32 %v3000, %v3251
        %v3385 = vmul.f32 %v3001, %v3256
        %v3386 = vmul.f32 %v3002, %v3261
        %v3387 = vmul.f32 %v3003, %v3266
        %v3388 = vmul.f32 %v3004, %v3271
        %v3389 = vmul.f32 %v3005, %v3276
        %v3390 = vmul.f32 %v3006, %v3281
        %v3391 = vmul.f32 %v3007, %v3286
        %v3392 = vmul.f32 %v3008, %v3291
        %v3393 = vmul.f32 %v3009, %v3296
        %v3394 = vmul.f32 %v3010, %v3301
        %v3395 = vmul.f32 %v3011, %v3306
        %v3396 = vmul.f32 %v3012, %v3311
        %v3397 = vmul.f32 %v3013, %v3316
        %v3398 = vmul.f32 %v3014, %v3321
        %v3399 = vmul.f32 %v3015, %v3326
        %v3400 = vmul.f32 %v3016, %v3331
        %v3401 = vmul.f32 %v3017, %v3336
        %3403 = vset.pattern.permute.xlu0 0
        %3404 = vperm.xlu0 %3403, %v762
        %v3405 = vpop.permute.xlu0 %3404
        %3408 = vset.pattern.permute.xlu0 0
        %3409 = vperm.xlu0 %3408, %v763
        %v3410 = vpop.permute.xlu0 %3409
        %3413 = vset.pattern.permute.xlu0 0
        %3414 = vperm.xlu0 %3413, %v764
        %v3415 = vpop.permute.xlu0 %3414
        %3418 = vset.pattern.permute.xlu0 0
        %3419 = vperm.xlu0 %3418, %v765
        %v3420 = vpop.permute.xlu0 %3419
        %3423 = vset.pattern.permute.xlu0 0
        %3424 = vperm.xlu0 %3423, %v766
        %v3425 = vpop.permute.xlu0 %3424
        %3428 = vset.pattern.permute.xlu0 0
        %3429 = vperm.xlu0 %3428, %v767
        %v3430 = vpop.permute.xlu0 %3429
        %3433 = vset.pattern.permute.xlu0 0
        %3434 = vperm.xlu0 %3433, %v768
        %v3435 = vpop.permute.xlu0 %3434
        %3438 = vset.pattern.permute.xlu0 0
        %3439 = vperm.xlu0 %3438, %v769
        %v3440 = vpop.permute.xlu0 %3439
        %3443 = vset.pattern.permute.xlu0 0
        %3444 = vperm.xlu0 %3443, %v770
        %v3445 = vpop.permute.xlu0 %3444
        %3448 = vset.pattern.permute.xlu0 0
        %3449 = vperm.xlu0 %3448, %v771
        %v3450 = vpop.permute.xlu0 %3449
        %3453 = vset.pattern.permute.xlu0 0
        %3454 = vperm.xlu0 %3453, %v772
        %v3455 = vpop.permute.xlu0 %3454
        %3458 = vset.pattern.permute.xlu0 0
        %3459 = vperm.xlu0 %3458, %v773
        %v3460 = vpop.permute.xlu0 %3459
        %3463 = vset.pattern.permute.xlu0 0
        %3464 = vperm.xlu0 %3463, %v774
        %v3465 = vpop.permute.xlu0 %3464
        %3468 = vset.pattern.permute.xlu0 0
        %3469 = vperm.xlu0 %3468, %v775
        %v3470 = vpop.permute.xlu0 %3469
        %3473 = vset.pattern.permute.xlu0 0
        %3474 = vperm.xlu0 %3473, %v776
        %v3475 = vpop.permute.xlu0 %3474
        %3478 = vset.pattern.permute.xlu0 0
        %3479 = vperm.xlu0 %3478, %v777
        %v3480 = vpop.permute.xlu0 %3479
        %3483 = vset.pattern.permute.xlu0 0
        %3484 = vperm.xlu0 %3483, %v778
        %v3485 = vpop.permute.xlu0 %3484
        %3488 = vset.pattern.permute.xlu0 0
        %3489 = vperm.xlu0 %3488, %v779
        %v3490 = vpop.permute.xlu0 %3489
        %3493 = vset.pattern.permute.xlu0 0
        %3494 = vperm.xlu0 %3493, %v780
        %v3495 = vpop.permute.xlu0 %3494
        %3498 = vset.pattern.permute.xlu0 0
        %3499 = vperm.xlu0 %3498, %v781
        %v3500 = vpop.permute.xlu0 %3499
        %3503 = vset.pattern.permute.xlu0 0
        %3504 = vperm.xlu0 %3503, %v782
        %v3505 = vpop.permute.xlu0 %3504
        %3508 = vset.pattern.permute.xlu0 0
        %3509 = vperm.xlu0 %3508, %v783
        %v3510 = vpop.permute.xlu0 %3509
        %3513 = vset.pattern.permute.xlu0 0
        %3514 = vperm.xlu0 %3513, %v784
        %v3515 = vpop.permute.xlu0 %3514
        %3518 = vset.pattern.permute.xlu0 0
        %3519 = vperm.xlu0 %3518, %v785
        %v3520 = vpop.permute.xlu0 %3519
        %3523 = vset.pattern.permute.xlu0 0
        %3524 = vperm.xlu0 %3523, %v786
        %v3525 = vpop.permute.xlu0 %3524
        %3528 = vset.pattern.permute.xlu0 0
        %3529 = vperm.xlu0 %3528, %v787
        %v3530 = vpop.permute.xlu0 %3529
        %3533 = vset.pattern.permute.xlu0 0
        %3534 = vperm.xlu0 %3533, %v788
        %v3535 = vpop.permute.xlu0 %3534
        %3538 = vset.pattern.permute.xlu0 0
        %3539 = vperm.xlu0 %3538, %v789
        %v3540 = vpop.permute.xlu0 %3539
        %3543 = vset.pattern.permute.xlu0 0
        %3544 = vperm.xlu0 %3543, %v790
        %v3545 = vpop.permute.xlu0 %3544
        %3548 = vset.pattern.permute.xlu0 0
        %3549 = vperm.xlu0 %3548, %v791
        %v3550 = vpop.permute.xlu0 %3549
        %3553 = vset.pattern.permute.xlu0 0
        %3554 = vperm.xlu0 %3553, %v792
        %v3555 = vpop.permute.xlu0 %3554
        %3558 = vset.pattern.permute.xlu0 0
        %3559 = vperm.xlu0 %3558, %v793
        %v3560 = vpop.permute.xlu0 %3559
        %3563 = vset.pattern.permute.xlu0 0
        %3564 = vperm.xlu0 %3563, %v794
        %v3565 = vpop.permute.xlu0 %3564
        %3568 = vset.pattern.permute.xlu0 0
        %3569 = vperm.xlu0 %3568, %v795
        %v3570 = vpop.permute.xlu0 %3569
        %3573 = vset.pattern.permute.xlu0 0
        %3574 = vperm.xlu0 %3573, %v796
        %v3575 = vpop.permute.xlu0 %3574
        %3578 = vset.pattern.permute.xlu0 0
        %3579 = vperm.xlu0 %3578, %v797
        %v3580 = vpop.permute.xlu0 %3579
        %3583 = vset.pattern.permute.xlu0 0
        %3584 = vperm.xlu0 %3583, %v798
        %v3585 = vpop.permute.xlu0 %3584
        %3588 = vset.pattern.permute.xlu0 0
        %3589 = vperm.xlu0 %3588, %v799
        %v3590 = vpop.permute.xlu0 %3589
        %3593 = vset.pattern.permute.xlu0 0
        %3594 = vperm.xlu0 %3593, %v800
        %v3595 = vpop.permute.xlu0 %3594
        %3598 = vset.pattern.permute.xlu0 0
        %3599 = vperm.xlu0 %3598, %v801
        %v3600 = vpop.permute.xlu0 %3599
        %3603 = vset.pattern.permute.xlu0 0
        %3604 = vperm.xlu0 %3603, %v802
        %v3605 = vpop.permute.xlu0 %3604
        %3608 = vset.pattern.permute.xlu0 0
        %3609 = vperm.xlu0 %3608, %v803
        %v3610 = vpop.permute.xlu0 %3609
        %3613 = vset.pattern.permute.xlu0 0
        %3614 = vperm.xlu0 %3613, %v804
        %v3615 = vpop.permute.xlu0 %3614
        %3618 = vset.pattern.permute.xlu0 0
        %3619 = vperm.xlu0 %3618, %v805
        %v3620 = vpop.permute.xlu0 %3619
        %3623 = vset.pattern.permute.xlu0 0
        %3624 = vperm.xlu0 %3623, %v806
        %v3625 = vpop.permute.xlu0 %3624
        %3628 = vset.pattern.permute.xlu0 0
        %3629 = vperm.xlu0 %3628, %v807
        %v3630 = vpop.permute.xlu0 %3629
        %3633 = vset.pattern.permute.xlu0 0
        %3634 = vperm.xlu0 %3633, %v808
        %v3635 = vpop.permute.xlu0 %3634
        %3638 = vset.pattern.permute.xlu0 0
        %3639 = vperm.xlu0 %3638, %v809
        %v3640 = vpop.permute.xlu0 %3639
        %3643 = vset.pattern.permute.xlu0 0
        %3644 = vperm.xlu0 %3643, %v810
        %v3645 = vpop.permute.xlu0 %3644
        %3648 = vset.pattern.permute.xlu0 0
        %3649 = vperm.xlu0 %3648, %v811
        %v3650 = vpop.permute.xlu0 %3649
        %3653 = vset.pattern.permute.xlu0 0
        %3654 = vperm.xlu0 %3653, %v812
        %v3655 = vpop.permute.xlu0 %3654
        %3658 = vset.pattern.permute.xlu0 0
        %3659 = vperm.xlu0 %3658, %v813
        %v3660 = vpop.permute.xlu0 %3659
        %3663 = vset.pattern.permute.xlu0 0
        %3664 = vperm.xlu0 %3663, %v814
        %v3665 = vpop.permute.xlu0 %3664
        %3668 = vset.pattern.permute.xlu0 0
        %3669 = vperm.xlu0 %3668, %v815
        %v3670 = vpop.permute.xlu0 %3669
        %3673 = vset.pattern.permute.xlu0 0
        %3674 = vperm.xlu0 %3673, %v816
        %v3675 = vpop.permute.xlu0 %3674
        %3678 = vset.pattern.permute.xlu0 0
        %3679 = vperm.xlu0 %3678, %v817
        %v3680 = vpop.permute.xlu0 %3679
        %3683 = vset.pattern.permute.xlu0 0
        %3684 = vperm.xlu0 %3683, %v818
        %v3685 = vpop.permute.xlu0 %3684
        %3688 = vset.pattern.permute.xlu0 0
        %3689 = vperm.xlu0 %3688, %v819
        %v3690 = vpop.permute.xlu0 %3689
        %3693 = vset.pattern.permute.xlu0 0
        %3694 = vperm.xlu0 %3693, %v820
        %v3695 = vpop.permute.xlu0 %3694
        %3698 = vset.pattern.permute.xlu0 0
        %3699 = vperm.xlu0 %3698, %v821
        %v3700 = vpop.permute.xlu0 %3699
        %3703 = vset.pattern.permute.xlu0 0
        %3704 = vperm.xlu0 %3703, %v822
        %v3705 = vpop.permute.xlu0 %3704
        %3708 = vset.pattern.permute.xlu0 0
        %3709 = vperm.xlu0 %3708, %v823
        %v3710 = vpop.permute.xlu0 %3709
        %3713 = vset.pattern.permute.xlu0 0
        %3714 = vperm.xlu0 %3713, %v824
        %v3715 = vpop.permute.xlu0 %3714
        %3718 = vset.pattern.permute.xlu0 0
        %3719 = vperm.xlu0 %3718, %v825
        %v3720 = vpop.permute.xlu0 %3719
        %v3722 = vadd.f32 %v3338, %v3405
        %v3723 = vadd.f32 %v3339, %v3410
        %v3724 = vadd.f32 %v3340, %v3415
        %v3725 = vadd.f32 %v3341, %v3420
        %v3726 = vadd.f32 %v3342, %v3425
        %v3727 = vadd.f32 %v3343, %v3430
        %v3728 = vadd.f32 %v3344, %v3435
        %v3729 = vadd.f32 %v3345, %v3440
        %v3730 = vadd.f32 %v3346, %v3445
        %v3731 = vadd.f32 %v3347, %v3450
        %v3732 = vadd.f32 %v3348, %v3455
        %v3733 = vadd.f32 %v3349, %v3460
        %v3734 = vadd.f32 %v3350, %v3465
        %v3735 = vadd.f32 %v3351, %v3470
        %v3736 = vadd.f32 %v3352, %v3475
        %v3737 = vadd.f32 %v3353, %v3480
        %v3738 = vadd.f32 %v3354, %v3485
        %v3739 = vadd.f32 %v3355, %v3490
        %v3740 = vadd.f32 %v3356, %v3495
        %v3741 = vadd.f32 %v3357, %v3500
        %v3742 = vadd.f32 %v3358, %v3505
        %v3743 = vadd.f32 %v3359, %v3510
        %v3744 = vadd.f32 %v3360, %v3515
        %v3745 = vadd.f32 %v3361, %v3520
        %v3746 = vadd.f32 %v3362, %v3525
        %v3747 = vadd.f32 %v3363, %v3530
        %v3748 = vadd.f32 %v3364, %v3535
        %v3749 = vadd.f32 %v3365, %v3540
        %v3750 = vadd.f32 %v3366, %v3545
        %v3751 = vadd.f32 %v3367, %v3550
        %v3752 = vadd.f32 %v3368, %v3555
        %v3753 = vadd.f32 %v3369, %v3560
        %v3754 = vadd.f32 %v3370, %v3565
        %v3755 = vadd.f32 %v3371, %v3570
        %v3756 = vadd.f32 %v3372, %v3575
        %v3757 = vadd.f32 %v3373, %v3580
        %v3758 = vadd.f32 %v3374, %v3585
        %v3759 = vadd.f32 %v3375, %v3590
        %v3760 = vadd.f32 %v3376, %v3595
        %v3761 = vadd.f32 %v3377, %v3600
        %v3762 = vadd.f32 %v3378, %v3605
        %v3763 = vadd.f32 %v3379, %v3610
        %v3764 = vadd.f32 %v3380, %v3615
        %v3765 = vadd.f32 %v3381, %v3620
        %v3766 = vadd.f32 %v3382, %v3625
        %v3767 = vadd.f32 %v3383, %v3630
        %v3768 = vadd.f32 %v3384, %v3635
        %v3769 = vadd.f32 %v3385, %v3640
        %v3770 = vadd.f32 %v3386, %v3645
        %v3771 = vadd.f32 %v3387, %v3650
        %v3772 = vadd.f32 %v3388, %v3655
        %v3773 = vadd.f32 %v3389, %v3660
        %v3774 = vadd.f32 %v3390, %v3665
        %v3775 = vadd.f32 %v3391, %v3670
        %v3776 = vadd.f32 %v3392, %v3675
        %v3777 = vadd.f32 %v3393, %v3680
        %v3778 = vadd.f32 %v3394, %v3685
        %v3779 = vadd.f32 %v3395, %v3690
        %v3780 = vadd.f32 %v3396, %v3695
        %v3781 = vadd.f32 %v3397, %v3700
        %v3782 = vadd.f32 %v3398, %v3705
        %v3783 = vadd.f32 %v3399, %v3710
        %v3784 = vadd.f32 %v3400, %v3715
        %v3785 = vadd.f32 %v3401, %v3720
        %v3786 = vmax.f32 %v3722, 0.0
        %v3787 = vmax.f32 %v3723, 0.0
        %v3788 = vmax.f32 %v3724, 0.0
        %v3789 = vmax.f32 %v3725, 0.0
        %v3790 = vmax.f32 %v3726, 0.0
        %v3791 = vmax.f32 %v3727, 0.0
        %v3792 = vmax.f32 %v3728, 0.0
        %v3793 = vmax.f32 %v3729, 0.0
        %v3794 = vmax.f32 %v3730, 0.0
        %v3795 = vmax.f32 %v3731, 0.0
        %v3796 = vmax.f32 %v3732, 0.0
        %v3797 = vmax.f32 %v3733, 0.0
        %v3798 = vmax.f32 %v3734, 0.0
        %v3799 = vmax.f32 %v3735, 0.0
        %v3800 = vmax.f32 %v3736, 0.0
        %v3801 = vmax.f32 %v3737, 0.0
        %v3802 = vmax.f32 %v3738, 0.0
        %v3803 = vmax.f32 %v3739, 0.0
        %v3804 = vmax.f32 %v3740, 0.0
        %v3805 = vmax.f32 %v3741, 0.0
        %v3806 = vmax.f32 %v3742, 0.0
        %v3807 = vmax.f32 %v3743, 0.0
        %v3808 = vmax.f32 %v3744, 0.0
        %v3809 = vmax.f32 %v3745, 0.0
        %v3810 = vmax.f32 %v3746, 0.0
        %v3811 = vmax.f32 %v3747, 0.0
        %v3812 = vmax.f32 %v3748, 0.0
        %v3813 = vmax.f32 %v3749, 0.0
        %v3814 = vmax.f32 %v3750, 0.0
        %v3815 = vmax.f32 %v3751, 0.0
        %v3816 = vmax.f32 %v3752, 0.0
        %v3817 = vmax.f32 %v3753, 0.0
        %v3818 = vmax.f32 %v3754, 0.0
        %v3819 = vmax.f32 %v3755, 0.0
        %v3820 = vmax.f32 %v3756, 0.0
        %v3821 = vmax.f32 %v3757, 0.0
        %v3822 = vmax.f32 %v3758, 0.0
        %v3823 = vmax.f32 %v3759, 0.0
        %v3824 = vmax.f32 %v3760, 0.0
        %v3825 = vmax.f32 %v3761, 0.0
        %v3826 = vmax.f32 %v3762, 0.0
        %v3827 = vmax.f32 %v3763, 0.0
        %v3828 = vmax.f32 %v3764, 0.0
        %v3829 = vmax.f32 %v3765, 0.0
        %v3830 = vmax.f32 %v3766, 0.0
        %v3831 = vmax.f32 %v3767, 0.0
        %v3832 = vmax.f32 %v3768, 0.0
        %v3833 = vmax.f32 %v3769, 0.0
        %v3834 = vmax.f32 %v3770, 0.0
        %v3835 = vmax.f32 %v3771, 0.0
        %v3836 = vmax.f32 %v3772, 0.0
        %v3837 = vmax.f32 %v3773, 0.0
        %v3838 = vmax.f32 %v3774, 0.0
        %v3839 = vmax.f32 %v3775, 0.0
        %v3840 = vmax.f32 %v3776, 0.0
        %v3841 = vmax.f32 %v3777, 0.0
        %v3842 = vmax.f32 %v3778, 0.0
        %v3843 = vmax.f32 %v3779, 0.0
        %v3844 = vmax.f32 %v3780, 0.0
        %v3845 = vmax.f32 %v3781, 0.0
        %v3846 = vmax.f32 %v3782, 0.0
        %v3847 = vmax.f32 %v3783, 0.0
        %v3848 = vmax.f32 %v3784, 0.0
        %v3849 = vmax.f32 %v3785, 0.0
        %v3851 = vsel %vm1048, 0.0625, 0
        %v3854 = vsel %vm1048, %v3786, 0
        %v3857 = vsel %vm1048, %v3787, 0
        %v3860 = vsel %vm1048, %v3788, 0
        %v3863 = vsel %vm1048, %v3789, 0
        %v3866 = vsel %vm1048, %v3790, 0
        %v3869 = vsel %vm1048, %v3791, 0
        %v3872 = vsel %vm1048, %v3792, 0
        %v3875 = vsel %vm1048, %v3793, 0
        %v3878 = vsel %vm1048, %v3794, 0
        %v3881 = vsel %vm1048, %v3795, 0
        %v3884 = vsel %vm1048, %v3796, 0
        %v3887 = vsel %vm1048, %v3797, 0
        %v3890 = vsel %vm1048, %v3798, 0
        %v3893 = vsel %vm1048, %v3799, 0
        %v3896 = vsel %vm1048, %v3800, 0
        %v3899 = vsel %vm1048, %v3801, 0
        %v3902 = vsel %vm1048, %v3802, 0
        %v3905 = vsel %vm1048, %v3803, 0
        %v3908 = vsel %vm1048, %v3804, 0
        %v3911 = vsel %vm1048, %v3805, 0
        %v3914 = vsel %vm1048, %v3806, 0
        %v3917 = vsel %vm1048, %v3807, 0
        %v3920 = vsel %vm1048, %v3808, 0
        %v3923 = vsel %vm1048, %v3809, 0
        %v3926 = vsel %vm1048, %v3810, 0
        %v3929 = vsel %vm1048, %v3811, 0
        %v3932 = vsel %vm1048, %v3812, 0
        %v3935 = vsel %vm1048, %v3813, 0
        %v3938 = vsel %vm1048, %v3814, 0
        %v3941 = vsel %vm1048, %v3815, 0
        %v3944 = vsel %vm1048, %v3816, 0
        %v3947 = vsel %vm1048, %v3817, 0
        %v3950 = vsel %vm1048, %v3818, 0
        %v3953 = vsel %vm1048, %v3819, 0
        %v3956 = vsel %vm1048, %v3820, 0
        %v3959 = vsel %vm1048, %v3821, 0
        %v3962 = vsel %vm1048, %v3822, 0
        %v3965 = vsel %vm1048, %v3823, 0
        %v3968 = vsel %vm1048, %v3824, 0
        %v3971 = vsel %vm1048, %v3825, 0
        %v3974 = vsel %vm1048, %v3826, 0
        %v3977 = vsel %vm1048, %v3827, 0
        %v3980 = vsel %vm1048, %v3828, 0
        %v3983 = vsel %vm1048, %v3829, 0
        %v3986 = vsel %vm1048, %v3830, 0
        %v3989 = vsel %vm1048, %v3831, 0
        %v3992 = vsel %vm1048, %v3832, 0
        %v3995 = vsel %vm1048, %v3833, 0
        %v3998 = vsel %vm1048, %v3834, 0
        %v4001 = vsel %vm1048, %v3835, 0
        %v4004 = vsel %vm1048, %v3836, 0
        %v4007 = vsel %vm1048, %v3837, 0
        %v4010 = vsel %vm1048, %v3838, 0
        %v4013 = vsel %vm1048, %v3839, 0
        %v4016 = vsel %vm1048, %v3840, 0
        %v4019 = vsel %vm1048, %v3841, 0
        %v4022 = vsel %vm1048, %v3842, 0
        %v4025 = vsel %vm1048, %v3843, 0
        %v4028 = vsel %vm1048, %v3844, 0
        %v4031 = vsel %vm1048, %v3845, 0
        %v4034 = vsel %vm1048, %v3846, 0
        %v4037 = vsel %vm1048, %v3847, 0
        %v4040 = vsel %vm1048, %v3848, 0
        %v4043 = vsel %vm1048, %v3849, 0
        %4045 = vmatprep.subr.mxu0 0.0
        %4046 = vmatpush1.xpose.msra.mxu0 %v3854
        %4047 = vmatprep.subr.mxu0 0.0
        %4048 = vmatpush1.xpose.msra.mxu0 %v3857
        %4049 = vmatprep.subr.mxu0 0.0
        %4050 = vmatpush1.xpose.msra.mxu0 %v3860
        %4051 = vmatprep.subr.mxu0 0.0
        %4052 = vmatpush1.xpose.msra.mxu0 %v3863
        %4053 = vmatprep.subr.mxu0 0.0
        %4054 = vmatpush1.xpose.msra.mxu0 %v3866
        %4055 = vmatprep.subr.mxu0 0.0
        %4056 = vmatpush1.xpose.msra.mxu0 %v3869
        %4057 = vmatprep.subr.mxu0 0.0
        %4058 = vmatpush1.xpose.msra.mxu0 %v3872
        %4059 = vmatprep.subr.mxu0 0.0
        %4060 = vmatpush1.xpose.msra.mxu0 %v3875
        %4061 = vmatprep.subr.mxu0 0.0
        %4062 = vmatpush1.xpose.msra.mxu0 %v3878
        %4063 = vmatprep.subr.mxu0 0.0
        %4064 = vmatpush1.xpose.msra.mxu0 %v3881
        %4065 = vmatprep.subr.mxu0 0.0
        %4066 = vmatpush1.xpose.msra.mxu0 %v3884
        %4067 = vmatprep.subr.mxu0 0.0
        %4068 = vmatpush1.xpose.msra.mxu0 %v3887
        %4069 = vmatprep.subr.mxu0 0.0
        %4070 = vmatpush1.xpose.msra.mxu0 %v3890
        %4071 = vmatprep.subr.mxu0 0.0
        %4072 = vmatpush1.xpose.msra.mxu0 %v3893
        %4073 = vmatprep.subr.mxu0 0.0
        %4074 = vmatpush1.xpose.msra.mxu0 %v3896
        %4075 = vmatprep.subr.mxu0 0.0
        %4076 = vmatpush1.xpose.msra.mxu0 %v3899
        %4077 = vmatprep.subr.mxu0 0.0
        %4078 = vmatpush1.xpose.msra.mxu0 %v3902
        %4079 = vmatprep.subr.mxu0 0.0
        %4080 = vmatpush1.xpose.msra.mxu0 %v3905
        %4081 = vmatprep.subr.mxu0 0.0
        %4082 = vmatpush1.xpose.msra.mxu0 %v3908
        %4083 = vmatprep.subr.mxu0 0.0
        %4084 = vmatpush1.xpose.msra.mxu0 %v3911
        %4085 = vmatprep.subr.mxu0 0.0
        %4086 = vmatpush1.xpose.msra.mxu0 %v3914
        %4087 = vmatprep.subr.mxu0 0.0
        %4088 = vmatpush1.xpose.msra.mxu0 %v3917
        %4089 = vmatprep.subr.mxu0 0.0
        %4090 = vmatpush1.xpose.msra.mxu0 %v3920
        %4091 = vmatprep.subr.mxu0 0.0
        %4092 = vmatpush1.xpose.msra.mxu0 %v3923
        %4093 = vmatprep.subr.mxu0 0.0
        %4094 = vmatpush1.xpose.msra.mxu0 %v3926
        %4095 = vmatprep.subr.mxu0 0.0
        %4096 = vmatpush1.xpose.msra.mxu0 %v3929
        %4097 = vmatprep.subr.mxu0 0.0
        %4098 = vmatpush1.xpose.msra.mxu0 %v3932
        %4099 = vmatprep.subr.mxu0 0.0
        %4100 = vmatpush1.xpose.msra.mxu0 %v3935
        %4101 = vmatprep.subr.mxu0 0.0
        %4102 = vmatpush1.xpose.msra.mxu0 %v3938
        %4103 = vmatprep.subr.mxu0 0.0
        %4104 = vmatpush1.xpose.msra.mxu0 %v3941
        %4105 = vmatprep.subr.mxu0 0.0
        %4106 = vmatpush1.xpose.msra.mxu0 %v3944
        %4107 = vmatprep.subr.mxu0 0.0
        %4108 = vmatpush1.xpose.msra.mxu0 %v3947
        %4109 = vmatprep.mubr.f32.mxu0 0.0
        %4110 = vmatmul.mubr.f32.gmra.mrb[0].mxu0 %v3851
        %v4111 = vpop.f32.mrb[0].mxu0
        %v4112 = vadd.f32 0.0, %v4111
        %v4113 = vpop.f32.mrb[0].mxu0
        %v4114 = vadd.f32 0.0, %v4113
        %4115 = vdwg.mxu0
        %4116 = vmatprep.subr.mxu0 0.0
        %4117 = vmatpush1.xpose.msra.mxu0 %v3950
        %4118 = vmatprep.subr.mxu0 0.0
        %4119 = vmatpush1.xpose.msra.mxu0 %v3953
        %4120 = vmatprep.subr.mxu0 0.0
        %4121 = vmatpush1.xpose.msra.mxu0 %v3956
        %4122 = vmatprep.subr.mxu0 0.0
        %4123 = vmatpush1.xpose.msra.mxu0 %v3959
        %4124 = vmatprep.subr.mxu0 0.0
        %4125 = vmatpush1.xpose.msra.mxu0 %v3962
        %4126 = vmatprep.subr.mxu0 0.0
        %4127 = vmatpush1.xpose.msra.mxu0 %v3965
        %4128 = vmatprep.subr.mxu0 0.0
        %4129 = vmatpush1.xpose.msra.mxu0 %v3968
        %4130 = vmatprep.subr.mxu0 0.0
        %4131 = vmatpush1.xpose.msra.mxu0 %v3971
        %4132 = vmatprep.subr.mxu0 0.0
        %4133 = vmatpush1.xpose.msra.mxu0 %v3974
        %4134 = vmatprep.subr.mxu0 0.0
        %4135 = vmatpush1.xpose.msra.mxu0 %v3977
        %4136 = vmatprep.subr.mxu0 0.0
        %4137 = vmatpush1.xpose.msra.mxu0 %v3980
        %4138 = vmatprep.subr.mxu0 0.0
        %4139 = vmatpush1.xpose.msra.mxu0 %v3983
        %4140 = vmatprep.subr.mxu0 0.0
        %4141 = vmatpush1.xpose.msra.mxu0 %v3986
        %4142 = vmatprep.subr.mxu0 0.0
        %4143 = vmatpush1.xpose.msra.mxu0 %v3989
        %4144 = vmatprep.subr.mxu0 0.0
        %4145 = vmatpush1.xpose.msra.mxu0 %v3992
        %4146 = vmatprep.subr.mxu0 0.0
        %4147 = vmatpush1.xpose.msra.mxu0 %v3995
        %4148 = vmatprep.subr.mxu0 0.0
        %4149 = vmatpush1.xpose.msra.mxu0 %v3998
        %4150 = vmatprep.subr.mxu0 0.0
        %4151 = vmatpush1.xpose.msra.mxu0 %v4001
        %4152 = vmatprep.subr.mxu0 0.0
        %4153 = vmatpush1.xpose.msra.mxu0 %v4004
        %4154 = vmatprep.subr.mxu0 0.0
        %4155 = vmatpush1.xpose.msra.mxu0 %v4007
        %4156 = vmatprep.subr.mxu0 0.0
        %4157 = vmatpush1.xpose.msra.mxu0 %v4010
        %4158 = vmatprep.subr.mxu0 0.0
        %4159 = vmatpush1.xpose.msra.mxu0 %v4013
        %4160 = vmatprep.subr.mxu0 0.0
        %4161 = vmatpush1.xpose.msra.mxu0 %v4016
        %4162 = vmatprep.subr.mxu0 0.0
        %4163 = vmatpush1.xpose.msra.mxu0 %v4019
        %4164 = vmatprep.subr.mxu0 0.0
        %4165 = vmatpush1.xpose.msra.mxu0 %v4022
        %4166 = vmatprep.subr.mxu0 0.0
        %4167 = vmatpush1.xpose.msra.mxu0 %v4025
        %4168 = vmatprep.subr.mxu0 0.0
        %4169 = vmatpush1.xpose.msra.mxu0 %v4028
        %4170 = vmatprep.subr.mxu0 0.0
        %4171 = vmatpush1.xpose.msra.mxu0 %v4031
        %4172 = vmatprep.subr.mxu0 0.0
        %4173 = vmatpush1.xpose.msra.mxu0 %v4034
        %4174 = vmatprep.subr.mxu0 0.0
        %4175 = vmatpush1.xpose.msra.mxu0 %v4037
        %4176 = vmatprep.subr.mxu0 0.0
        %4177 = vmatpush1.xpose.msra.mxu0 %v4040
        %4178 = vmatprep.subr.mxu0 0.0
        %4179 = vmatpush1.xpose.msra.mxu0 %v4043
        %4180 = vmatprep.mubr.f32.mxu0 0.0
        %4181 = vmatmul.mubr.f32.gmra.mrb[0].mxu0 %v3851
        %v4182 = vpop.f32.mrb[0].mxu0
        %v4183 = vadd.f32 0.0, %v4182
        %v4184 = vpop.f32.mrb[0].mxu0
        %v4185 = vadd.f32 0.0, %v4184
        %4186 = vdwg.mxu0
        %v4187 = vld [vmem:[%s6] sm:$0xff]
        %v4188 = vld [vmem:[%s6 + $0x8] sm:$0xff]
        %v4189 = vld [vmem:[%s6 + $0x10] sm:$0xff]
        %v4190 = vld [vmem:[%s6 + $0x18] sm:$0xff]
        %v4191 = vld [vmem:[%s6 + $0x20] sm:$0xff]
        %v4192 = vld [vmem:[%s6 + $0x28] sm:$0xff]
        %v4193 = vld [vmem:[%s6 + $0x30] sm:$0xff]
        %v4194 = vld [vmem:[%s6 + $0x38] sm:$0xff]
        %v4195 = vld [vmem:[%s6 + $0x40] sm:$0xff]
        %v4196 = vld [vmem:[%s6 + $0x48] sm:$0xff]
        %v4197 = vld [vmem:[%s6 + $0x50] sm:$0xff]
        %v4198 = vld [vmem:[%s6 + $0x58] sm:$0xff]
        %v4199 = vld [vmem:[%s6 + $0x60] sm:$0xff]
        %v4200 = vld [vmem:[%s6 + $0x68] sm:$0xff]
        %v4201 = vld [vmem:[%s6 + $0x70] sm:$0xff]
        %v4202 = vld [vmem:[%s6 + $0x78] sm:$0xff]
        %v4203 = vld [vmem:[%s6 + $0x80] sm:$0xff]
        %v4204 = vld [vmem:[%s6 + $0x88] sm:$0xff]
        %v4205 = vld [vmem:[%s6 + $0x90] sm:$0xff]
        %v4206 = vld [vmem:[%s6 + $0x98] sm:$0xff]
        %v4207 = vld [vmem:[%s6 + $0xa0] sm:$0xff]
        %v4208 = vld [vmem:[%s6 + $0xa8] sm:$0xff]
        %v4209 = vld [vmem:[%s6 + $0xb0] sm:$0xff]
        %v4210 = vld [vmem:[%s6 + $0xb8] sm:$0xff]
        %v4211 = vld [vmem:[%s6 + $0xc0] sm:$0xff]
        %v4212 = vld [vmem:[%s6 + $0xc8] sm:$0xff]
        %v4213 = vld [vmem:[%s6 + $0xd0] sm:$0xff]
        %v4214 = vld [vmem:[%s6 + $0xd8] sm:$0xff]
        %v4215 = vld [vmem:[%s6 + $0xe0] sm:$0xff]
        %v4216 = vld [vmem:[%s6 + $0xe8] sm:$0xff]
        %v4217 = vld [vmem:[%s6 + $0xf0] sm:$0xff]
        %v4218 = vld [vmem:[%s6 + $0xf8] sm:$0xff]
        %v4219 = vld [vmem:[%s6 + $0x100] sm:$0xff]
        %v4220 = vld [vmem:[%s6 + $0x108] sm:$0xff]
        %v4221 = vld [vmem:[%s6 + $0x110] sm:$0xff]
        %v4222 = vld [vmem:[%s6 + $0x118] sm:$0xff]
        %v4223 = vld [vmem:[%s6 + $0x120] sm:$0xff]
        %v4224 = vld [vmem:[%s6 + $0x128] sm:$0xff]
        %v4225 = vld [vmem:[%s6 + $0x130] sm:$0xff]
        %v4226 = vld [vmem:[%s6 + $0x138] sm:$0xff]
        %v4227 = vld [vmem:[%s6 + $0x140] sm:$0xff]
        %v4228 = vld [vmem:[%s6 + $0x148] sm:$0xff]
        %v4229 = vld [vmem:[%s6 + $0x150] sm:$0xff]
        %v4230 = vld [vmem:[%s6 + $0x158] sm:$0xff]
        %v4231 = vld [vmem:[%s6 + $0x160] sm:$0xff]
        %v4232 = vld [vmem:[%s6 + $0x168] sm:$0xff]
        %v4233 = vld [vmem:[%s6 + $0x170] sm:$0xff]
        %v4234 = vld [vmem:[%s6 + $0x178] sm:$0xff]
        %v4235 = vld [vmem:[%s6 + $0x180] sm:$0xff]
        %v4236 = vld [vmem:[%s6 + $0x188] sm:$0xff]
        %v4237 = vld [vmem:[%s6 + $0x190] sm:$0xff]
        %v4238 = vld [vmem:[%s6 + $0x198] sm:$0xff]
        %v4239 = vld [vmem:[%s6 + $0x1a0] sm:$0xff]
        %v4240 = vld [vmem:[%s6 + $0x1a8] sm:$0xff]
        %v4241 = vld [vmem:[%s6 + $0x1b0] sm:$0xff]
        %v4242 = vld [vmem:[%s6 + $0x1b8] sm:$0xff]
        %v4243 = vld [vmem:[%s6 + $0x1c0] sm:$0xff]
        %v4244 = vld [vmem:[%s6 + $0x1c8] sm:$0xff]
        %v4245 = vld [vmem:[%s6 + $0x1d0] sm:$0xff]
        %v4246 = vld [vmem:[%s6 + $0x1d8] sm:$0xff]
        %v4247 = vld [vmem:[%s6 + $0x1e0] sm:$0xff]
        %v4248 = vld [vmem:[%s6 + $0x1e8] sm:$0xff]
        %v4249 = vld [vmem:[%s6 + $0x1f0] sm:$0xff]
        %v4250 = vld [vmem:[%s6 + $0x1f8] sm:$0xff]
        %v4251 = vld [vmem:[%s6 + $0x200] sm:$0xff]
        %v4252 = vld [vmem:[%s6 + $0x208] sm:$0xff]
        %v4253 = vld [vmem:[%s6 + $0x210] sm:$0xff]
        %v4254 = vld [vmem:[%s6 + $0x218] sm:$0xff]
        %v4255 = vld [vmem:[%s6 + $0x220] sm:$0xff]
        %v4256 = vld [vmem:[%s6 + $0x228] sm:$0xff]
        %v4257 = vld [vmem:[%s6 + $0x230] sm:$0xff]
        %v4258 = vld [vmem:[%s6 + $0x238] sm:$0xff]
        %v4259 = vld [vmem:[%s6 + $0x240] sm:$0xff]
        %v4260 = vld [vmem:[%s6 + $0x248] sm:$0xff]
        %v4261 = vld [vmem:[%s6 + $0x250] sm:$0xff]
        %v4262 = vld [vmem:[%s6 + $0x258] sm:$0xff]
        %v4263 = vld [vmem:[%s6 + $0x260] sm:$0xff]
        %v4264 = vld [vmem:[%s6 + $0x268] sm:$0xff]
        %v4265 = vld [vmem:[%s6 + $0x270] sm:$0xff]
        %v4266 = vld [vmem:[%s6 + $0x278] sm:$0xff]
        %v4267 = vld [vmem:[%s6 + $0x280] sm:$0xff]
        %v4268 = vld [vmem:[%s6 + $0x288] sm:$0xff]
        %v4269 = vld [vmem:[%s6 + $0x290] sm:$0xff]
        %v4270 = vld [vmem:[%s6 + $0x298] sm:$0xff]
        %v4271 = vld [vmem:[%s6 + $0x2a0] sm:$0xff]
        %v4272 = vld [vmem:[%s6 + $0x2a8] sm:$0xff]
        %v4273 = vld [vmem:[%s6 + $0x2b0] sm:$0xff]
        %v4274 = vld [vmem:[%s6 + $0x2b8] sm:$0xff]
        %v4275 = vld [vmem:[%s6 + $0x2c0] sm:$0xff]
        %v4276 = vld [vmem:[%s6 + $0x2c8] sm:$0xff]
        %v4277 = vld [vmem:[%s6 + $0x2d0] sm:$0xff]
        %v4278 = vld [vmem:[%s6 + $0x2d8] sm:$0xff]
        %v4279 = vld [vmem:[%s6 + $0x2e0] sm:$0xff]
        %v4280 = vld [vmem:[%s6 + $0x2e8] sm:$0xff]
        %v4281 = vld [vmem:[%s6 + $0x2f0] sm:$0xff]
        %v4282 = vld [vmem:[%s6 + $0x2f8] sm:$0xff]
        %v4283 = vld [vmem:[%s6 + $0x300] sm:$0xff]
        %v4284 = vld [vmem:[%s6 + $0x308] sm:$0xff]
        %v4285 = vld [vmem:[%s6 + $0x310] sm:$0xff]
        %v4286 = vld [vmem:[%s6 + $0x318] sm:$0xff]
        %v4287 = vld [vmem:[%s6 + $0x320] sm:$0xff]
        %v4288 = vld [vmem:[%s6 + $0x328] sm:$0xff]
        %v4289 = vld [vmem:[%s6 + $0x330] sm:$0xff]
        %v4290 = vld [vmem:[%s6 + $0x338] sm:$0xff]
        %v4291 = vld [vmem:[%s6 + $0x340] sm:$0xff]
        %v4292 = vld [vmem:[%s6 + $0x348] sm:$0xff]
        %v4293 = vld [vmem:[%s6 + $0x350] sm:$0xff]
        %v4294 = vld [vmem:[%s6 + $0x358] sm:$0xff]
        %v4295 = vld [vmem:[%s6 + $0x360] sm:$0xff]
        %v4296 = vld [vmem:[%s6 + $0x368] sm:$0xff]
        %v4297 = vld [vmem:[%s6 + $0x370] sm:$0xff]
        %v4298 = vld [vmem:[%s6 + $0x378] sm:$0xff]
        %v4299 = vld [vmem:[%s6 + $0x380] sm:$0xff]
        %v4300 = vld [vmem:[%s6 + $0x388] sm:$0xff]
        %v4301 = vld [vmem:[%s6 + $0x390] sm:$0xff]
        %v4302 = vld [vmem:[%s6 + $0x398] sm:$0xff]
        %v4303 = vld [vmem:[%s6 + $0x3a0] sm:$0xff]
        %v4304 = vld [vmem:[%s6 + $0x3a8] sm:$0xff]
        %v4305 = vld [vmem:[%s6 + $0x3b0] sm:$0xff]
        %v4306 = vld [vmem:[%s6 + $0x3b8] sm:$0xff]
        %v4307 = vld [vmem:[%s6 + $0x3c0] sm:$0xff]
        %v4308 = vld [vmem:[%s6 + $0x3c8] sm:$0xff]
        %v4309 = vld [vmem:[%s6 + $0x3d0] sm:$0xff]
        %v4310 = vld [vmem:[%s6 + $0x3d8] sm:$0xff]
        %v4311 = vld [vmem:[%s6 + $0x3e0] sm:$0xff]
        %v4312 = vld [vmem:[%s6 + $0x3e8] sm:$0xff]
        %v4313 = vld [vmem:[%s6 + $0x3f0] sm:$0xff]
        %v4314 = vld [vmem:[%s6 + $0x3f8] sm:$0xff]
        %v4315 = vld [vmem:[%s7] sm:$0x3]
        %v4317 = vlaneseq
        %v4318 = vshrl.u32 %v4317, 7
        %v4319 = vsub.s32 0, %v4318
        %v4320 = vrot.slane %v4315, %v4319
        %v4321 = vlaneseq
        %v4322 = vshrl.u32 %v4321, 7
        %v4323 = vsub.s32 1, %v4322
        %v4324 = vrot.slane %v4315, %v4323
        %4327 = vmatprep.subr.mxu0 %v4188
        %4328 = vmatpush1.msra.mxu0 %v4187
        %4329 = vmatprep.subr.mxu0 %v4190
        %4330 = vmatpush1.msra.mxu0 %v4189
        %4331 = vmatprep.subr.mxu0 %v4192
        %4332 = vmatpush1.msra.mxu0 %v4191
        %4333 = vmatprep.subr.mxu0 %v4194
        %4334 = vmatpush1.msra.mxu0 %v4193
        %4335 = vmatprep.subr.mxu0 %v4196
        %4336 = vmatpush1.msra.mxu0 %v4195
        %4337 = vmatprep.subr.mxu0 %v4198
        %4338 = vmatpush1.msra.mxu0 %v4197
        %4339 = vmatprep.subr.mxu0 %v4200
        %4340 = vmatpush1.msra.mxu0 %v4199
        %4341 = vmatprep.subr.mxu0 %v4202
        %4342 = vmatpush1.msra.mxu0 %v4201
        %4343 = vmatprep.subr.mxu0 %v4204
        %4344 = vmatpush1.msra.mxu0 %v4203
        %4345 = vmatprep.subr.mxu0 %v4206
        %4346 = vmatpush1.msra.mxu0 %v4205
        %4347 = vmatprep.subr.mxu0 %v4208
        %4348 = vmatpush1.msra.mxu0 %v4207
        %4349 = vmatprep.subr.mxu0 %v4210
        %4350 = vmatpush1.msra.mxu0 %v4209
        %4351 = vmatprep.subr.mxu0 %v4212
        %4352 = vmatpush1.msra.mxu0 %v4211
        %4353 = vmatprep.subr.mxu0 %v4214
        %4354 = vmatpush1.msra.mxu0 %v4213
        %4355 = vmatprep.subr.mxu0 %v4216
        %4356 = vmatpush1.msra.mxu0 %v4215
        %4357 = vmatprep.subr.mxu0 %v4218
        %4358 = vmatpush1.msra.mxu0 %v4217
        %4359 = vmatprep.subr.mxu0 %v4220
        %4360 = vmatpush1.msra.mxu0 %v4219
        %4361 = vmatprep.subr.mxu0 %v4222
        %4362 = vmatpush1.msra.mxu0 %v4221
        %4363 = vmatprep.subr.mxu0 %v4224
        %4364 = vmatpush1.msra.mxu0 %v4223
        %4365 = vmatprep.subr.mxu0 %v4226
        %4366 = vmatpush1.msra.mxu0 %v4225
        %4367 = vmatprep.subr.mxu0 %v4228
        %4368 = vmatpush1.msra.mxu0 %v4227
        %4369 = vmatprep.subr.mxu0 %v4230
        %4370 = vmatpush1.msra.mxu0 %v4229
        %4371 = vmatprep.subr.mxu0 %v4232
        %4372 = vmatpush1.msra.mxu0 %v4231
        %4373 = vmatprep.subr.mxu0 %v4234
        %4374 = vmatpush1.msra.mxu0 %v4233
        %4375 = vmatprep.subr.mxu0 %v4236
        %4376 = vmatpush1.msra.mxu0 %v4235
        %4377 = vmatprep.subr.mxu0 %v4238
        %4378 = vmatpush1.msra.mxu0 %v4237
        %4379 = vmatprep.subr.mxu0 %v4240
        %4380 = vmatpush1.msra.mxu0 %v4239
        %4381 = vmatprep.subr.mxu0 %v4242
        %4382 = vmatpush1.msra.mxu0 %v4241
        %4383 = vmatprep.subr.mxu0 %v4244
        %4384 = vmatpush1.msra.mxu0 %v4243
        %4385 = vmatprep.subr.mxu0 %v4246
        %4386 = vmatpush1.msra.mxu0 %v4245
        %4387 = vmatprep.subr.mxu0 %v4248
        %4388 = vmatpush1.msra.mxu0 %v4247
        %4389 = vmatprep.subr.mxu0 %v4250
        %4390 = vmatpush1.msra.mxu0 %v4249
        %4391 = vmatprep.mubr.f32.mxu0 %v4114
        %4392 = vmatmul.mubr.f32.gmra.mrb[0].mxu0 %v4112
        %v4393 = vpop.f32.mrb[0].mxu0
        %v4394 = vadd.f32 %v4320, %v4393
        %v4395 = vpop.f32.mrb[0].mxu0
        %v4396 = vadd.f32 %v4324, %v4395
        %4397 = vdwg.mxu0
        %4398 = vmatprep.subr.mxu0 %v4252
        %4399 = vmatpush1.msra.mxu0 %v4251
        %4400 = vmatprep.subr.mxu0 %v4254
        %4401 = vmatpush1.msra.mxu0 %v4253
        %4402 = vmatprep.subr.mxu0 %v4256
        %4403 = vmatpush1.msra.mxu0 %v4255
        %4404 = vmatprep.subr.mxu0 %v4258
        %4405 = vmatpush1.msra.mxu0 %v4257
        %4406 = vmatprep.subr.mxu0 %v4260
        %4407 = vmatpush1.msra.mxu0 %v4259
        %4408 = vmatprep.subr.mxu0 %v4262
        %4409 = vmatpush1.msra.mxu0 %v4261
        %4410 = vmatprep.subr.mxu0 %v4264
        %4411 = vmatpush1.msra.mxu0 %v4263
        %4412 = vmatprep.subr.mxu0 %v4266
        %4413 = vmatpush1.msra.mxu0 %v4265
        %4414 = vmatprep.subr.mxu0 %v4268
        %4415 = vmatpush1.msra.mxu0 %v4267
        %4416 = vmatprep.subr.mxu0 %v4270
        %4417 = vmatpush1.msra.mxu0 %v4269
        %4418 = vmatprep.subr.mxu0 %v4272
        %4419 = vmatpush1.msra.mxu0 %v4271
        %4420 = vmatprep.subr.mxu0 %v4274
        %4421 = vmatpush1.msra.mxu0 %v4273
        %4422 = vmatprep.subr.mxu0 %v4276
        %4423 = vmatpush1.msra.mxu0 %v4275
        %4424 = vmatprep.subr.mxu0 %v4278
        %4425 = vmatpush1.msra.mxu0 %v4277
        %4426 = vmatprep.subr.mxu0 %v4280
        %4427 = vmatpush1.msra.mxu0 %v4279
        %4428 = vmatprep.subr.mxu0 %v4282
        %4429 = vmatpush1.msra.mxu0 %v4281
        %4430 = vmatprep.subr.mxu0 %v4284
        %4431 = vmatpush1.msra.mxu0 %v4283
        %4432 = vmatprep.subr.mxu0 %v4286
        %4433 = vmatpush1.msra.mxu0 %v4285
        %4434 = vmatprep.subr.mxu0 %v4288
        %4435 = vmatpush1.msra.mxu0 %v4287
        %4436 = vmatprep.subr.mxu0 %v4290
        %4437 = vmatpush1.msra.mxu0 %v4289
        %4438 = vmatprep.subr.mxu0 %v4292
        %4439 = vmatpush1.msra.mxu0 %v4291
        %4440 = vmatprep.subr.mxu0 %v4294
        %4441 = vmatpush1.msra.mxu0 %v4293
        %4442 = vmatprep.subr.mxu0 %v4296
        %4443 = vmatpush1.msra.mxu0 %v4295
        %4444 = vmatprep.subr.mxu0 %v4298
        %4445 = vmatpush1.msra.mxu0 %v4297
        %4446 = vmatprep.subr.mxu0 %v4300
        %4447 = vmatpush1.msra.mxu0 %v4299
        %4448 = vmatprep.subr.mxu0 %v4302
        %4449 = vmatpush1.msra.mxu0 %v4301
        %4450 = vmatprep.subr.mxu0 %v4304
        %4451 = vmatpush1.msra.mxu0 %v4303
        %4452 = vmatprep.subr.mxu0 %v4306
        %4453 = vmatpush1.msra.mxu0 %v4305
        %4454 = vmatprep.subr.mxu0 %v4308
        %4455 = vmatpush1.msra.mxu0 %v4307
        %4456 = vmatprep.subr.mxu0 %v4310
        %4457 = vmatpush1.msra.mxu0 %v4309
        %4458 = vmatprep.subr.mxu0 %v4312
        %4459 = vmatpush1.msra.mxu0 %v4311
        %4460 = vmatprep.subr.mxu0 %v4314
        %4461 = vmatpush1.msra.mxu0 %v4313
        %4462 = vmatprep.mubr.f32.mxu0 %v4185
        %4463 = vmatmul.mubr.f32.gmra.mrb[0].mxu0 %v4183
        %v4464 = vpop.f32.mrb[0].mxu0
        %v4465 = vadd.f32 %v4394, %v4464
        %v4466 = vpop.f32.mrb[0].mxu0
        %v4467 = vadd.f32 %v4396, %v4466
        %4468 = vdwg.mxu0
        %v4469 = vld [vmem:[%s15] sm:$0xff]
        %v4470 = vld [vmem:[%s15 + $0x8] sm:$0xff]
        %v4471 = vld [vmem:[%s15 + $0x10] sm:$0xff]
        %v4472 = vld [vmem:[%s15 + $0x18] sm:$0xff]
        %v4473 = vld [vmem:[%s15 + $0x20] sm:$0xff]
        %v4474 = vld [vmem:[%s15 + $0x28] sm:$0xff]
        %v4475 = vld [vmem:[%s15 + $0x30] sm:$0xff]
        %v4476 = vld [vmem:[%s15 + $0x38] sm:$0xff]
        %v4477 = vld [vmem:[%s15 + $0x40] sm:$0xff]
        %v4478 = vld [vmem:[%s15 + $0x48] sm:$0xff]
        %v4479 = vld [vmem:[%s15 + $0x50] sm:$0xff]
        %v4480 = vld [vmem:[%s15 + $0x58] sm:$0xff]
        %v4481 = vld [vmem:[%s15 + $0x60] sm:$0xff]
        %v4482 = vld [vmem:[%s15 + $0x68] sm:$0xff]
        %v4483 = vld [vmem:[%s15 + $0x70] sm:$0xff]
        %v4484 = vld [vmem:[%s15 + $0x78] sm:$0xff]
        %v4485 = vld [vmem:[%s15 + $0x80] sm:$0xff]
        %v4486 = vld [vmem:[%s15 + $0x88] sm:$0xff]
        %v4487 = vld [vmem:[%s15 + $0x90] sm:$0xff]
        %v4488 = vld [vmem:[%s15 + $0x98] sm:$0xff]
        %v4489 = vld [vmem:[%s15 + $0xa0] sm:$0xff]
        %v4490 = vld [vmem:[%s15 + $0xa8] sm:$0xff]
        %v4491 = vld [vmem:[%s15 + $0xb0] sm:$0xff]
        %v4492 = vld [vmem:[%s15 + $0xb8] sm:$0xff]
        %v4493 = vld [vmem:[%s15 + $0xc0] sm:$0xff]
        %v4494 = vld [vmem:[%s15 + $0xc8] sm:$0xff]
        %v4495 = vld [vmem:[%s15 + $0xd0] sm:$0xff]
        %v4496 = vld [vmem:[%s15 + $0xd8] sm:$0xff]
        %v4497 = vld [vmem:[%s15 + $0xe0] sm:$0xff]
        %v4498 = vld [vmem:[%s15 + $0xe8] sm:$0xff]
        %v4499 = vld [vmem:[%s15 + $0xf0] sm:$0xff]
        %v4500 = vld [vmem:[%s15 + $0xf8] sm:$0xff]
        %v4501 = vld [vmem:[%s15 + $0x100] sm:$0xff]
        %v4502 = vld [vmem:[%s15 + $0x108] sm:$0xff]
        %v4503 = vld [vmem:[%s15 + $0x110] sm:$0xff]
        %v4504 = vld [vmem:[%s15 + $0x118] sm:$0xff]
        %v4505 = vld [vmem:[%s15 + $0x120] sm:$0xff]
        %v4506 = vld [vmem:[%s15 + $0x128] sm:$0xff]
        %v4507 = vld [vmem:[%s15 + $0x130] sm:$0xff]
        %v4508 = vld [vmem:[%s15 + $0x138] sm:$0xff]
        %v4509 = vld [vmem:[%s15 + $0x140] sm:$0xff]
        %v4510 = vld [vmem:[%s15 + $0x148] sm:$0xff]
        %v4511 = vld [vmem:[%s15 + $0x150] sm:$0xff]
        %v4512 = vld [vmem:[%s15 + $0x158] sm:$0xff]
        %v4513 = vld [vmem:[%s15 + $0x160] sm:$0xff]
        %v4514 = vld [vmem:[%s15 + $0x168] sm:$0xff]
        %v4515 = vld [vmem:[%s15 + $0x170] sm:$0xff]
        %v4516 = vld [vmem:[%s15 + $0x178] sm:$0xff]
        %v4517 = vld [vmem:[%s15 + $0x180] sm:$0xff]
        %v4518 = vld [vmem:[%s15 + $0x188] sm:$0xff]
        %v4519 = vld [vmem:[%s15 + $0x190] sm:$0xff]
        %v4520 = vld [vmem:[%s15 + $0x198] sm:$0xff]
        %v4521 = vld [vmem:[%s15 + $0x1a0] sm:$0xff]
        %v4522 = vld [vmem:[%s15 + $0x1a8] sm:$0xff]
        %v4523 = vld [vmem:[%s15 + $0x1b0] sm:$0xff]
        %v4524 = vld [vmem:[%s15 + $0x1b8] sm:$0xff]
        %v4525 = vld [vmem:[%s15 + $0x1c0] sm:$0xff]
        %v4526 = vld [vmem:[%s15 + $0x1c8] sm:$0xff]
        %v4527 = vld [vmem:[%s15 + $0x1d0] sm:$0xff]
        %v4528 = vld [vmem:[%s15 + $0x1d8] sm:$0xff]
        %v4529 = vld [vmem:[%s15 + $0x1e0] sm:$0xff]
        %v4530 = vld [vmem:[%s15 + $0x1e8] sm:$0xff]
        %v4531 = vld [vmem:[%s15 + $0x1f0] sm:$0xff]
        %v4532 = vld [vmem:[%s15 + $0x1f8] sm:$0xff]
        %4533 = vmatprep.subr.mxu0 %v4470
        %4534 = vmatpush1.msra.mxu0 %v4469
        %4535 = vmatprep.subr.mxu0 %v4472
        %4536 = vmatpush1.msra.mxu0 %v4471
        %4537 = vmatprep.subr.mxu0 %v4474
        %4538 = vmatpush1.msra.mxu0 %v4473
        %4539 = vmatprep.subr.mxu0 %v4476
        %4540 = vmatpush1.msra.mxu0 %v4475
        %4541 = vmatprep.subr.mxu0 %v4478
        %4542 = vmatpush1.msra.mxu0 %v4477
        %4543 = vmatprep.subr.mxu0 %v4480
        %4544 = vmatpush1.msra.mxu0 %v4479
        %4545 = vmatprep.subr.mxu0 %v4482
        %4546 = vmatpush1.msra.mxu0 %v4481
        %4547 = vmatprep.subr.mxu0 %v4484
        %4548 = vmatpush1.msra.mxu0 %v4483
        %4549 = vmatprep.subr.mxu0 %v4486
        %4550 = vmatpush1.msra.mxu0 %v4485
        %4551 = vmatprep.subr.mxu0 %v4488
        %4552 = vmatpush1.msra.mxu0 %v4487
        %4553 = vmatprep.subr.mxu0 %v4490
        %4554 = vmatpush1.msra.mxu0 %v4489
        %4555 = vmatprep.subr.mxu0 %v4492
        %4556 = vmatpush1.msra.mxu0 %v4491
        %4557 = vmatprep.subr.mxu0 %v4494
        %4558 = vmatpush1.msra.mxu0 %v4493
        %4559 = vmatprep.subr.mxu0 %v4496
        %4560 = vmatpush1.msra.mxu0 %v4495
        %4561 = vmatprep.subr.mxu0 %v4498
        %4562 = vmatpush1.msra.mxu0 %v4497
        %4563 = vmatprep.subr.mxu0 %v4500
        %4564 = vmatpush1.msra.mxu0 %v4499
        %4565 = vmatprep.subr.mxu0 %v4502
        %4566 = vmatpush1.msra.mxu0 %v4501
        %4567 = vmatprep.subr.mxu0 %v4504
        %4568 = vmatpush1.msra.mxu0 %v4503
        %4569 = vmatprep.subr.mxu0 %v4506
        %4570 = vmatpush1.msra.mxu0 %v4505
        %4571 = vmatprep.subr.mxu0 %v4508
        %4572 = vmatpush1.msra.mxu0 %v4507
        %4573 = vmatprep.subr.mxu0 %v4510
        %4574 = vmatpush1.msra.mxu0 %v4509
        %4575 = vmatprep.subr.mxu0 %v4512
        %4576 = vmatpush1.msra.mxu0 %v4511
        %4577 = vmatprep.subr.mxu0 %v4514
        %4578 = vmatpush1.msra.mxu0 %v4513
        %4579 = vmatprep.subr.mxu0 %v4516
        %4580 = vmatpush1.msra.mxu0 %v4515
        %4581 = vmatprep.subr.mxu0 %v4518
        %4582 = vmatpush1.msra.mxu0 %v4517
        %4583 = vmatprep.subr.mxu0 %v4520
        %4584 = vmatpush1.msra.mxu0 %v4519
        %4585 = vmatprep.subr.mxu0 %v4522
        %4586 = vmatpush1.msra.mxu0 %v4521
        %4587 = vmatprep.subr.mxu0 %v4524
        %4588 = vmatpush1.msra.mxu0 %v4523
        %4589 = vmatprep.subr.mxu0 %v4526
        %4590 = vmatpush1.msra.mxu0 %v4525
        %4591 = vmatprep.subr.mxu0 %v4528
        %4592 = vmatpush1.msra.mxu0 %v4527
        %4593 = vmatprep.subr.mxu0 %v4530
        %4594 = vmatpush1.msra.mxu0 %v4529
        %4595 = vmatprep.subr.mxu0 %v4532
        %4596 = vmatpush1.msra.mxu0 %v4531
        %4597 = vmatprep.mubr.f32.mxu0 %v4467
        %4598 = vmatmul.mubr.f32.gmra.mrb[0].mxu0 %v4465
        %v4599 = vpop.f32.mrb[0].mxu0
        %v4600 = vadd.f32 0.0, %v4599
        %v4601 = vpop.f32.mrb[0].mxu0
        %v4602 = vadd.f32 0.0, %v4601
        %4603 = vdwg.mxu0
        %v4604 = vld [vmem:[%s14] sm:$0x7f]
        %v4605 = vld [vmem:[%s14 + $0x8] sm:$0x7f]
        %v4606 = vld [vmem:[%s16] sm:$0xff]
        %v4607 = vld [vmem:[%s16 + $0x8] sm:$0xff]
        %v4608 = vld [vmem:[%s16 + $0x10] sm:$0xff]
        %v4609 = vld [vmem:[%s16 + $0x18] sm:$0xff]
        %v4610 = vld [vmem:[%s16 + $0x20] sm:$0xff]
        %v4611 = vld [vmem:[%s16 + $0x28] sm:$0xff]
        %v4612 = vld [vmem:[%s16 + $0x30] sm:$0xff]
        %v4613 = vld [vmem:[%s16 + $0x38] sm:$0xff]
        %v4614 = vld [vmem:[%s16 + $0x40] sm:$0xff]
        %v4615 = vld [vmem:[%s16 + $0x48] sm:$0xff]
        %v4616 = vld [vmem:[%s16 + $0x50] sm:$0xff]
        %v4617 = vld [vmem:[%s16 + $0x58] sm:$0xff]
        %v4618 = vld [vmem:[%s16 + $0x60] sm:$0xff]
        %v4619 = vld [vmem:[%s16 + $0x68] sm:$0xff]
        %v4620 = vld [vmem:[%s16 + $0x70] sm:$0xff]
        %v4621 = vld [vmem:[%s16 + $0x78] sm:$0xff]
        %v4622 = vld [vmem:[%s16 + $0x80] sm:$0xff]
        %v4623 = vld [vmem:[%s16 + $0x88] sm:$0xff]
        %v4624 = vld [vmem:[%s16 + $0x90] sm:$0xff]
        %v4625 = vld [vmem:[%s16 + $0x98] sm:$0xff]
        %v4626 = vld [vmem:[%s16 + $0xa0] sm:$0xff]
        %v4627 = vld [vmem:[%s16 + $0xa8] sm:$0xff]
        %v4628 = vld [vmem:[%s16 + $0xb0] sm:$0xff]
        %v4629 = vld [vmem:[%s16 + $0xb8] sm:$0xff]
        %v4630 = vld [vmem:[%s16 + $0xc0] sm:$0xff]
        %v4631 = vld [vmem:[%s16 + $0xc8] sm:$0xff]
        %v4632 = vld [vmem:[%s16 + $0xd0] sm:$0xff]
        %v4633 = vld [vmem:[%s16 + $0xd8] sm:$0xff]
        %v4634 = vld [vmem:[%s16 + $0xe0] sm:$0xff]
        %v4635 = vld [vmem:[%s16 + $0xe8] sm:$0xff]
        %v4636 = vld [vmem:[%s16 + $0xf0] sm:$0xff]
        %v4637 = vld [vmem:[%s16 + $0xf8] sm:$0xff]
        %v4638 = vld [vmem:[%s16 + $0x100] sm:$0xff]
        %v4639 = vld [vmem:[%s16 + $0x108] sm:$0xff]
        %v4640 = vld [vmem:[%s16 + $0x110] sm:$0xff]
        %v4641 = vld [vmem:[%s16 + $0x118] sm:$0xff]
        %v4642 = vld [vmem:[%s16 + $0x120] sm:$0xff]
        %v4643 = vld [vmem:[%s16 + $0x128] sm:$0xff]
        %v4644 = vld [vmem:[%s16 + $0x130] sm:$0xff]
        %v4645 = vld [vmem:[%s16 + $0x138] sm:$0xff]
        %v4646 = vld [vmem:[%s16 + $0x140] sm:$0xff]
        %v4647 = vld [vmem:[%s16 + $0x148] sm:$0xff]
        %v4648 = vld [vmem:[%s16 + $0x150] sm:$0xff]
        %v4649 = vld [vmem:[%s16 + $0x158] sm:$0xff]
        %v4650 = vld [vmem:[%s16 + $0x160] sm:$0xff]
        %v4651 = vld [vmem:[%s16 + $0x168] sm:$0xff]
        %v4652 = vld [vmem:[%s16 + $0x170] sm:$0xff]
        %v4653 = vld [vmem:[%s16 + $0x178] sm:$0xff]
        %v4654 = vld [vmem:[%s16 + $0x180] sm:$0xff]
        %v4655 = vld [vmem:[%s16 + $0x188] sm:$0xff]
        %v4656 = vld [vmem:[%s16 + $0x190] sm:$0xff]
        %v4657 = vld [vmem:[%s16 + $0x198] sm:$0xff]
        %v4658 = vld [vmem:[%s16 + $0x1a0] sm:$0xff]
        %v4659 = vld [vmem:[%s16 + $0x1a8] sm:$0xff]
        %v4660 = vld [vmem:[%s16 + $0x1b0] sm:$0xff]
        %v4661 = vld [vmem:[%s16 + $0x1b8] sm:$0xff]
        %v4662 = vld [vmem:[%s16 + $0x1c0] sm:$0xff]
        %v4663 = vld [vmem:[%s16 + $0x1c8] sm:$0xff]
        %v4664 = vld [vmem:[%s16 + $0x1d0] sm:$0xff]
        %v4665 = vld [vmem:[%s16 + $0x1d8] sm:$0xff]
        %v4666 = vld [vmem:[%s16 + $0x1e0] sm:$0xff]
        %v4667 = vld [vmem:[%s16 + $0x1e8] sm:$0xff]
        %v4668 = vld [vmem:[%s16 + $0x1f0] sm:$0xff]
        %v4669 = vld [vmem:[%s16 + $0x1f8] sm:$0xff]
        %v4670 = vlaneseq
        %v4671 = vshrl.u32 %v4670, 7
        %v4672 = vsub.s32 0, %v4671
        %v4673 = vrot.slane %v4600, %v4672
        %v4674 = vlaneseq
        %v4675 = vshrl.u32 %v4674, 7
        %v4676 = vsub.s32 0, %v4675
        %v4677 = vrot.slane %v4602, %v4676
        %4678 = vmatprep.subr.mxu0 %v4607
        %4679 = vmatpush1.msra.mxu0 %v4606
        %4680 = vmatprep.subr.mxu0 %v4609
        %4681 = vmatpush1.msra.mxu0 %v4608
        %4682 = vmatprep.subr.mxu0 %v4611
        %4683 = vmatpush1.msra.mxu0 %v4610
        %4684 = vmatprep.subr.mxu0 %v4613
        %4685 = vmatpush1.msra.mxu0 %v4612
        %4686 = vmatprep.subr.mxu0 %v4615
        %4687 = vmatpush1.msra.mxu0 %v4614
        %4688 = vmatprep.subr.mxu0 %v4617
        %4689 = vmatpush1.msra.mxu0 %v4616
        %4690 = vmatprep.subr.mxu0 %v4619
        %4691 = vmatpush1.msra.mxu0 %v4618
        %4692 = vmatprep.subr.mxu0 %v4621
        %4693 = vmatpush1.msra.mxu0 %v4620
        %4694 = vmatprep.subr.mxu0 %v4623
        %4695 = vmatpush1.msra.mxu0 %v4622
        %4696 = vmatprep.subr.mxu0 %v4625
        %4697 = vmatpush1.msra.mxu0 %v4624
        %4698 = vmatprep.subr.mxu0 %v4627
        %4699 = vmatpush1.msra.mxu0 %v4626
        %4700 = vmatprep.subr.mxu0 %v4629
        %4701 = vmatpush1.msra.mxu0 %v4628
        %4702 = vmatprep.subr.mxu0 %v4631
        %4703 = vmatpush1.msra.mxu0 %v4630
        %4704 = vmatprep.subr.mxu0 %v4633
        %4705 = vmatpush1.msra.mxu0 %v4632
        %4706 = vmatprep.subr.mxu0 %v4635
        %4707 = vmatpush1.msra.mxu0 %v4634
        %4708 = vmatprep.subr.mxu0 %v4637
        %4709 = vmatpush1.msra.mxu0 %v4636
        %4710 = vmatprep.subr.mxu0 %v4639
        %4711 = vmatpush1.msra.mxu0 %v4638
        %4712 = vmatprep.subr.mxu0 %v4641
        %4713 = vmatpush1.msra.mxu0 %v4640
        %4714 = vmatprep.subr.mxu0 %v4643
        %4715 = vmatpush1.msra.mxu0 %v4642
        %4716 = vmatprep.subr.mxu0 %v4645
        %4717 = vmatpush1.msra.mxu0 %v4644
        %4718 = vmatprep.subr.mxu0 %v4647
        %4719 = vmatpush1.msra.mxu0 %v4646
        %4720 = vmatprep.subr.mxu0 %v4649
        %4721 = vmatpush1.msra.mxu0 %v4648
        %4722 = vmatprep.subr.mxu0 %v4651
        %4723 = vmatpush1.msra.mxu0 %v4650
        %4724 = vmatprep.subr.mxu0 %v4653
        %4725 = vmatpush1.msra.mxu0 %v4652
        %4726 = vmatprep.subr.mxu0 %v4655
        %4727 = vmatpush1.msra.mxu0 %v4654
        %4728 = vmatprep.subr.mxu0 %v4657
        %4729 = vmatpush1.msra.mxu0 %v4656
        %4730 = vmatprep.subr.mxu0 %v4659
        %4731 = vmatpush1.msra.mxu0 %v4658
        %4732 = vmatprep.subr.mxu0 %v4661
        %4733 = vmatpush1.msra.mxu0 %v4660
        %4734 = vmatprep.subr.mxu0 %v4663
        %4735 = vmatpush1.msra.mxu0 %v4662
        %4736 = vmatprep.subr.mxu0 %v4665
        %4737 = vmatpush1.msra.mxu0 %v4664
        %4738 = vmatprep.subr.mxu0 %v4667
        %4739 = vmatpush1.msra.mxu0 %v4666
        %4740 = vmatprep.subr.mxu0 %v4669
        %4741 = vmatpush1.msra.mxu0 %v4668
        %4742 = vmatprep.mubr.f32.mxu0 %v4605
        %4743 = vmatmul.mubr.f32.gmra.mrb[0].mxu0 %v4604
        %v4744 = vpop.f32.mrb[0].mxu0
        %v4745 = vadd.f32 %v4673, %v4744
        %v4746 = vpop.f32.mrb[0].mxu0
        %v4747 = vadd.f32 %v4677, %v4746
        %4748 = vdwg.mxu0
        %v4749 = vld [vmem:[%s17] sm:$0x3]
        %v4751 = vlaneseq
        %v4752 = vshrl.u32 %v4751, 7
        %v4753 = vsub.s32 0, %v4752
        %v4754 = vrot.slane %v4749, %v4753
        %v4755 = vlaneseq
        %v4756 = vshrl.u32 %v4755, 7
        %v4757 = vsub.s32 1, %v4756
        %v4758 = vrot.slane %v4749, %v4757
        %v4761 = vadd.f32 %v4745, %v4754
        %v4762 = vadd.f32 %v4747, %v4758
        %4763 = vst [vmem:[%s633] sm:$0x7f] %v4761
        %4764 = vst [vmem:[%s633 + $0x8] sm:$0x7f] %v4762
        %v4765 = vld [vmem:[%s628] sm:$0xff]
        %v4766 = vld [vmem:[%s628 + $0x8] sm:$0xff]
        %v4767 = vld [vmem:[%s628 + $0x10] sm:$0xff]
        %v4768 = vld [vmem:[%s628 + $0x18] sm:$0xff]
        %v4769 = vld [vmem:[%s628 + $0x20] sm:$0xff]
        %v4770 = vld [vmem:[%s628 + $0x28] sm:$0xff]
        %v4771 = vld [vmem:[%s628 + $0x30] sm:$0xff]
        %v4772 = vld [vmem:[%s628 + $0x38] sm:$0xff]
        %v4773 = vld [vmem:[%s628 + $0x40] sm:$0xff]
        %v4774 = vld [vmem:[%s628 + $0x48] sm:$0xff]
        %v4775 = vld [vmem:[%s628 + $0x50] sm:$0xff]
        %v4776 = vld [vmem:[%s628 + $0x58] sm:$0xff]
        %v4777 = vld [vmem:[%s628 + $0x60] sm:$0xff]
        %v4778 = vld [vmem:[%s628 + $0x68] sm:$0xff]
        %v4779 = vld [vmem:[%s628 + $0x70] sm:$0xff]
        %v4780 = vld [vmem:[%s628 + $0x78] sm:$0xff]
        %v4781 = vld [vmem:[%s8] sm:$0xff]
        %v4782 = vld [vmem:[%s8 + $0x8] sm:$0xff]
        %v4783 = vld [vmem:[%s8 + $0x10] sm:$0xff]
        %v4784 = vld [vmem:[%s8 + $0x18] sm:$0xff]
        %v4785 = vld [vmem:[%s8 + $0x20] sm:$0xff]
        %v4786 = vld [vmem:[%s8 + $0x28] sm:$0xff]
        %v4787 = vld [vmem:[%s8 + $0x30] sm:$0xff]
        %v4788 = vld [vmem:[%s8 + $0x38] sm:$0xff]
        %v4789 = vld [vmem:[%s9] sm:$0xff]
        %v4790 = vld [vmem:[%s9 + $0x8] sm:$0xff]
        %v4791 = vld [vmem:[%s9 + $0x10] sm:$0xff]
        %v4792 = vld [vmem:[%s9 + $0x18] sm:$0xff]
        %v4793 = vld [vmem:[%s9 + $0x20] sm:$0xff]
        %v4794 = vld [vmem:[%s9 + $0x28] sm:$0xff]
        %v4795 = vld [vmem:[%s9 + $0x30] sm:$0xff]
        %v4796 = vld [vmem:[%s9 + $0x38] sm:$0xff]
        %v4797 = vld [vmem:[%s10] sm:$0xff]
        %v4798 = vld [vmem:[%s10 + $0x8] sm:$0xff]
        %v4799 = vld [vmem:[%s11] sm:$0xff]
        %v4800 = vld [vmem:[%s11 + $0x8] sm:$0xff]
        %v4801 = vld [vmem:[%s11 + $0x10] sm:$0xff]
        %v4802 = vld [vmem:[%s11 + $0x18] sm:$0xff]
        %v4803 = vld [vmem:[%s11 + $0x20] sm:$0xff]
        %v4804 = vld [vmem:[%s11 + $0x28] sm:$0xff]
        %v4805 = vld [vmem:[%s11 + $0x30] sm:$0xff]
        %v4806 = vld [vmem:[%s11 + $0x38] sm:$0xff]
        %vm4807 = vcmask 523264
        %v4809 = vsel %vm4807, %v4797, 0
        %v4812 = vsel %vm4807, %v4798, 0
        %4814 = vmatprep.subr.mxu0 %v4766
        %4815 = vmatpush1.msra.mxu0 %v4765
        %4816 = vmatprep.subr.mxu0 %v4768
        %4817 = vmatpush1.msra.mxu0 %v4767
        %4818 = vmatprep.subr.mxu0 %v4770
        %4819 = vmatpush1.msra.mxu0 %v4769
        %4820 = vmatprep.subr.mxu0 %v4772
        %4821 = vmatpush1.msra.mxu0 %v4771
        %4822 = vmatprep.subr.mxu0 %v4774
        %4823 = vmatpush1.msra.mxu0 %v4773
        %4824 = vmatprep.subr.mxu0 %v4776
        %4825 = vmatpush1.msra.mxu0 %v4775
        %4826 = vmatprep.subr.mxu0 %v4778
        %4827 = vmatpush1.msra.mxu0 %v4777
        %4828 = vmatprep.subr.mxu0 %v4780
        %4829 = vmatpush1.msra.mxu0 %v4779
        %4830 = vmatprep.subr.mxu0 0.0
        %4831 = vmatpush1.msra.mxu0 0.0
        %4832 = vmatprep.subr.mxu0 0.0
        %4833 = vmatpush1.msra.mxu0 0.0
        %4834 = vmatprep.subr.mxu0 0.0
        %4835 = vmatpush1.msra.mxu0 0.0
        %4836 = vmatprep.subr.mxu0 0.0
        %4837 = vmatpush1.msra.mxu0 0.0
        %4838 = vmatprep.subr.mxu0 0.0
        %4839 = vmatpush1.msra.mxu0 0.0
        %4840 = vmatprep.subr.mxu0 0.0
        %4841 = vmatpush1.msra.mxu0 0.0
        %4842 = vmatprep.subr.mxu0 0.0
        %4843 = vmatpush1.msra.mxu0 0.0
        %4844 = vmatprep.subr.mxu0 0.0
        %4845 = vmatpush1.msra.mxu0 0.0
        %4846 = vmatprep.subr.mxu0 0.0
        %4847 = vmatpush1.msra.mxu0 0.0
        %4848 = vmatprep.subr.mxu0 0.0
        %4849 = vmatpush1.msra.mxu0 0.0
        %4850 = vmatprep.subr.mxu0 0.0
        %4851 = vmatpush1.msra.mxu0 0.0
        %4852 = vmatprep.subr.mxu0 0.0
        %4853 = vmatpush1.msra.mxu0 0.0
        %4854 = vmatprep.subr.mxu0 0.0
        %4855 = vmatpush1.msra.mxu0 0.0
        %4856 = vmatprep.subr.mxu0 0.0
        %4857 = vmatpush1.msra.mxu0 0.0
        %4858 = vmatprep.subr.mxu0 0.0
        %4859 = vmatpush1.msra.mxu0 0.0
        %4860 = vmatprep.subr.mxu0 0.0
        %4861 = vmatpush1.msra.mxu0 0.0
        %4862 = vmatprep.subr.mxu0 0.0
        %4863 = vmatpush1.msra.mxu0 0.0
        %4864 = vmatprep.subr.mxu0 0.0
        %4865 = vmatpush1.msra.mxu0 0.0
        %4866 = vmatprep.subr.mxu0 0.0
        %4867 = vmatpush1.msra.mxu0 0.0
        %4868 = vmatprep.subr.mxu0 0.0
        %4869 = vmatpush1.msra.mxu0 0.0
        %4870 = vmatprep.subr.mxu0 0.0
        %4871 = vmatpush1.msra.mxu0 0.0
        %4872 = vmatprep.subr.mxu0 0.0
        %4873 = vmatpush1.msra.mxu0 0.0
        %4874 = vmatprep.subr.mxu0 0.0
        %4875 = vmatpush1.msra.mxu0 0.0
        %4876 = vmatprep.subr.mxu0 0.0
        %4877 = vmatpush1.msra.mxu0 0.0
        %4878 = vmatprep.mubr.f32.mxu0 0.0
        %4879 = vmatmul.mubr.f32.gmra.mrb[0].mxu0 %v4809
        %v4880 = vpop.f32.mrb[0].mxu0
        %v4881 = vadd.f32 0.0, %v4880
        %v4882 = vpop.f32.mrb[0].mxu0
        %v4883 = vadd.f32 0.0, %v4882
        %4884 = vmatprep.mubr.f32.mxu0 0.0
        %4885 = vmatmul.mubr.f32.gmra.mrb[0].mxu0 %v4812
        %v4886 = vpop.f32.mrb[0].mxu0
        %v4887 = vadd.f32 0.0, %v4886
        %v4888 = vpop.f32.mrb[0].mxu0
        %v4889 = vadd.f32 0.0, %v4888
        %4890 = vdwg.mxu0
        %v4891 = vadd.f32 %v4881, %v4883
        %4892 = vadd.xlane.f32.xlu0 %v4891
        %v4893 = vpop.xlane.xlu0 %4892
        %v4894 = vadd.f32 %v4887, %v4889
        %4895 = vadd.xlane.f32.xlu0 %v4894
        %v4896 = vpop.xlane.xlu0 %4895
        %v4897 = vmul.f32 %v4765, %v4765
        %v4898 = vmul.f32 %v4766, %v4766
        %v4899 = vmul.f32 %v4767, %v4767
        %v4900 = vmul.f32 %v4768, %v4768
        %v4901 = vmul.f32 %v4769, %v4769
        %v4902 = vmul.f32 %v4770, %v4770
        %v4903 = vmul.f32 %v4771, %v4771
        %v4904 = vmul.f32 %v4772, %v4772
        %v4905 = vmul.f32 %v4773, %v4773
        %v4906 = vmul.f32 %v4774, %v4774
        %v4907 = vmul.f32 %v4775, %v4775
        %v4908 = vmul.f32 %v4776, %v4776
        %v4909 = vmul.f32 %v4777, %v4777
        %v4910 = vmul.f32 %v4778, %v4778
        %v4911 = vmul.f32 %v4779, %v4779
        %v4912 = vmul.f32 %v4780, %v4780
        %4913 = vmatprep.subr.mxu0 %v4898
        %4914 = vmatpush1.msra.mxu0 %v4897
        %4915 = vmatprep.subr.mxu0 %v4900
        %4916 = vmatpush1.msra.mxu0 %v4899
        %4917 = vmatprep.subr.mxu0 %v4902
        %4918 = vmatpush1.msra.mxu0 %v4901
        %4919 = vmatprep.subr.mxu0 %v4904
        %4920 = vmatpush1.msra.mxu0 %v4903
        %4921 = vmatprep.subr.mxu0 %v4906
        %4922 = vmatpush1.msra.mxu0 %v4905
        %4923 = vmatprep.subr.mxu0 %v4908
        %4924 = vmatpush1.msra.mxu0 %v4907
        %4925 = vmatprep.subr.mxu0 %v4910
        %4926 = vmatpush1.msra.mxu0 %v4909
        %4927 = vmatprep.subr.mxu0 %v4912
        %4928 = vmatpush1.msra.mxu0 %v4911
        %4929 = vmatprep.subr.mxu0 0.0
        %4930 = vmatpush1.msra.mxu0 0.0
        %4931 = vmatprep.subr.mxu0 0.0
        %4932 = vmatpush1.msra.mxu0 0.0
        %4933 = vmatprep.subr.mxu0 0.0
        %4934 = vmatpush1.msra.mxu0 0.0
        %4935 = vmatprep.subr.mxu0 0.0
        %4936 = vmatpush1.msra.mxu0 0.0
        %4937 = vmatprep.subr.mxu0 0.0
        %4938 = vmatpush1.msra.mxu0 0.0
        %4939 = vmatprep.subr.mxu0 0.0
        %4940 = vmatpush1.msra.mxu0 0.0
        %4941 = vmatprep.subr.mxu0 0.0
        %4942 = vmatpush1.msra.mxu0 0.0
        %4943 = vmatprep.subr.mxu0 0.0
        %4944 = vmatpush1.msra.mxu0 0.0
        %4945 = vmatprep.subr.mxu0 0.0
        %4946 = vmatpush1.msra.mxu0 0.0
        %4947 = vmatprep.subr.mxu0 0.0
        %4948 = vmatpush1.msra.mxu0 0.0
        %4949 = vmatprep.subr.mxu0 0.0
        %4950 = vmatpush1.msra.mxu0 0.0
        %4951 = vmatprep.subr.mxu0 0.0
        %4952 = vmatpush1.msra.mxu0 0.0
        %4953 = vmatprep.subr.mxu0 0.0
        %4954 = vmatpush1.msra.mxu0 0.0
        %4955 = vmatprep.subr.mxu0 0.0
        %4956 = vmatpush1.msra.mxu0 0.0
        %4957 = vmatprep.subr.mxu0 0.0
        %4958 = vmatpush1.msra.mxu0 0.0
        %4959 = vmatprep.subr.mxu0 0.0
        %4960 = vmatpush1.msra.mxu0 0.0
        %4961 = vmatprep.subr.mxu0 0.0
        %4962 = vmatpush1.msra.mxu0 0.0
        %4963 = vmatprep.subr.mxu0 0.0
        %4964 = vmatpush1.msra.mxu0 0.0
        %4965 = vmatprep.subr.mxu0 0.0
        %4966 = vmatpush1.msra.mxu0 0.0
        %4967 = vmatprep.subr.mxu0 0.0
        %4968 = vmatpush1.msra.mxu0 0.0
        %4969 = vmatprep.subr.mxu0 0.0
        %4970 = vmatpush1.msra.mxu0 0.0
        %4971 = vmatprep.subr.mxu0 0.0
        %4972 = vmatpush1.msra.mxu0 0.0
        %4973 = vmatprep.subr.mxu0 0.0
        %4974 = vmatpush1.msra.mxu0 0.0
        %4975 = vmatprep.subr.mxu0 0.0
        %4976 = vmatpush1.msra.mxu0 0.0
        %4977 = vmatprep.mubr.f32.mxu0 0.0
        %4978 = vmatmul.mubr.f32.gmra.mrb[0].mxu0 %v4809
        %v4979 = vpop.f32.mrb[0].mxu0
        %v4980 = vadd.f32 0.0, %v4979
        %v4981 = vpop.f32.mrb[0].mxu0
        %v4982 = vadd.f32 0.0, %v4981
        %4983 = vmatprep.mubr.f32.mxu0 0.0
        %4984 = vmatmul.mubr.f32.gmra.mrb[0].mxu0 %v4812
        %v4985 = vpop.f32.mrb[0].mxu0
        %v4986 = vadd.f32 0.0, %v4985
        %v4987 = vpop.f32.mrb[0].mxu0
        %v4988 = vadd.f32 0.0, %v4987
        %4989 = vdwg.mxu0
        %v4990 = vadd.f32 %v4980, %v4982
        %4991 = vadd.xlane.f32.xlu0 %v4990
        %v4992 = vpop.xlane.xlu0 %4991
        %v4993 = vadd.f32 %v4986, %v4988
        %4994 = vadd.xlane.f32.xlu0 %v4993
        %v4995 = vpop.xlane.xlu0 %4994
        %v4996 = vrcp.pop 1024.0
        %v4997 = vmul.f32 %v4893, %v4996
        %v4998 = vmul.f32 %v4896, %v4996
        %v4999 = vmul.f32 %v4992, %v4996
        %v5000 = vmul.f32 %v4995, %v4996
        %v5001 = vmul.f32 %v4997, %v4997
        %v5002 = vmul.f32 %v4998, %v4998
        %v5003 = vsub.f32 %v4999, %v5001
        %v5004 = vsub.f32 %v5000, %v5002
        %v5005 = vadd.f32 %v5003, 1e-05
        %v5006 = vadd.f32 %v5004, 1e-05
        %v5007 = vrsqrt.pop %v5005
        %v5008 = vrsqrt.pop %v5006
        %v5010 = vsel %vm1048, %v4799, 0
        %v5013 = vsel %vm1048, %v4800, 0
        %v5016 = vsel %vm1048, %v4801, 0
        %v5019 = vsel %vm1048, %v4802, 0
        %v5022 = vsel %vm1048, %v4803, 0
        %v5025 = vsel %vm1048, %v4804, 0
        %v5028 = vsel %vm1048, %v4805, 0
        %v5031 = vsel %vm1048, %v4806, 0
        %5033 = vmatprep.subr.mxu0 0.0
        %5034 = vmatpush1.msra.mxu0 %v4997
        %5035 = vmatprep.subr.mxu0 0.0
        %5036 = vmatpush1.msra.mxu0 %v4998
        %5037 = vmatprep.subr.mxu0 0.0
        %5038 = vmatpush1.msra.mxu0 0.0
        %5039 = vmatprep.subr.mxu0 0.0
        %5040 = vmatpush1.msra.mxu0 0.0
        %5041 = vmatprep.subr.mxu0 0.0
        %5042 = vmatpush1.msra.mxu0 0.0
        %5043 = vmatprep.subr.mxu0 0.0
        %5044 = vmatpush1.msra.mxu0 0.0
        %5045 = vmatprep.subr.mxu0 0.0
        %5046 = vmatpush1.msra.mxu0 0.0
        %5047 = vmatprep.subr.mxu0 0.0
        %5048 = vmatpush1.msra.mxu0 0.0
        %5049 = vmatprep.subr.mxu0 0.0
        %5050 = vmatpush1.msra.mxu0 0.0
        %5051 = vmatprep.subr.mxu0 0.0
        %5052 = vmatpush1.msra.mxu0 0.0
        %5053 = vmatprep.subr.mxu0 0.0
        %5054 = vmatpush1.msra.mxu0 0.0
        %5055 = vmatprep.subr.mxu0 0.0
        %5056 = vmatpush1.msra.mxu0 0.0
        %5057 = vmatprep.subr.mxu0 0.0
        %5058 = vmatpush1.msra.mxu0 0.0
        %5059 = vmatprep.subr.mxu0 0.0
        %5060 = vmatpush1.msra.mxu0 0.0
        %5061 = vmatprep.subr.mxu0 0.0
        %5062 = vmatpush1.msra.mxu0 0.0
        %5063 = vmatprep.subr.mxu0 0.0
        %5064 = vmatpush1.msra.mxu0 0.0
        %5065 = vmatprep.subr.mxu0 0.0
        %5066 = vmatpush1.msra.mxu0 0.0
        %5067 = vmatprep.subr.mxu0 0.0
        %5068 = vmatpush1.msra.mxu0 0.0
        %5069 = vmatprep.subr.mxu0 0.0
        %5070 = vmatpush1.msra.mxu0 0.0
        %5071 = vmatprep.subr.mxu0 0.0
        %5072 = vmatpush1.msra.mxu0 0.0
        %5073 = vmatprep.subr.mxu0 0.0
        %5074 = vmatpush1.msra.mxu0 0.0
        %5075 = vmatprep.subr.mxu0 0.0
        %5076 = vmatpush1.msra.mxu0 0.0
        %5077 = vmatprep.subr.mxu0 0.0
        %5078 = vmatpush1.msra.mxu0 0.0
        %5079 = vmatprep.subr.mxu0 0.0
        %5080 = vmatpush1.msra.mxu0 0.0
        %5081 = vmatprep.subr.mxu0 0.0
        %5082 = vmatpush1.msra.mxu0 0.0
        %5083 = vmatprep.subr.mxu0 0.0
        %5084 = vmatpush1.msra.mxu0 0.0
        %5085 = vmatprep.subr.mxu0 0.0
        %5086 = vmatpush1.msra.mxu0 0.0
        %5087 = vmatprep.subr.mxu0 0.0
        %5088 = vmatpush1.msra.mxu0 0.0
        %5089 = vmatprep.subr.mxu0 0.0
        %5090 = vmatpush1.msra.mxu0 0.0
        %5091 = vmatprep.subr.mxu0 0.0
        %5092 = vmatpush1.msra.mxu0 0.0
        %5093 = vmatprep.subr.mxu0 0.0
        %5094 = vmatpush1.msra.mxu0 0.0
        %5095 = vmatprep.subr.mxu0 0.0
        %5096 = vmatpush1.msra.mxu0 0.0
        %5097 = vmatprep.mubr.f32.mxu0 0.0
        %5098 = vmatmul.mubr.f32.gmra.mrb[0].mxu0 %v5010
        %v5099 = vpop.f32.mrb[0].mxu0
        %v5100 = vadd.f32 0.0, %v5099
        %v5101 = vpop.f32.mrb[0].mxu0
        %5102 = vmatprep.mubr.f32.mxu0 0.0
        %5103 = vmatmul.mubr.f32.gmra.mrb[0].mxu0 %v5013
        %v5104 = vpop.f32.mrb[0].mxu0
        %v5105 = vadd.f32 0.0, %v5104
        %v5106 = vpop.f32.mrb[0].mxu0
        %5107 = vmatprep.mubr.f32.mxu0 0.0
        %5108 = vmatmul.mubr.f32.gmra.mrb[0].mxu0 %v5016
        %v5109 = vpop.f32.mrb[0].mxu0
        %v5110 = vadd.f32 0.0, %v5109
        %v5111 = vpop.f32.mrb[0].mxu0
        %5112 = vmatprep.mubr.f32.mxu0 0.0
        %5113 = vmatmul.mubr.f32.gmra.mrb[0].mxu0 %v5019
        %v5114 = vpop.f32.mrb[0].mxu0
        %v5115 = vadd.f32 0.0, %v5114
        %v5116 = vpop.f32.mrb[0].mxu0
        %5117 = vmatprep.mubr.f32.mxu0 0.0
        %5118 = vmatmul.mubr.f32.gmra.mrb[0].mxu0 %v5022
        %v5119 = vpop.f32.mrb[0].mxu0
        %v5120 = vadd.f32 0.0, %v5119
        %v5121 = vpop.f32.mrb[0].mxu0
        %5122 = vmatprep.mubr.f32.mxu0 0.0
        %5123 = vmatmul.mubr.f32.gmra.mrb[0].mxu0 %v5025
        %v5124 = vpop.f32.mrb[0].mxu0
        %v5125 = vadd.f32 0.0, %v5124
        %v5126 = vpop.f32.mrb[0].mxu0
        %5127 = vmatprep.mubr.f32.mxu0 0.0
        %5128 = vmatmul.mubr.f32.gmra.mrb[0].mxu0 %v5028
        %v5129 = vpop.f32.mrb[0].mxu0
        %v5130 = vadd.f32 0.0, %v5129
        %v5131 = vpop.f32.mrb[0].mxu0
        %5132 = vmatprep.mubr.f32.mxu0 0.0
        %5133 = vmatmul.mubr.f32.gmra.mrb[0].mxu0 %v5031
        %v5134 = vpop.f32.mrb[0].mxu0
        %v5135 = vadd.f32 0.0, %v5134
        %v5136 = vpop.f32.mrb[0].mxu0
        %5137 = vdwg.mxu0
        %5138 = vmatprep.subr.mxu0 0.0
        %5139 = vmatpush1.msra.mxu0 %v5007
        %5140 = vmatprep.subr.mxu0 0.0
        %5141 = vmatpush1.msra.mxu0 %v5008
        %5142 = vmatprep.subr.mxu0 0.0
        %5143 = vmatpush1.msra.mxu0 0.0
        %5144 = vmatprep.subr.mxu0 0.0
        %5145 = vmatpush1.msra.mxu0 0.0
        %5146 = vmatprep.subr.mxu0 0.0
        %5147 = vmatpush1.msra.mxu0 0.0
        %5148 = vmatprep.subr.mxu0 0.0
        %5149 = vmatpush1.msra.mxu0 0.0
        %5150 = vmatprep.subr.mxu0 0.0
        %5151 = vmatpush1.msra.mxu0 0.0
        %5152 = vmatprep.subr.mxu0 0.0
        %5153 = vmatpush1.msra.mxu0 0.0
        %5154 = vmatprep.subr.mxu0 0.0
        %5155 = vmatpush1.msra.mxu0 0.0
        %5156 = vmatprep.subr.mxu0 0.0
        %5157 = vmatpush1.msra.mxu0 0.0
        %5158 = vmatprep.subr.mxu0 0.0
        %5159 = vmatpush1.msra.mxu0 0.0
        %5160 = vmatprep.subr.mxu0 0.0
        %5161 = vmatpush1.msra.mxu0 0.0
        %5162 = vmatprep.subr.mxu0 0.0
        %5163 = vmatpush1.msra.mxu0 0.0
        %5164 = vmatprep.subr.mxu0 0.0
        %5165 = vmatpush1.msra.mxu0 0.0
        %5166 = vmatprep.subr.mxu0 0.0
        %5167 = vmatpush1.msra.mxu0 0.0
        %5168 = vmatprep.subr.mxu0 0.0
        %5169 = vmatpush1.msra.mxu0 0.0
        %5170 = vmatprep.subr.mxu0 0.0
        %5171 = vmatpush1.msra.mxu0 0.0
        %5172 = vmatprep.subr.mxu0 0.0
        %5173 = vmatpush1.msra.mxu0 0.0
        %5174 = vmatprep.subr.mxu0 0.0
        %5175 = vmatpush1.msra.mxu0 0.0
        %5176 = vmatprep.subr.mxu0 0.0
        %5177 = vmatpush1.msra.mxu0 0.0
        %5178 = vmatprep.subr.mxu0 0.0
        %5179 = vmatpush1.msra.mxu0 0.0
        %5180 = vmatprep.subr.mxu0 0.0
        %5181 = vmatpush1.msra.mxu0 0.0
        %5182 = vmatprep.subr.mxu0 0.0
        %5183 = vmatpush1.msra.mxu0 0.0
        %5184 = vmatprep.subr.mxu0 0.0
        %5185 = vmatpush1.msra.mxu0 0.0
        %5186 = vmatprep.subr.mxu0 0.0
        %5187 = vmatpush1.msra.mxu0 0.0
        %5188 = vmatprep.subr.mxu0 0.0
        %5189 = vmatpush1.msra.mxu0 0.0
        %5190 = vmatprep.subr.mxu0 0.0
        %5191 = vmatpush1.msra.mxu0 0.0
        %5192 = vmatprep.subr.mxu0 0.0
        %5193 = vmatpush1.msra.mxu0 0.0
        %5194 = vmatprep.subr.mxu0 0.0
        %5195 = vmatpush1.msra.mxu0 0.0
        %5196 = vmatprep.subr.mxu0 0.0
        %5197 = vmatpush1.msra.mxu0 0.0
        %5198 = vmatprep.subr.mxu0 0.0
        %5199 = vmatpush1.msra.mxu0 0.0
        %5200 = vmatprep.subr.mxu0 0.0
        %5201 = vmatpush1.msra.mxu0 0.0
        %5202 = vmatprep.mubr.f32.mxu0 0.0
        %5203 = vmatmul.mubr.f32.gmra.mrb[0].mxu0 %v5010
        %v5204 = vpop.f32.mrb[0].mxu0
        %v5205 = vadd.f32 0.0, %v5204
        %v5206 = vpop.f32.mrb[0].mxu0
        %5207 = vmatprep.mubr.f32.mxu0 0.0
        %5208 = vmatmul.mubr.f32.gmra.mrb[0].mxu0 %v5013
        %v5209 = vpop.f32.mrb[0].mxu0
        %v5210 = vadd.f32 0.0, %v5209
        %v5211 = vpop.f32.mrb[0].mxu0
        %5212 = vmatprep.mubr.f32.mxu0 0.0
        %5213 = vmatmul.mubr.f32.gmra.mrb[0].mxu0 %v5016
        %v5214 = vpop.f32.mrb[0].mxu0
        %v5215 = vadd.f32 0.0, %v5214
        %v5216 = vpop.f32.mrb[0].mxu0
        %5217 = vmatprep.mubr.f32.mxu0 0.0
        %5218 = vmatmul.mubr.f32.gmra.mrb[0].mxu0 %v5019
        %v5219 = vpop.f32.mrb[0].mxu0
        %v5220 = vadd.f32 0.0, %v5219
        %v5221 = vpop.f32.mrb[0].mxu0
        %5222 = vmatprep.mubr.f32.mxu0 0.0
        %5223 = vmatmul.mubr.f32.gmra.mrb[0].mxu0 %v5022
        %v5224 = vpop.f32.mrb[0].mxu0
        %v5225 = vadd.f32 0.0, %v5224
        %v5226 = vpop.f32.mrb[0].mxu0
        %5227 = vmatprep.mubr.f32.mxu0 0.0
        %5228 = vmatmul.mubr.f32.gmra.mrb[0].mxu0 %v5025
        %v5229 = vpop.f32.mrb[0].mxu0
        %v5230 = vadd.f32 0.0, %v5229
        %v5231 = vpop.f32.mrb[0].mxu0
        %5232 = vmatprep.mubr.f32.mxu0 0.0
        %5233 = vmatmul.mubr.f32.gmra.mrb[0].mxu0 %v5028
        %v5234 = vpop.f32.mrb[0].mxu0
        %v5235 = vadd.f32 0.0, %v5234
        %v5236 = vpop.f32.mrb[0].mxu0
        %5237 = vmatprep.mubr.f32.mxu0 0.0
        %5238 = vmatmul.mubr.f32.gmra.mrb[0].mxu0 %v5031
        %v5239 = vpop.f32.mrb[0].mxu0
        %v5240 = vadd.f32 0.0, %v5239
        %v5241 = vpop.f32.mrb[0].mxu0
        %5242 = vdwg.mxu0
        %5244 = vset.pattern.permute.xlu0 0
        %5245 = vperm.xlu0 %5244, %v5100
        %v5246 = vpop.permute.xlu0 %5245
        %5249 = vset.pattern.permute.xlu0 0
        %5250 = vperm.xlu0 %5249, %v5105
        %v5251 = vpop.permute.xlu0 %5250
        %5254 = vset.pattern.permute.xlu0 0
        %5255 = vperm.xlu0 %5254, %v5110
        %v5256 = vpop.permute.xlu0 %5255
        %5259 = vset.pattern.permute.xlu0 0
        %5260 = vperm.xlu0 %5259, %v5115
        %v5261 = vpop.permute.xlu0 %5260
        %5264 = vset.pattern.permute.xlu0 0
        %5265 = vperm.xlu0 %5264, %v5120
        %v5266 = vpop.permute.xlu0 %5265
        %5269 = vset.pattern.permute.xlu0 0
        %5270 = vperm.xlu0 %5269, %v5125
        %v5271 = vpop.permute.xlu0 %5270
        %5274 = vset.pattern.permute.xlu0 0
        %5275 = vperm.xlu0 %5274, %v5130
        %v5276 = vpop.permute.xlu0 %5275
        %5279 = vset.pattern.permute.xlu0 0
        %5280 = vperm.xlu0 %5279, %v5135
        %v5281 = vpop.permute.xlu0 %5280
        %v5283 = vsub.f32 %v4765, %v5246
        %v5284 = vsub.f32 %v4766, %v5246
        %v5285 = vsub.f32 %v4767, %v5251
        %v5286 = vsub.f32 %v4768, %v5251
        %v5287 = vsub.f32 %v4769, %v5256
        %v5288 = vsub.f32 %v4770, %v5256
        %v5289 = vsub.f32 %v4771, %v5261
        %v5290 = vsub.f32 %v4772, %v5261
        %v5291 = vsub.f32 %v4773, %v5266
        %v5292 = vsub.f32 %v4774, %v5266
        %v5293 = vsub.f32 %v4775, %v5271
        %v5294 = vsub.f32 %v4776, %v5271
        %v5295 = vsub.f32 %v4777, %v5276
        %v5296 = vsub.f32 %v4778, %v5276
        %v5297 = vsub.f32 %v4779, %v5281
        %v5298 = vsub.f32 %v4780, %v5281
        %5300 = vset.pattern.permute.xlu0 0
        %5301 = vperm.xlu0 %5300, %v5205
        %v5302 = vpop.permute.xlu0 %5301
        %5305 = vset.pattern.permute.xlu0 0
        %5306 = vperm.xlu0 %5305, %v5210
        %v5307 = vpop.permute.xlu0 %5306
        %5310 = vset.pattern.permute.xlu0 0
        %5311 = vperm.xlu0 %5310, %v5215
        %v5312 = vpop.permute.xlu0 %5311
        %5315 = vset.pattern.permute.xlu0 0
        %5316 = vperm.xlu0 %5315, %v5220
        %v5317 = vpop.permute.xlu0 %5316
        %5320 = vset.pattern.permute.xlu0 0
        %5321 = vperm.xlu0 %5320, %v5225
        %v5322 = vpop.permute.xlu0 %5321
        %5325 = vset.pattern.permute.xlu0 0
        %5326 = vperm.xlu0 %5325, %v5230
        %v5327 = vpop.permute.xlu0 %5326
        %5330 = vset.pattern.permute.xlu0 0
        %5331 = vperm.xlu0 %5330, %v5235
        %v5332 = vpop.permute.xlu0 %5331
        %5335 = vset.pattern.permute.xlu0 0
        %5336 = vperm.xlu0 %5335, %v5240
        %v5337 = vpop.permute.xlu0 %5336
        %v5339 = vmul.f32 %v5283, %v5302
        %v5340 = vmul.f32 %v5284, %v5302
        %v5341 = vmul.f32 %v5285, %v5307
        %v5342 = vmul.f32 %v5286, %v5307
        %v5343 = vmul.f32 %v5287, %v5312
        %v5344 = vmul.f32 %v5288, %v5312
        %v5345 = vmul.f32 %v5289, %v5317
        %v5346 = vmul.f32 %v5290, %v5317
        %v5347 = vmul.f32 %v5291, %v5322
        %v5348 = vmul.f32 %v5292, %v5322
        %v5349 = vmul.f32 %v5293, %v5327
        %v5350 = vmul.f32 %v5294, %v5327
        %v5351 = vmul.f32 %v5295, %v5332
        %v5352 = vmul.f32 %v5296, %v5332
        %v5353 = vmul.f32 %v5297, %v5337
        %v5354 = vmul.f32 %v5298, %v5337
        %5356 = vset.pattern.permute.xlu0 0
        %5357 = vperm.xlu0 %5356, %v4781
        %v5358 = vpop.permute.xlu0 %5357
        %5361 = vset.pattern.permute.xlu0 0
        %5362 = vperm.xlu0 %5361, %v4782
        %v5363 = vpop.permute.xlu0 %5362
        %5366 = vset.pattern.permute.xlu0 0
        %5367 = vperm.xlu0 %5366, %v4783
        %v5368 = vpop.permute.xlu0 %5367
        %5371 = vset.pattern.permute.xlu0 0
        %5372 = vperm.xlu0 %5371, %v4784
        %v5373 = vpop.permute.xlu0 %5372
        %5376 = vset.pattern.permute.xlu0 0
        %5377 = vperm.xlu0 %5376, %v4785
        %v5378 = vpop.permute.xlu0 %5377
        %5381 = vset.pattern.permute.xlu0 0
        %5382 = vperm.xlu0 %5381, %v4786
        %v5383 = vpop.permute.xlu0 %5382
        %5386 = vset.pattern.permute.xlu0 0
        %5387 = vperm.xlu0 %5386, %v4787
        %v5388 = vpop.permute.xlu0 %5387
        %5391 = vset.pattern.permute.xlu0 0
        %5392 = vperm.xlu0 %5391, %v4788
        %v5393 = vpop.permute.xlu0 %5392
        %v5395 = vmul.f32 %v5339, %v5358
        %v5396 = vmul.f32 %v5340, %v5358
        %v5397 = vmul.f32 %v5341, %v5363
        %v5398 = vmul.f32 %v5342, %v5363
        %v5399 = vmul.f32 %v5343, %v5368
        %v5400 = vmul.f32 %v5344, %v5368
        %v5401 = vmul.f32 %v5345, %v5373
        %v5402 = vmul.f32 %v5346, %v5373
        %v5403 = vmul.f32 %v5347, %v5378
        %v5404 = vmul.f32 %v5348, %v5378
        %v5405 = vmul.f32 %v5349, %v5383
        %v5406 = vmul.f32 %v5350, %v5383
        %v5407 = vmul.f32 %v5351, %v5388
        %v5408 = vmul.f32 %v5352, %v5388
        %v5409 = vmul.f32 %v5353, %v5393
        %v5410 = vmul.f32 %v5354, %v5393
        %5412 = vset.pattern.permute.xlu0 0
        %5413 = vperm.xlu0 %5412, %v4789
        %v5414 = vpop.permute.xlu0 %5413
        %5417 = vset.pattern.permute.xlu0 0
        %5418 = vperm.xlu0 %5417, %v4790
        %v5419 = vpop.permute.xlu0 %5418
        %5422 = vset.pattern.permute.xlu0 0
        %5423 = vperm.xlu0 %5422, %v4791
        %v5424 = vpop.permute.xlu0 %5423
        %5427 = vset.pattern.permute.xlu0 0
        %5428 = vperm.xlu0 %5427, %v4792
        %v5429 = vpop.permute.xlu0 %5428
        %5432 = vset.pattern.permute.xlu0 0
        %5433 = vperm.xlu0 %5432, %v4793
        %v5434 = vpop.permute.xlu0 %5433
        %5437 = vset.pattern.permute.xlu0 0
        %5438 = vperm.xlu0 %5437, %v4794
        %v5439 = vpop.permute.xlu0 %5438
        %5442 = vset.pattern.permute.xlu0 0
        %5443 = vperm.xlu0 %5442, %v4795
        %v5444 = vpop.permute.xlu0 %5443
        %5447 = vset.pattern.permute.xlu0 0
        %5448 = vperm.xlu0 %5447, %v4796
        %v5449 = vpop.permute.xlu0 %5448
        %v5451 = vadd.f32 %v5395, %v5414
        %v5452 = vadd.f32 %v5396, %v5414
        %v5453 = vadd.f32 %v5397, %v5419
        %v5454 = vadd.f32 %v5398, %v5419
        %v5455 = vadd.f32 %v5399, %v5424
        %v5456 = vadd.f32 %v5400, %v5424
        %v5457 = vadd.f32 %v5401, %v5429
        %v5458 = vadd.f32 %v5402, %v5429
        %v5459 = vadd.f32 %v5403, %v5434
        %v5460 = vadd.f32 %v5404, %v5434
        %v5461 = vadd.f32 %v5405, %v5439
        %v5462 = vadd.f32 %v5406, %v5439
        %v5463 = vadd.f32 %v5407, %v5444
        %v5464 = vadd.f32 %v5408, %v5444
        %v5465 = vadd.f32 %v5409, %v5449
        %v5466 = vadd.f32 %v5410, %v5449
        %v5467 = vmax.f32 %v5451, 0.0
        %v5468 = vmax.f32 %v5452, 0.0
        %v5469 = vmax.f32 %v5453, 0.0
        %v5470 = vmax.f32 %v5454, 0.0
        %v5471 = vmax.f32 %v5455, 0.0
        %v5472 = vmax.f32 %v5456, 0.0
        %v5473 = vmax.f32 %v5457, 0.0
        %v5474 = vmax.f32 %v5458, 0.0
        %v5475 = vmax.f32 %v5459, 0.0
        %v5476 = vmax.f32 %v5460, 0.0
        %v5477 = vmax.f32 %v5461, 0.0
        %v5478 = vmax.f32 %v5462, 0.0
        %v5479 = vmax.f32 %v5463, 0.0
        %v5480 = vmax.f32 %v5464, 0.0
        %v5481 = vmax.f32 %v5465, 0.0
        %v5482 = vmax.f32 %v5466, 0.0
        %v5483 = vld [vmem:[%s12] sm:$0xff]
        %v5484 = vld [vmem:[%s13] sm:$0xff]
        %5486 = vset.pattern.permute.xlu0 0
        %5487 = vperm.xlu0 %5486, %v5484
        %v5488 = vpop.permute.xlu0 %5487
        %v5491 = vsel %vm4807, %v5483, 0
        %5493 = vmatprep.subr.mxu0 %v5468
        %5494 = vmatpush1.msra.mxu0 %v5467
        %5495 = vmatprep.subr.mxu0 %v5470
        %5496 = vmatpush1.msra.mxu0 %v5469
        %5497 = vmatprep.subr.mxu0 %v5472
        %5498 = vmatpush1.msra.mxu0 %v5471
        %5499 = vmatprep.subr.mxu0 %v5474
        %5500 = vmatpush1.msra.mxu0 %v5473
        %5501 = vmatprep.subr.mxu0 %v5476
        %5502 = vmatpush1.msra.mxu0 %v5475
        %5503 = vmatprep.subr.mxu0 %v5478
        %5504 = vmatpush1.msra.mxu0 %v5477
        %5505 = vmatprep.subr.mxu0 %v5480
        %5506 = vmatpush1.msra.mxu0 %v5479
        %5507 = vmatprep.subr.mxu0 %v5482
        %5508 = vmatpush1.msra.mxu0 %v5481
        %5509 = vmatprep.subr.mxu0 0.0
        %5510 = vmatpush1.msra.mxu0 0.0
        %5511 = vmatprep.subr.mxu0 0.0
        %5512 = vmatpush1.msra.mxu0 0.0
        %5513 = vmatprep.subr.mxu0 0.0
        %5514 = vmatpush1.msra.mxu0 0.0
        %5515 = vmatprep.subr.mxu0 0.0
        %5516 = vmatpush1.msra.mxu0 0.0
        %5517 = vmatprep.subr.mxu0 0.0
        %5518 = vmatpush1.msra.mxu0 0.0
        %5519 = vmatprep.subr.mxu0 0.0
        %5520 = vmatpush1.msra.mxu0 0.0
        %5521 = vmatprep.subr.mxu0 0.0
        %5522 = vmatpush1.msra.mxu0 0.0
        %5523 = vmatprep.subr.mxu0 0.0
        %5524 = vmatpush1.msra.mxu0 0.0
        %5525 = vmatprep.subr.mxu0 0.0
        %5526 = vmatpush1.msra.mxu0 0.0
        %5527 = vmatprep.subr.mxu0 0.0
        %5528 = vmatpush1.msra.mxu0 0.0
        %5529 = vmatprep.subr.mxu0 0.0
        %5530 = vmatpush1.msra.mxu0 0.0
        %5531 = vmatprep.subr.mxu0 0.0
        %5532 = vmatpush1.msra.mxu0 0.0
        %5533 = vmatprep.subr.mxu0 0.0
        %5534 = vmatpush1.msra.mxu0 0.0
        %5535 = vmatprep.subr.mxu0 0.0
        %5536 = vmatpush1.msra.mxu0 0.0
        %5537 = vmatprep.subr.mxu0 0.0
        %5538 = vmatpush1.msra.mxu0 0.0
        %5539 = vmatprep.subr.mxu0 0.0
        %5540 = vmatpush1.msra.mxu0 0.0
        %5541 = vmatprep.subr.mxu0 0.0
        %5542 = vmatpush1.msra.mxu0 0.0
        %5543 = vmatprep.subr.mxu0 0.0
        %5544 = vmatpush1.msra.mxu0 0.0
        %5545 = vmatprep.subr.mxu0 0.0
        %5546 = vmatpush1.msra.mxu0 0.0
        %5547 = vmatprep.subr.mxu0 0.0
        %5548 = vmatpush1.msra.mxu0 0.0
        %5549 = vmatprep.subr.mxu0 0.0
        %5550 = vmatpush1.msra.mxu0 0.0
        %5551 = vmatprep.subr.mxu0 0.0
        %5552 = vmatpush1.msra.mxu0 0.0
        %5553 = vmatprep.subr.mxu0 0.0
        %5554 = vmatpush1.msra.mxu0 0.0
        %5555 = vmatprep.subr.mxu0 0.0
        %5556 = vmatpush1.msra.mxu0 0.0
        %5557 = vmatprep.mubr.f32.mxu0 0.0
        %5558 = vmatmul.mubr.f32.gmra.mrb[0].mxu0 %v5491
        %v5559 = vpop.f32.mrb[0].mxu0
        %v5560 = vadd.f32 %v5488, %v5559
        %v5561 = vpop.f32.mrb[0].mxu0
        %v5562 = vadd.f32 %v5488, %v5561
        %5563 = vdwg.mxu0
        %5564 = vst [vmem:[%s611] sm:$0xff] %v5560
        %5565 = vst [vmem:[%s611 + $0x8] sm:$0xff] %v5562
        %s5566 = sand.u32 %s430, 1
        %s5567 = scalar_lea.sflag [#allocation3], %s5566
        %s5568 = sand.u32 %s430, 1
        %s5569 = smul.addr %s5568, 16
        %s5570 = scalar_lea.vmem [#allocation2], %s5569
        %p5571 = scmp.lt.s32.totalorder %s34, 1
        %s5572 = scalar_select %p5571, %s34, 1
        %s5573 = smul.addr %s5572, 2
        %s5574 = smul.addr %s5573, 8
        %s5575 = scalar_lea.vmem %s19, %s5574
        // Predicated region
        $region93: #{tpu_custom_call.1} parent=91 // pred_check
          %p5576 = pneg %p440
        $region94: #{tpu_custom_call.1} parent=91 // pred_check_branch
          %5578 = sbr.rel (%p5576) target = $region96
        $region95: #{tpu_custom_call.1} parent=91 // pred_region
          %s5580 = ssub.s32 256, 256
          %5581 = vsyncadd %s5567, %s5580
          %s5582 = smul.addr %s34, 2
          %s5583 = smul.addr %s5582, 128
          %s5584 = scalar_lea.hbm %s18, %s5583
          %s5586 = sshll.u32 %s5570, 4
          %s5587 = int_to_ptr.vmem [resolvable:$true] %s5586
          %5589 = dma.vmem_to_hbm [thread:$0]  %s5587, 256, %s5584, %s5567
        $region96: #{tpu_custom_call.1} parent=91 // pred_fallthru
          _
        // Predicated region
        $region97: #{tpu_custom_call.1} parent=91 // pred_check
          %p5590 = pneg %p466
        $region98: #{tpu_custom_call.1} parent=91 // pred_check_branch
          %5592 = sbr.rel (%p5590) target = $region100
        $region99: #{tpu_custom_call.1} parent=91 // pred_region
          _
        $region100: #{tpu_custom_call.1} parent=91 // pred_fallthru
          _
      $region92: #{tpu_custom_call.1} parent=5 // pred_fallthru
        _
      %p5593 = scmp.le.s32.totalorder 2, %s29
      // Predicated region
      $region101: #{tpu_custom_call.1} parent=5 // pred_check
        %p5594 = pneg %p5593
      $region102: #{tpu_custom_call.1} parent=5 // pred_check_branch
        %5596 = sbr.rel (%p5594) target = $region104
      $region103: #{tpu_custom_call.1} parent=5 // pred_region
        %s5597 = ssub.s32 %s29, 2
        // Predicated region
        $region105: #{tpu_custom_call.1} parent=103 // pred_check
          %p5598 = pneg %p446
        $region106: #{tpu_custom_call.1} parent=103 // pred_check_branch
          %5600 = sbr.rel (%p5598) target = $region108
        $region107: #{tpu_custom_call.1} parent=103 // pred_region
          %s5601 = sand.u32 %s431, 1
          %s5602 = scalar_lea.sflag [#allocation3], %s5601
          %s5603 = sand.u32 %s431, 1
          %s5604 = smul.addr %s5603, 16
          %s5605 = scalar_lea.vmem [#allocation2], %s5604
          %5606 = dma.done %s5602, 256
        $region108: #{tpu_custom_call.1} parent=103 // pred_fallthru
          _
        // Predicated region
        $region109: #{tpu_custom_call.1} parent=103 // pred_check
          %p5607 = pneg %p472
        $region110: #{tpu_custom_call.1} parent=103 // pred_check_branch
          %5609 = sbr.rel (%p5607) target = $region112
        $region111: #{tpu_custom_call.1} parent=103 // pred_region
          %p5610 = scmp.lt.s32.totalorder %s35, 1
          %s5611 = scalar_select %p5610, %s35, 1
          %s5612 = smul.addr %s5611, 2
          %s5613 = smul.addr %s5612, 8
          %s5614 = scalar_lea.vmem %s19, %s5613
        $region112: #{tpu_custom_call.1} parent=103 // pred_fallthru
          _
      $region104: #{tpu_custom_call.1} parent=5 // pred_fallthru
        _
    $region6: #{tpu_custom_call.1} parent=1 // loop_footer
      %s33 = sadd.s32 1, %s29
    $region7: #{tpu_custom_call.1} parent=1 // loop_footer_branch
      %28 = sbr.rel target = $region3
    $region8: #{tpu_custom_call.1} parent=1 // loop_exit
      _
    %5615 = vsyncpa [#allocation3], 1
    %s5616 = scalar_lea.sflag [#allocation3], 1
    %5617 = vsyncpa %s5616, 1

</llo_original>
